<compile_context>
chip_gen: v7x
topology: tpu7x:2x2x1
jax: 0.10.0
libtpu: 0.0.40
codegen_flags: <defaults>
</compile_context>

<pallas_src>
import jax
import jax.numpy as jnp
from jax.experimental import pallas as pl
from jax.experimental.pallas import tpu as pltpu

# --- configuration consistent with the module -------------------------------
B = 2        # batch size (number of graphs)
H = 32       # hidden_size (node-emb / GRU / attention hidden size)
U = 16       # attention_units
N = 8        # max_out_seq_len
LMAX = 8     # static Lmax bucket (>= max(batch_num_nodes)); one compile for all batches
TAU = 1.0    # gumbel temperature (forward hard value is argmax-invariant to tau)


def gpt_decoder_kernel(
    enc_ref, negb_ref, hg_ref, gum_ref,
    WihT_ref, WhhT_ref, bih_ref, bhh_ref, W1T_ref, W2T_ref, wc_ref, V_ref,
    idx_ref, covmin_ref,
):
    f32 = jnp.float32
    bf16 = jnp.bfloat16

    enc = enc_ref[...]                       # [B, LMAX, H]  f32 (zero-padded rows)
    neg_bias = negb_ref[...]                 # [B, LMAX]     f32 (0 valid, -FLT_MAX pad)
    gum_all = gum_ref[...]                   # [N, B, LMAX]  f32 Gumbel(0,1) noise
    Lmax = enc.shape[1]

    # ---- hoisted, step-invariant loads / precompute --------------------------
    WihT = WihT_ref[...]                     # [H, 3H] bf16
    WhhT = WhhT_ref[...]                     # [H, 3H] bf16
    bih = bih_ref[...]                       # [1, 3H] f32
    bhh = bhh_ref[...]                       # [1, 3H] f32
    W1T = W1T_ref[...]                       # [H, U]  bf16
    W2T = W2T_ref[...]                       # [H, U]  bf16
    wc_b = wc_ref[...][None, :, :]           # [1, 1, U] f32  (Linear(1,U) weight row)
    V_b = V_ref[...][None, :, :]             # [1, 1, U] f32  (Linear(U,1) weight row)

    # loop-invariant W1(encoder_out): one bf16 MXU pass
    enc_bf = enc.astype(bf16)
    encW1 = jnp.dot(enc_bf.reshape(B * Lmax, H), W1T,
                    preferred_element_type=f32).reshape(B, Lmax, U)

    iota = jax.lax.broadcasted_iota(jnp.int32, (B, Lmax), 1)

    # ---- autoregressive state -------------------------------------------------
    hidden = hg_ref[...]                     # decoder_hidden = hg           [B, H]
    dec_in = jnp.zeros((B, H), f32)          # decoder_input  = zeros        [B, H]
    cov_vec = jnp.zeros((B, Lmax), f32)
    cov_min_acc = jnp.zeros((B, Lmax), f32)  # deferred coverage-loss partial
    idx_steps = []

    # recurrent-path matmul for step 0; later ones are issued right after hidden_i
    # is produced so they overlap with the attention phase of step i.
    gh = jnp.dot(hidden.astype(bf16), WhhT, preferred_element_type=f32) + bhh   # [B,3H]

    for i in range(N):
        # ---- GRUCell: input path for this step (depends on previous pointer) --
        gi = jnp.dot(dec_in.astype(bf16), WihT, preferred_element_type=f32) + bih  # [B,3H]
        r = jax.nn.sigmoid(gi[:, 0:H] + gh[:, 0:H])
        z = jax.nn.sigmoid(gi[:, H:2 * H] + gh[:, H:2 * H])
        n = jnp.tanh(gi[:, 2 * H:3 * H] + r * gh[:, 2 * H:3 * H])
        hidden = (1.0 - z) * n + z * hidden                                     # [B, H]

        # issue NEXT step's recurrent matmul now: only dep is hidden, so the MXU
        # push pipelines under the attention / softmax / argmax work below.
        if i + 1 < N:
            gh = jnp.dot(hidden.astype(bf16), WhhT, preferred_element_type=f32) + bhh

        # ---- coverage attention scores ----------------------------------------
        w2h = jnp.dot(hidden.astype(bf16), W2T, preferred_element_type=f32)     # [B, U]
        uj = encW1 + w2h[:, None, :] + cov_vec[:, :, None] * wc_b               # [B,Lmax,U]
        score = jnp.sum(jnp.tanh(uj) * V_b, axis=-1)                            # [B, Lmax]
        masked = score + neg_bias                                               # hoisted mask

        # ---- hard gumbel-softmax pointer (critical path) -----------------------
        # forward value of F.gumbel_softmax(log(att), tau, hard=True) is the one-hot
        # of argmax(log_softmax(masked) + g) == argmax(masked + g)  (row constants
        # m, log s and the /tau do not change the argmax).
        y = masked + gum_all[i]
        idx = jnp.argmax(y, axis=1)                                             # [B] int32
        idx_steps.append(idx)
        onehot = (iota == idx[:, None]).astype(f32)                             # [B, Lmax]

        # ---- softmax only for coverage (off the pointer critical path) --------
        m = jnp.max(masked, axis=-1, keepdims=True)
        ex = jnp.exp(masked - m)
        s = jnp.sum(ex, axis=-1, keepdims=True)
        att = ex / s                                                            # exact

        # coverage loss uses the OLD cov_vec (matches PyTorch order); reduce deferred
        cov_min_acc = cov_min_acc + jnp.minimum(att, cov_vec)
        cov_vec = cov_vec + att

        # decoder_input = encoder_out^T @ onehot  (exact f32 row selection)
        dec_in = jnp.sum(enc * onehot[:, :, None], axis=1)                      # [B, H]

    # single stores at the end (no per-step 5-lane masked vst)
    idx_ref[...] = jnp.stack(idx_steps, axis=0).astype(jnp.int32)               # [N, B]
    covmin_ref[...] = cov_min_acc                                               # [B, Lmax]


def make_params(key):
    """Parameters in the original PyTorch layouts."""
    keys = jax.random.split(key, 8)

    def nrm(k, shape, scale=0.1):
        return (scale * jax.random.normal(k, shape)).astype(jnp.float32)

    return dict(
        Wih=nrm(keys[0], (3 * H, H)), Whh=nrm(keys[1], (3 * H, H)),   # nn.GRUCell
        bih=nrm(keys[2], (3 * H,)), bhh=nrm(keys[3], (3 * H,)),
        W1=nrm(keys[4], (U, H)), W2=nrm(keys[5], (U, H)),             # Attention
        wc=nrm(keys[6], (U, 1)), V=nrm(keys[7], (1, U)),
    )


def pack_params(p):
    """Host-side pre-transpose / bf16-cast so the kernel does zero relayout work."""
    bf16 = jnp.bfloat16
    return dict(
        WihT=p['Wih'].T.astype(bf16),                                  # [H, 3H]
        WhhT=p['Whh'].T.astype(bf16),                                  # [H, 3H]
        bih=p['bih'][None, :].astype(jnp.float32),                     # [1, 3H]
        bhh=p['bhh'][None, :].astype(jnp.float32),                     # [1, 3H]
        W1T=p['W1'].T.astype(bf16),                                    # [H, U]
        W2T=p['W2'].T.astype(bf16),                                    # [H, U]
        wc_row=p['wc'][:, 0][None, :],                                 # [1, U] f32
        V_row=p['V'],                                                  # [1, U] f32
    )


def gpt_decoder_forward(batch_num_nodes, h, hg, packed, gumbel_key):
    # --- glue: per-graph pseudo sequences, pad_sequence(batch_first), mask ---
    # Pad to the static LMAX bucket so every batch shares one Mosaic compile.
    lens = list(batch_num_nodes)
    Lact = max(lens)
    assert Lact <= LMAX, "increase LMAX bucket"
    seqs, nidx = [], 0
    for n in lens:
        cur = h[nidx:nidx + n]
        pad = jnp.zeros((LMAX - n, H), jnp.float32)
        seqs.append(jnp.concatenate([cur, pad], axis=0))
        nidx += n
    enc_p = jnp.stack(seqs, axis=0)                                     # [B, LMAX, H]
    mask = (jnp.arange(LMAX)[None, :] < jnp.array(lens)[:, None])       # [B, LMAX] bool
    neg_bias = jnp.where(mask, 0.0, jnp.finfo(jnp.float32).min).astype(jnp.float32)
    # Gumbel(0,1) noise for F.gumbel_softmax, sampled deterministically in JAX
    gum = jax.random.gumbel(gumbel_key, (N, B, LMAX), jnp.float32)      # [N, B, LMAX]

    inputs = (enc_p, neg_bias, hg, gum,
              packed['WihT'], packed['WhhT'], packed['bih'], packed['bhh'],
              packed['W1T'], packed['W2T'], packed['wc_row'], packed['V_row'])

    out_shapes = (
        jax.ShapeDtypeStruct((N, B), jnp.int32),                        # pointer argmax ids
        jax.ShapeDtypeStruct((B, LMAX), jnp.float32),                   # cov-loss partial
    )

    vmem = lambda: pl.BlockSpec(memory_space=pltpu.MemorySpace.VMEM)
    idx_nb, cov_min = pl.pallas_call(
        gpt_decoder_kernel,
        out_shape=out_shapes,
        in_specs=[vmem() for _ in inputs],
        out_specs=tuple(vmem() for _ in out_shapes),
    )(*inputs)

    # wrapper-side plumbing (free XLA work):
    #   one-hot reconstruction [N,B] -> [N,B,LMAX] -> [B,Lact,N], deferred cov reduce
    onehot_nbl = jax.nn.one_hot(idx_nb, LMAX, dtype=jnp.float32)        # [N, B, LMAX]
    ptr = jnp.transpose(onehot_nbl, (1, 2, 0))[:, :Lact, :]             # [B, Lact, N]
    cov_loss = jnp.sum(cov_min)                                         # scalar
    enc = enc_p[:, :Lact, :]                                            # [B, Lact, H]
    # TODO(synk): straight-through gradient of the hard gumbel-softmax (forward-only here).
    # PyTorch return order: (pointer_argmaxs, cov_loss, encoder_out)
    return ptr, cov_loss, enc


if __name__ == "__main__":
    key = jax.random.PRNGKey(0)
    kp, kh, khg, kg = jax.random.split(key, 4)
    packed = pack_params(make_params(kp))

    batch_num_nodes = [5, 3]                  # 2 graphs -> actual Lmax = 5 (bucketed to 8)
    total_nodes = sum(batch_num_nodes)
    h = jax.random.normal(kh, (total_nodes, H), jnp.float32)    # node embeddings
    hg = jax.random.normal(khg, (B, H), jnp.float32)            # graph embeddings

    ptr, cov, enc = gpt_decoder_forward(batch_num_nodes, h, hg, packed, kg)
    jax.block_until_ready((ptr, cov, enc))

    Lact = max(batch_num_nodes)
    assert ptr.shape == (B, Lact, N)
    assert enc.shape == (B, Lact, H)
    assert cov.shape == ()
    # each decode step produces exactly one pointer per graph, always at a valid node
    assert bool(jnp.all(jnp.sum(ptr, axis=1) == 1.0))
    print("KERNEL_OK")
</pallas_src>

<mosaic_0001>
module attributes {stable_mosaic.version = 11 : i64} {
  func.func @gpt_decoder_kernel(%arg0: memref<2x8x32xf32, #tpu.memory_space<vmem>>, %arg1: memref<2x8xf32, #tpu.memory_space<vmem>>, %arg2: memref<2x32xf32, #tpu.memory_space<vmem>>, %arg3: memref<8x2x8xf32, #tpu.memory_space<vmem>>, %arg4: memref<32x96xbf16, #tpu.memory_space<vmem>>, %arg5: memref<32x96xbf16, #tpu.memory_space<vmem>>, %arg6: memref<1x96xf32, #tpu.memory_space<vmem>>, %arg7: memref<1x96xf32, #tpu.memory_space<vmem>>, %arg8: memref<32x16xbf16, #tpu.memory_space<vmem>>, %arg9: memref<32x16xbf16, #tpu.memory_space<vmem>>, %arg10: memref<1x16xf32, #tpu.memory_space<vmem>>, %arg11: memref<1x16xf32, #tpu.memory_space<vmem>>, %arg12: memref<8x2xi32, #tpu.memory_space<vmem>>, %arg13: memref<2x8xf32, #tpu.memory_space<vmem>>) attributes {dimension_semantics = [], scalar_prefetch = 0 : i64, scratch_operands = 0 : i64, tpu.core_type = #tpu.core_type<tc>} {
    %c0 = arith.constant 0 : index
    %c0_0 = arith.constant 0 : index
    %c0_1 = arith.constant 0 : index
    %0 = vector.load %arg0[%c0, %c0_0, %c0_1] : memref<2x8x32xf32, #tpu.memory_space<vmem>>, vector<2x8x32xf32>
    %c0_2 = arith.constant 0 : index
    %c0_3 = arith.constant 0 : index
    %1 = vector.load %arg1[%c0_2, %c0_3] : memref<2x8xf32, #tpu.memory_space<vmem>>, vector<2x8xf32>
    %c0_4 = arith.constant 0 : index
    %c0_5 = arith.constant 0 : index
    %c0_6 = arith.constant 0 : index
    %2 = vector.load %arg3[%c0_4, %c0_5, %c0_6] : memref<8x2x8xf32, #tpu.memory_space<vmem>>, vector<8x2x8xf32>
    %c0_7 = arith.constant 0 : index
    %c0_8 = arith.constant 0 : index
    %3 = vector.load %arg4[%c0_7, %c0_8] : memref<32x96xbf16, #tpu.memory_space<vmem>>, vector<32x96xbf16>
    %c0_9 = arith.constant 0 : index
    %c0_10 = arith.constant 0 : index
    %4 = vector.load %arg5[%c0_9, %c0_10] : memref<32x96xbf16, #tpu.memory_space<vmem>>, vector<32x96xbf16>
    %c0_11 = arith.constant 0 : index
    %c0_12 = arith.constant 0 : index
    %5 = vector.load %arg6[%c0_11, %c0_12] : memref<1x96xf32, #tpu.memory_space<vmem>>, vector<1x96xf32>
    %c0_13 = arith.constant 0 : index
    %c0_14 = arith.constant 0 : index
    %6 = vector.load %arg7[%c0_13, %c0_14] : memref<1x96xf32, #tpu.memory_space<vmem>>, vector<1x96xf32>
    %c0_15 = arith.constant 0 : index
    %c0_16 = arith.constant 0 : index
    %7 = vector.load %arg8[%c0_15, %c0_16] : memref<32x16xbf16, #tpu.memory_space<vmem>>, vector<32x16xbf16>
    %c0_17 = arith.constant 0 : index
    %c0_18 = arith.constant 0 : index
    %8 = vector.load %arg9[%c0_17, %c0_18] : memref<32x16xbf16, #tpu.memory_space<vmem>>, vector<32x16xbf16>
    %c0_19 = arith.constant 0 : index
    %c0_20 = arith.constant 0 : index
    %9 = vector.load %arg10[%c0_19, %c0_20] : memref<1x16xf32, #tpu.memory_space<vmem>>, vector<1x16xf32>
    %10 = vector.shape_cast %9 : vector<1x16xf32> to vector<1x1x16xf32>
    %c0_21 = arith.constant 0 : index
    %c0_22 = arith.constant 0 : index
    %11 = vector.load %arg11[%c0_21, %c0_22] : memref<1x16xf32, #tpu.memory_space<vmem>>, vector<1x16xf32>
    %12 = vector.shape_cast %11 : vector<1x16xf32> to vector<1x1x16xf32>
    %13 = arith.truncf %0 : vector<2x8x32xf32> to vector<2x8x32xbf16>
    %14 = vector.shape_cast %13 : vector<2x8x32xbf16> to vector<16x32xbf16>
    %cst = arith.constant dense<0.000000e+00> : vector<16x16xf32>
    %15 = tpu.matmul %14, %7, %cst {dimension_numbers = #tpu.dot_dimension_numbers<[1], [0], [0], [1], [0, 0, 1, 1], [], []>} : vector<16x32xbf16>, vector<32x16xbf16>, vector<16x16xf32> -> vector<16x16xf32>
    %16 = vector.shape_cast %15 : vector<16x16xf32> to vector<2x8x16xf32>
    %17 = tpu.iota {dimensions = array<i32: 1>} : vector<2x8xi32>
    %c0_23 = arith.constant 0 : index
    %c0_24 = arith.constant 0 : index
    %18 = vector.load %arg2[%c0_23, %c0_24] : memref<2x32xf32, #tpu.memory_space<vmem>>, vector<2x32xf32>
    %cst_25 = arith.constant 0.000000e+00 : f32
    %19 = vector.broadcast %cst_25 : f32 to vector<2x32xf32>
    %cst_26 = arith.constant 0.000000e+00 : f32
    %20 = vector.broadcast %cst_26 : f32 to vector<2x8xf32>
    %cst_27 = arith.constant 0.000000e+00 : f32
    %21 = vector.broadcast %cst_27 : f32 to vector<2x8xf32>
    %22 = arith.truncf %18 : vector<2x32xf32> to vector<2x32xbf16>
    %cst_28 = arith.constant dense<0.000000e+00> : vector<2x96xf32>
    %23 = tpu.matmul %22, %4, %cst_28 {dimension_numbers = #tpu.dot_dimension_numbers<[1], [0], [0], [1], [0, 0, 1, 1], [], []>} : vector<2x32xbf16>, vector<32x96xbf16>, vector<2x96xf32> -> vector<2x96xf32>
    %24 = vector.broadcast %6 : vector<1x96xf32> to vector<2x96xf32>
    %25 = arith.addf %23, %24 : vector<2x96xf32>
    %26 = arith.truncf %19 : vector<2x32xf32> to vector<2x32xbf16>
    %cst_29 = arith.constant dense<0.000000e+00> : vector<2x96xf32>
    %27 = tpu.matmul %26, %3, %cst_29 {dimension_numbers = #tpu.dot_dimension_numbers<[1], [0], [0], [1], [0, 0, 1, 1], [], []>} : vector<2x32xbf16>, vector<32x96xbf16>, vector<2x96xf32> -> vector<2x96xf32>
    %28 = vector.broadcast %5 : vector<1x96xf32> to vector<2x96xf32>
    %29 = arith.addf %27, %28 : vector<2x96xf32>
    %30 = vector.extract_strided_slice %29 {offsets = [0, 0], sizes = [2, 32], strides = [1, 1]} : vector<2x96xf32> to vector<2x32xf32>
    %31 = vector.extract_strided_slice %25 {offsets = [0, 0], sizes = [2, 32], strides = [1, 1]} : vector<2x96xf32> to vector<2x32xf32>
    %32 = arith.addf %30, %31 : vector<2x32xf32>
    %33 = arith.negf %32 : vector<2x32xf32>
    %34 = math.exp %33 : vector<2x32xf32>
    %cst_30 = arith.constant 1.000000e+00 : f32
    %35 = vector.broadcast %cst_30 : f32 to vector<2x32xf32>
    %36 = arith.addf %35, %34 : vector<2x32xf32>
    %37 = arith.divf %35, %36 : vector<2x32xf32>
    %38 = vector.extract_strided_slice %29 {offsets = [0, 32], sizes = [2, 32], strides = [1, 1]} : vector<2x96xf32> to vector<2x32xf32>
    %39 = vector.extract_strided_slice %25 {offsets = [0, 32], sizes = [2, 32], strides = [1, 1]} : vector<2x96xf32> to vector<2x32xf32>
    %40 = arith.addf %38, %39 : vector<2x32xf32>
    %41 = arith.negf %40 : vector<2x32xf32>
    %42 = math.exp %41 : vector<2x32xf32>
    %cst_31 = arith.constant 1.000000e+00 : f32
    %43 = vector.broadcast %cst_31 : f32 to vector<2x32xf32>
    %44 = arith.addf %43, %42 : vector<2x32xf32>
    %45 = arith.divf %43, %44 : vector<2x32xf32>
    %46 = vector.extract_strided_slice %29 {offsets = [0, 64], sizes = [2, 32], strides = [1, 1]} : vector<2x96xf32> to vector<2x32xf32>
    %47 = vector.extract_strided_slice %25 {offsets = [0, 64], sizes = [2, 32], strides = [1, 1]} : vector<2x96xf32> to vector<2x32xf32>
    %48 = arith.mulf %37, %47 : vector<2x32xf32>
    %49 = arith.addf %46, %48 : vector<2x32xf32>
    %50 = math.tanh %49 : vector<2x32xf32>
    %cst_32 = arith.constant 1.000000e+00 : f32
    %51 = vector.broadcast %cst_32 : f32 to vector<2x32xf32>
    %52 = arith.subf %51, %45 : vector<2x32xf32>
    %53 = arith.mulf %52, %50 : vector<2x32xf32>
    %54 = arith.mulf %45, %18 : vector<2x32xf32>
    %55 = arith.addf %53, %54 : vector<2x32xf32>
    %56 = arith.truncf %55 : vector<2x32xf32> to vector<2x32xbf16>
    %cst_33 = arith.constant dense<0.000000e+00> : vector<2x96xf32>
    %57 = tpu.matmul %56, %4, %cst_33 {dimension_numbers = #tpu.dot_dimension_numbers<[1], [0], [0], [1], [0, 0, 1, 1], [], []>} : vector<2x32xbf16>, vector<32x96xbf16>, vector<2x96xf32> -> vector<2x96xf32>
    %58 = vector.broadcast %6 : vector<1x96xf32> to vector<2x96xf32>
    %59 = arith.addf %57, %58 : vector<2x96xf32>
    %60 = arith.truncf %55 : vector<2x32xf32> to vector<2x32xbf16>
    %cst_34 = arith.constant dense<0.000000e+00> : vector<2x16xf32>
    %61 = tpu.matmul %60, %8, %cst_34 {dimension_numbers = #tpu.dot_dimension_numbers<[1], [0], [0], [1], [0, 0, 1, 1], [], []>} : vector<2x32xbf16>, vector<32x16xbf16>, vector<2x16xf32> -> vector<2x16xf32>
    %62 = vector.shape_cast %61 : vector<2x16xf32> to vector<2x1x16xf32>
    %63 = vector.broadcast %62 : vector<2x1x16xf32> to vector<2x8x16xf32>
    %64 = arith.addf %16, %63 : vector<2x8x16xf32>
    %65 = vector.shape_cast %20 : vector<2x8xf32> to vector<2x8x1xf32>
    %66 = vector.broadcast %65 : vector<2x8x1xf32> to vector<2x8x16xf32>
    %67 = vector.broadcast %10 : vector<1x1x16xf32> to vector<2x8x16xf32>
    %68 = arith.mulf %66, %67 : vector<2x8x16xf32>
    %69 = arith.addf %64, %68 : vector<2x8x16xf32>
    %70 = math.tanh %69 : vector<2x8x16xf32>
    %71 = vector.broadcast %12 : vector<1x1x16xf32> to vector<2x8x16xf32>
    %72 = arith.mulf %70, %71 : vector<2x8x16xf32>
    %cst_35 = arith.constant dense<0.000000e+00> : vector<2x8xf32>
    %73 = vector.multi_reduction <add>, %72, %cst_35 [2] : vector<2x8x16xf32> to vector<2x8xf32>
    %74 = arith.addf %73, %1 : vector<2x8xf32>
    %75 = vector.extract_strided_slice %2 {offsets = [0, 0, 0], sizes = [1, 2, 8], strides = [1, 1, 1]} : vector<8x2x8xf32> to vector<1x2x8xf32>
    %76 = vector.shape_cast %75 : vector<1x2x8xf32> to vector<2x8xf32>
    %77 = arith.addf %74, %76 : vector<2x8xf32>
    %78 = tpu.reduce_index %77 {axis = 1 : i32, kind = #tpu.reduction_kind<arg_max>} : vector<2x8xf32> -> vector<2xi32>
    %79 = vector.shape_cast %78 : vector<2xi32> to vector<2x1xi32>
    %80 = vector.broadcast %79 : vector<2x1xi32> to vector<2x8xi32>
    %81 = arith.cmpi eq, %17, %80 : vector<2x8xi32>
    %82 = arith.extui %81 : vector<2x8xi1> to vector<2x8xi32>
    %83 = arith.sitofp %82 : vector<2x8xi32> to vector<2x8xf32>
    %cst_36 = arith.constant dense<0xFF800000> : vector<2xf32>
    %84 = vector.multi_reduction <maximumf>, %74, %cst_36 [1] : vector<2x8xf32> to vector<2xf32>
    %85 = vector.shape_cast %84 : vector<2xf32> to vector<2x1xf32>
    %86 = vector.broadcast %85 : vector<2x1xf32> to vector<2x8xf32>
    %87 = arith.subf %74, %86 : vector<2x8xf32>
    %88 = math.exp %87 : vector<2x8xf32>
    %cst_37 = arith.constant dense<0.000000e+00> : vector<2xf32>
    %89 = vector.multi_reduction <add>, %88, %cst_37 [1] : vector<2x8xf32> to vector<2xf32>
    %90 = vector.shape_cast %89 : vector<2xf32> to vector<2x1xf32>
    %91 = vector.broadcast %90 : vector<2x1xf32> to vector<2x8xf32>
    %92 = arith.divf %88, %91 : vector<2x8xf32>
    %93 = arith.minimumf %92, %20 : vector<2x8xf32>
    %94 = arith.addf %21, %93 : vector<2x8xf32>
    %95 = arith.addf %20, %92 : vector<2x8xf32>
    %96 = vector.shape_cast %83 : vector<2x8xf32> to vector<2x8x1xf32>
    %97 = vector.broadcast %96 : vector<2x8x1xf32> to vector<2x8x32xf32>
    %98 = arith.mulf %0, %97 : vector<2x8x32xf32>
    %cst_38 = arith.constant dense<0.000000e+00> : vector<2x32xf32>
    %99 = vector.multi_reduction <add>, %98, %cst_38 [1] : vector<2x8x32xf32> to vector<2x32xf32>
    %100 = arith.truncf %99 : vector<2x32xf32> to vector<2x32xbf16>
    %cst_39 = arith.constant dense<0.000000e+00> : vector<2x96xf32>
    %101 = tpu.matmul %100, %3, %cst_39 {dimension_numbers = #tpu.dot_dimension_numbers<[1], [0], [0], [1], [0, 0, 1, 1], [], []>} : vector<2x32xbf16>, vector<32x96xbf16>, vector<2x96xf32> -> vector<2x96xf32>
    %102 = vector.broadcast %5 : vector<1x96xf32> to vector<2x96xf32>
    %103 = arith.addf %101, %102 : vector<2x96xf32>
    %104 = vector.extract_strided_slice %103 {offsets = [0, 0], sizes = [2, 32], strides = [1, 1]} : vector<2x96xf32> to vector<2x32xf32>
    %105 = vector.extract_strided_slice %59 {offsets = [0, 0], sizes = [2, 32], strides = [1, 1]} : vector<2x96xf32> to vector<2x32xf32>
    %106 = arith.addf %104, %105 : vector<2x32xf32>
    %107 = arith.negf %106 : vector<2x32xf32>
    %108 = math.exp %107 : vector<2x32xf32>
    %cst_40 = arith.constant 1.000000e+00 : f32
    %109 = vector.broadcast %cst_40 : f32 to vector<2x32xf32>
    %110 = arith.addf %109, %108 : vector<2x32xf32>
    %111 = arith.divf %109, %110 : vector<2x32xf32>
    %112 = vector.extract_strided_slice %103 {offsets = [0, 32], sizes = [2, 32], strides = [1, 1]} : vector<2x96xf32> to vector<2x32xf32>
    %113 = vector.extract_strided_slice %59 {offsets = [0, 32], sizes = [2, 32], strides = [1, 1]} : vector<2x96xf32> to vector<2x32xf32>
    %114 = arith.addf %112, %113 : vector<2x32xf32>
    %115 = arith.negf %114 : vector<2x32xf32>
    %116 = math.exp %115 : vector<2x32xf32>
    %cst_41 = arith.constant 1.000000e+00 : f32
    %117 = vector.broadcast %cst_41 : f32 to vector<2x32xf32>
    %118 = arith.addf %117, %116 : vector<2x32xf32>
    %119 = arith.divf %117, %118 : vector<2x32xf32>
    %120 = vector.extract_strided_slice %103 {offsets = [0, 64], sizes = [2, 32], strides = [1, 1]} : vector<2x96xf32> to vector<2x32xf32>
    %121 = vector.extract_strided_slice %59 {offsets = [0, 64], sizes = [2, 32], strides = [1, 1]} : vector<2x96xf32> to vector<2x32xf32>
    %122 = arith.mulf %111, %121 : vector<2x32xf32>
    %123 = arith.addf %120, %122 : vector<2x32xf32>
    %124 = math.tanh %123 : vector<2x32xf32>
    %cst_42 = arith.constant 1.000000e+00 : f32
    %125 = vector.broadcast %cst_42 : f32 to vector<2x32xf32>
    %126 = arith.subf %125, %119 : vector<2x32xf32>
    %127 = arith.mulf %126, %124 : vector<2x32xf32>
    %128 = arith.mulf %119, %55 : vector<2x32xf32>
    %129 = arith.addf %127, %128 : vector<2x32xf32>
    %130 = arith.truncf %129 : vector<2x32xf32> to vector<2x32xbf16>
    %cst_43 = arith.constant dense<0.000000e+00> : vector<2x96xf32>
    %131 = tpu.matmul %130, %4, %cst_43 {dimension_numbers = #tpu.dot_dimension_numbers<[1], [0], [0], [1], [0, 0, 1, 1], [], []>} : vector<2x32xbf16>, vector<32x96xbf16>, vector<2x96xf32> -> vector<2x96xf32>
    %132 = vector.broadcast %6 : vector<1x96xf32> to vector<2x96xf32>
    %133 = arith.addf %131, %132 : vector<2x96xf32>
    %134 = arith.truncf %129 : vector<2x32xf32> to vector<2x32xbf16>
    %cst_44 = arith.constant dense<0.000000e+00> : vector<2x16xf32>
    %135 = tpu.matmul %134, %8, %cst_44 {dimension_numbers = #tpu.dot_dimension_numbers<[1], [0], [0], [1], [0, 0, 1, 1], [], []>} : vector<2x32xbf16>, vector<32x16xbf16>, vector<2x16xf32> -> vector<2x16xf32>
    %136 = vector.shape_cast %135 : vector<2x16xf32> to vector<2x1x16xf32>
    %137 = vector.broadcast %136 : vector<2x1x16xf32> to vector<2x8x16xf32>
    %138 = arith.addf %16, %137 : vector<2x8x16xf32>
    %139 = vector.shape_cast %95 : vector<2x8xf32> to vector<2x8x1xf32>
    %140 = vector.broadcast %139 : vector<2x8x1xf32> to vector<2x8x16xf32>
    %141 = vector.broadcast %10 : vector<1x1x16xf32> to vector<2x8x16xf32>
    %142 = arith.mulf %140, %141 : vector<2x8x16xf32>
    %143 = arith.addf %138, %142 : vector<2x8x16xf32>
    %144 = math.tanh %143 : vector<2x8x16xf32>
    %145 = vector.broadcast %12 : vector<1x1x16xf32> to vector<2x8x16xf32>
    %146 = arith.mulf %144, %145 : vector<2x8x16xf32>
    %cst_45 = arith.constant dense<0.000000e+00> : vector<2x8xf32>
    %147 = vector.multi_reduction <add>, %146, %cst_45 [2] : vector<2x8x16xf32> to vector<2x8xf32>
    %148 = arith.addf %147, %1 : vector<2x8xf32>
    %149 = vector.extract_strided_slice %2 {offsets = [1, 0, 0], sizes = [1, 2, 8], strides = [1, 1, 1]} : vector<8x2x8xf32> to vector<1x2x8xf32>
    %150 = vector.shape_cast %149 : vector<1x2x8xf32> to vector<2x8xf32>
    %151 = arith.addf %148, %150 : vector<2x8xf32>
    %152 = tpu.reduce_index %151 {axis = 1 : i32, kind = #tpu.reduction_kind<arg_max>} : vector<2x8xf32> -> vector<2xi32>
    %153 = vector.shape_cast %152 : vector<2xi32> to vector<2x1xi32>
    %154 = vector.broadcast %153 : vector<2x1xi32> to vector<2x8xi32>
    %155 = arith.cmpi eq, %17, %154 : vector<2x8xi32>
    %156 = arith.extui %155 : vector<2x8xi1> to vector<2x8xi32>
    %157 = arith.sitofp %156 : vector<2x8xi32> to vector<2x8xf32>
    %cst_46 = arith.constant dense<0xFF800000> : vector<2xf32>
    %158 = vector.multi_reduction <maximumf>, %148, %cst_46 [1] : vector<2x8xf32> to vector<2xf32>
    %159 = vector.shape_cast %158 : vector<2xf32> to vector<2x1xf32>
    %160 = vector.broadcast %159 : vector<2x1xf32> to vector<2x8xf32>
    %161 = arith.subf %148, %160 : vector<2x8xf32>
    %162 = math.exp %161 : vector<2x8xf32>
    %cst_47 = arith.constant dense<0.000000e+00> : vector<2xf32>
    %163 = vector.multi_reduction <add>, %162, %cst_47 [1] : vector<2x8xf32> to vector<2xf32>
    %164 = vector.shape_cast %163 : vector<2xf32> to vector<2x1xf32>
    %165 = vector.broadcast %164 : vector<2x1xf32> to vector<2x8xf32>
    %166 = arith.divf %162, %165 : vector<2x8xf32>
    %167 = arith.minimumf %166, %95 : vector<2x8xf32>
    %168 = arith.addf %94, %167 : vector<2x8xf32>
    %169 = arith.addf %95, %166 : vector<2x8xf32>
    %170 = vector.shape_cast %157 : vector<2x8xf32> to vector<2x8x1xf32>
    %171 = vector.broadcast %170 : vector<2x8x1xf32> to vector<2x8x32xf32>
    %172 = arith.mulf %0, %171 : vector<2x8x32xf32>
    %cst_48 = arith.constant dense<0.000000e+00> : vector<2x32xf32>
    %173 = vector.multi_reduction <add>, %172, %cst_48 [1] : vector<2x8x32xf32> to vector<2x32xf32>
    %174 = arith.truncf %173 : vector<2x32xf32> to vector<2x32xbf16>
    %cst_49 = arith.constant dense<0.000000e+00> : vector<2x96xf32>
    %175 = tpu.matmul %174, %3, %cst_49 {dimension_numbers = #tpu.dot_dimension_numbers<[1], [0], [0], [1], [0, 0, 1, 1], [], []>} : vector<2x32xbf16>, vector<32x96xbf16>, vector<2x96xf32> -> vector<2x96xf32>
    %176 = vector.broadcast %5 : vector<1x96xf32> to vector<2x96xf32>
    %177 = arith.addf %175, %176 : vector<2x96xf32>
    %178 = vector.extract_strided_slice %177 {offsets = [0, 0], sizes = [2, 32], strides = [1, 1]} : vector<2x96xf32> to vector<2x32xf32>
    %179 = vector.extract_strided_slice %133 {offsets = [0, 0], sizes = [2, 32], strides = [1, 1]} : vector<2x96xf32> to vector<2x32xf32>
    %180 = arith.addf %178, %179 : vector<2x32xf32>
    %181 = arith.negf %180 : vector<2x32xf32>
    %182 = math.exp %181 : vector<2x32xf32>
    %cst_50 = arith.constant 1.000000e+00 : f32
    %183 = vector.broadcast %cst_50 : f32 to vector<2x32xf32>
    %184 = arith.addf %183, %182 : vector<2x32xf32>
    %185 = arith.divf %183, %184 : vector<2x32xf32>
    %186 = vector.extract_strided_slice %177 {offsets = [0, 32], sizes = [2, 32], strides = [1, 1]} : vector<2x96xf32> to vector<2x32xf32>
    %187 = vector.extract_strided_slice %133 {offsets = [0, 32], sizes = [2, 32], strides = [1, 1]} : vector<2x96xf32> to vector<2x32xf32>
    %188 = arith.addf %186, %187 : vector<2x32xf32>
    %189 = arith.negf %188 : vector<2x32xf32>
    %190 = math.exp %189 : vector<2x32xf32>
    %cst_51 = arith.constant 1.000000e+00 : f32
    %191 = vector.broadcast %cst_51 : f32 to vector<2x32xf32>
    %192 = arith.addf %191, %190 : vector<2x32xf32>
    %193 = arith.divf %191, %192 : vector<2x32xf32>
    %194 = vector.extract_strided_slice %177 {offsets = [0, 64], sizes = [2, 32], strides = [1, 1]} : vector<2x96xf32> to vector<2x32xf32>
    %195 = vector.extract_strided_slice %133 {offsets = [0, 64], sizes = [2, 32], strides = [1, 1]} : vector<2x96xf32> to vector<2x32xf32>
    %196 = arith.mulf %185, %195 : vector<2x32xf32>
    %197 = arith.addf %194, %196 : vector<2x32xf32>
    %198 = math.tanh %197 : vector<2x32xf32>
    %cst_52 = arith.constant 1.000000e+00 : f32
    %199 = vector.broadcast %cst_52 : f32 to vector<2x32xf32>
    %200 = arith.subf %199, %193 : vector<2x32xf32>
    %201 = arith.mulf %200, %198 : vector<2x32xf32>
    %202 = arith.mulf %193, %129 : vector<2x32xf32>
    %203 = arith.addf %201, %202 : vector<2x32xf32>
    %204 = arith.truncf %203 : vector<2x32xf32> to vector<2x32xbf16>
    %cst_53 = arith.constant dense<0.000000e+00> : vector<2x96xf32>
    %205 = tpu.matmul %204, %4, %cst_53 {dimension_numbers = #tpu.dot_dimension_numbers<[1], [0], [0], [1], [0, 0, 1, 1], [], []>} : vector<2x32xbf16>, vector<32x96xbf16>, vector<2x96xf32> -> vector<2x96xf32>
    %206 = vector.broadcast %6 : vector<1x96xf32> to vector<2x96xf32>
    %207 = arith.addf %205, %206 : vector<2x96xf32>
    %208 = arith.truncf %203 : vector<2x32xf32> to vector<2x32xbf16>
    %cst_54 = arith.constant dense<0.000000e+00> : vector<2x16xf32>
    %209 = tpu.matmul %208, %8, %cst_54 {dimension_numbers = #tpu.dot_dimension_numbers<[1], [0], [0], [1], [0, 0, 1, 1], [], []>} : vector<2x32xbf16>, vector<32x16xbf16>, vector<2x16xf32> -> vector<2x16xf32>
    %210 = vector.shape_cast %209 : vector<2x16xf32> to vector<2x1x16xf32>
    %211 = vector.broadcast %210 : vector<2x1x16xf32> to vector<2x8x16xf32>
    %212 = arith.addf %16, %211 : vector<2x8x16xf32>
    %213 = vector.shape_cast %169 : vector<2x8xf32> to vector<2x8x1xf32>
    %214 = vector.broadcast %213 : vector<2x8x1xf32> to vector<2x8x16xf32>
    %215 = vector.broadcast %10 : vector<1x1x16xf32> to vector<2x8x16xf32>
    %216 = arith.mulf %214, %215 : vector<2x8x16xf32>
    %217 = arith.addf %212, %216 : vector<2x8x16xf32>
    %218 = math.tanh %217 : vector<2x8x16xf32>
    %219 = vector.broadcast %12 : vector<1x1x16xf32> to vector<2x8x16xf32>
    %220 = arith.mulf %218, %219 : vector<2x8x16xf32>
    %cst_55 = arith.constant dense<0.000000e+00> : vector<2x8xf32>
    %221 = vector.multi_reduction <add>, %220, %cst_55 [2] : vector<2x8x16xf32> to vector<2x8xf32>
    %222 = arith.addf %221, %1 : vector<2x8xf32>
    %223 = vector.extract_strided_slice %2 {offsets = [2, 0, 0], sizes = [1, 2, 8], strides = [1, 1, 1]} : vector<8x2x8xf32> to vector<1x2x8xf32>
    %224 = vector.shape_cast %223 : vector<1x2x8xf32> to vector<2x8xf32>
    %225 = arith.addf %222, %224 : vector<2x8xf32>
    %226 = tpu.reduce_index %225 {axis = 1 : i32, kind = #tpu.reduction_kind<arg_max>} : vector<2x8xf32> -> vector<2xi32>
    %227 = vector.shape_cast %226 : vector<2xi32> to vector<2x1xi32>
    %228 = vector.broadcast %227 : vector<2x1xi32> to vector<2x8xi32>
    %229 = arith.cmpi eq, %17, %228 : vector<2x8xi32>
    %230 = arith.extui %229 : vector<2x8xi1> to vector<2x8xi32>
    %231 = arith.sitofp %230 : vector<2x8xi32> to vector<2x8xf32>
    %cst_56 = arith.constant dense<0xFF800000> : vector<2xf32>
    %232 = vector.multi_reduction <maximumf>, %222, %cst_56 [1] : vector<2x8xf32> to vector<2xf32>
    %233 = vector.shape_cast %232 : vector<2xf32> to vector<2x1xf32>
    %234 = vector.broadcast %233 : vector<2x1xf32> to vector<2x8xf32>
    %235 = arith.subf %222, %234 : vector<2x8xf32>
    %236 = math.exp %235 : vector<2x8xf32>
    %cst_57 = arith.constant dense<0.000000e+00> : vector<2xf32>
    %237 = vector.multi_reduction <add>, %236, %cst_57 [1] : vector<2x8xf32> to vector<2xf32>
    %238 = vector.shape_cast %237 : vector<2xf32> to vector<2x1xf32>
    %239 = vector.broadcast %238 : vector<2x1xf32> to vector<2x8xf32>
    %240 = arith.divf %236, %239 : vector<2x8xf32>
    %241 = arith.minimumf %240, %169 : vector<2x8xf32>
    %242 = arith.addf %168, %241 : vector<2x8xf32>
    %243 = arith.addf %169, %240 : vector<2x8xf32>
    %244 = vector.shape_cast %231 : vector<2x8xf32> to vector<2x8x1xf32>
    %245 = vector.broadcast %244 : vector<2x8x1xf32> to vector<2x8x32xf32>
    %246 = arith.mulf %0, %245 : vector<2x8x32xf32>
    %cst_58 = arith.constant dense<0.000000e+00> : vector<2x32xf32>
    %247 = vector.multi_reduction <add>, %246, %cst_58 [1] : vector<2x8x32xf32> to vector<2x32xf32>
    %248 = arith.truncf %247 : vector<2x32xf32> to vector<2x32xbf16>
    %cst_59 = arith.constant dense<0.000000e+00> : vector<2x96xf32>
    %249 = tpu.matmul %248, %3, %cst_59 {dimension_numbers = #tpu.dot_dimension_numbers<[1], [0], [0], [1], [0, 0, 1, 1], [], []>} : vector<2x32xbf16>, vector<32x96xbf16>, vector<2x96xf32> -> vector<2x96xf32>
    %250 = vector.broadcast %5 : vector<1x96xf32> to vector<2x96xf32>
    %251 = arith.addf %249, %250 : vector<2x96xf32>
    %252 = vector.extract_strided_slice %251 {offsets = [0, 0], sizes = [2, 32], strides = [1, 1]} : vector<2x96xf32> to vector<2x32xf32>
    %253 = vector.extract_strided_slice %207 {offsets = [0, 0], sizes = [2, 32], strides = [1, 1]} : vector<2x96xf32> to vector<2x32xf32>
    %254 = arith.addf %252, %253 : vector<2x32xf32>
    %255 = arith.negf %254 : vector<2x32xf32>
    %256 = math.exp %255 : vector<2x32xf32>
    %cst_60 = arith.constant 1.000000e+00 : f32
    %257 = vector.broadcast %cst_60 : f32 to vector<2x32xf32>
    %258 = arith.addf %257, %256 : vector<2x32xf32>
    %259 = arith.divf %257, %258 : vector<2x32xf32>
    %260 = vector.extract_strided_slice %251 {offsets = [0, 32], sizes = [2, 32], strides = [1, 1]} : vector<2x96xf32> to vector<2x32xf32>
    %261 = vector.extract_strided_slice %207 {offsets = [0, 32], sizes = [2, 32], strides = [1, 1]} : vector<2x96xf32> to vector<2x32xf32>
    %262 = arith.addf %260, %261 : vector<2x32xf32>
    %263 = arith.negf %262 : vector<2x32xf32>
    %264 = math.exp %263 : vector<2x32xf32>
    %cst_61 = arith.constant 1.000000e+00 : f32
    %265 = vector.broadcast %cst_61 : f32 to vector<2x32xf32>
    %266 = arith.addf %265, %264 : vector<2x32xf32>
    %267 = arith.divf %265, %266 : vector<2x32xf32>
    %268 = vector.extract_strided_slice %251 {offsets = [0, 64], sizes = [2, 32], strides = [1, 1]} : vector<2x96xf32> to vector<2x32xf32>
    %269 = vector.extract_strided_slice %207 {offsets = [0, 64], sizes = [2, 32], strides = [1, 1]} : vector<2x96xf32> to vector<2x32xf32>
    %270 = arith.mulf %259, %269 : vector<2x32xf32>
    %271 = arith.addf %268, %270 : vector<2x32xf32>
    %272 = math.tanh %271 : vector<2x32xf32>
    %cst_62 = arith.constant 1.000000e+00 : f32
    %273 = vector.broadcast %cst_62 : f32 to vector<2x32xf32>
    %274 = arith.subf %273, %267 : vector<2x32xf32>
    %275 = arith.mulf %274, %272 : vector<2x32xf32>
    %276 = arith.mulf %267, %203 : vector<2x32xf32>
    %277 = arith.addf %275, %276 : vector<2x32xf32>
    %278 = arith.truncf %277 : vector<2x32xf32> to vector<2x32xbf16>
    %cst_63 = arith.constant dense<0.000000e+00> : vector<2x96xf32>
    %279 = tpu.matmul %278, %4, %cst_63 {dimension_numbers = #tpu.dot_dimension_numbers<[1], [0], [0], [1], [0, 0, 1, 1], [], []>} : vector<2x32xbf16>, vector<32x96xbf16>, vector<2x96xf32> -> vector<2x96xf32>
    %280 = vector.broadcast %6 : vector<1x96xf32> to vector<2x96xf32>
    %281 = arith.addf %279, %280 : vector<2x96xf32>
    %282 = arith.truncf %277 : vector<2x32xf32> to vector<2x32xbf16>
    %cst_64 = arith.constant dense<0.000000e+00> : vector<2x16xf32>
    %283 = tpu.matmul %282, %8, %cst_64 {dimension_numbers = #tpu.dot_dimension_numbers<[1], [0], [0], [1], [0, 0, 1, 1], [], []>} : vector<2x32xbf16>, vector<32x16xbf16>, vector<2x16xf32> -> vector<2x16xf32>
    %284 = vector.shape_cast %283 : vector<2x16xf32> to vector<2x1x16xf32>
    %285 = vector.broadcast %284 : vector<2x1x16xf32> to vector<2x8x16xf32>
    %286 = arith.addf %16, %285 : vector<2x8x16xf32>
    %287 = vector.shape_cast %243 : vector<2x8xf32> to vector<2x8x1xf32>
    %288 = vector.broadcast %287 : vector<2x8x1xf32> to vector<2x8x16xf32>
    %289 = vector.broadcast %10 : vector<1x1x16xf32> to vector<2x8x16xf32>
    %290 = arith.mulf %288, %289 : vector<2x8x16xf32>
    %291 = arith.addf %286, %290 : vector<2x8x16xf32>
    %292 = math.tanh %291 : vector<2x8x16xf32>
    %293 = vector.broadcast %12 : vector<1x1x16xf32> to vector<2x8x16xf32>
    %294 = arith.mulf %292, %293 : vector<2x8x16xf32>
    %cst_65 = arith.constant dense<0.000000e+00> : vector<2x8xf32>
    %295 = vector.multi_reduction <add>, %294, %cst_65 [2] : vector<2x8x16xf32> to vector<2x8xf32>
    %296 = arith.addf %295, %1 : vector<2x8xf32>
    %297 = vector.extract_strided_slice %2 {offsets = [3, 0, 0], sizes = [1, 2, 8], strides = [1, 1, 1]} : vector<8x2x8xf32> to vector<1x2x8xf32>
    %298 = vector.shape_cast %297 : vector<1x2x8xf32> to vector<2x8xf32>
    %299 = arith.addf %296, %298 : vector<2x8xf32>
    %300 = tpu.reduce_index %299 {axis = 1 : i32, kind = #tpu.reduction_kind<arg_max>} : vector<2x8xf32> -> vector<2xi32>
    %301 = vector.shape_cast %300 : vector<2xi32> to vector<2x1xi32>
    %302 = vector.broadcast %301 : vector<2x1xi32> to vector<2x8xi32>
    %303 = arith.cmpi eq, %17, %302 : vector<2x8xi32>
    %304 = arith.extui %303 : vector<2x8xi1> to vector<2x8xi32>
    %305 = arith.sitofp %304 : vector<2x8xi32> to vector<2x8xf32>
    %cst_66 = arith.constant dense<0xFF800000> : vector<2xf32>
    %306 = vector.multi_reduction <maximumf>, %296, %cst_66 [1] : vector<2x8xf32> to vector<2xf32>
    %307 = vector.shape_cast %306 : vector<2xf32> to vector<2x1xf32>
    %308 = vector.broadcast %307 : vector<2x1xf32> to vector<2x8xf32>
    %309 = arith.subf %296, %308 : vector<2x8xf32>
    %310 = math.exp %309 : vector<2x8xf32>
    %cst_67 = arith.constant dense<0.000000e+00> : vector<2xf32>
    %311 = vector.multi_reduction <add>, %310, %cst_67 [1] : vector<2x8xf32> to vector<2xf32>
    %312 = vector.shape_cast %311 : vector<2xf32> to vector<2x1xf32>
    %313 = vector.broadcast %312 : vector<2x1xf32> to vector<2x8xf32>
    %314 = arith.divf %310, %313 : vector<2x8xf32>
    %315 = arith.minimumf %314, %243 : vector<2x8xf32>
    %316 = arith.addf %242, %315 : vector<2x8xf32>
    %317 = arith.addf %243, %314 : vector<2x8xf32>
    %318 = vector.shape_cast %305 : vector<2x8xf32> to vector<2x8x1xf32>
    %319 = vector.broadcast %318 : vector<2x8x1xf32> to vector<2x8x32xf32>
    %320 = arith.mulf %0, %319 : vector<2x8x32xf32>
    %cst_68 = arith.constant dense<0.000000e+00> : vector<2x32xf32>
    %321 = vector.multi_reduction <add>, %320, %cst_68 [1] : vector<2x8x32xf32> to vector<2x32xf32>
    %322 = arith.truncf %321 : vector<2x32xf32> to vector<2x32xbf16>
    %cst_69 = arith.constant dense<0.000000e+00> : vector<2x96xf32>
    %323 = tpu.matmul %322, %3, %cst_69 {dimension_numbers = #tpu.dot_dimension_numbers<[1], [0], [0], [1], [0, 0, 1, 1], [], []>} : vector<2x32xbf16>, vector<32x96xbf16>, vector<2x96xf32> -> vector<2x96xf32>
    %324 = vector.broadcast %5 : vector<1x96xf32> to vector<2x96xf32>
    %325 = arith.addf %323, %324 : vector<2x96xf32>
    %326 = vector.extract_strided_slice %325 {offsets = [0, 0], sizes = [2, 32], strides = [1, 1]} : vector<2x96xf32> to vector<2x32xf32>
    %327 = vector.extract_strided_slice %281 {offsets = [0, 0], sizes = [2, 32], strides = [1, 1]} : vector<2x96xf32> to vector<2x32xf32>
    %328 = arith.addf %326, %327 : vector<2x32xf32>
    %329 = arith.negf %328 : vector<2x32xf32>
    %330 = math.exp %329 : vector<2x32xf32>
    %cst_70 = arith.constant 1.000000e+00 : f32
    %331 = vector.broadcast %cst_70 : f32 to vector<2x32xf32>
    %332 = arith.addf %331, %330 : vector<2x32xf32>
    %333 = arith.divf %331, %332 : vector<2x32xf32>
    %334 = vector.extract_strided_slice %325 {offsets = [0, 32], sizes = [2, 32], strides = [1, 1]} : vector<2x96xf32> to vector<2x32xf32>
    %335 = vector.extract_strided_slice %281 {offsets = [0, 32], sizes = [2, 32], strides = [1, 1]} : vector<2x96xf32> to vector<2x32xf32>
    %336 = arith.addf %334, %335 : vector<2x32xf32>
    %337 = arith.negf %336 : vector<2x32xf32>
    %338 = math.exp %337 : vector<2x32xf32>
    %cst_71 = arith.constant 1.000000e+00 : f32
    %339 = vector.broadcast %cst_71 : f32 to vector<2x32xf32>
    %340 = arith.addf %339, %338 : vector<2x32xf32>
    %341 = arith.divf %339, %340 : vector<2x32xf32>
    %342 = vector.extract_strided_slice %325 {offsets = [0, 64], sizes = [2, 32], strides = [1, 1]} : vector<2x96xf32> to vector<2x32xf32>
    %343 = vector.extract_strided_slice %281 {offsets = [0, 64], sizes = [2, 32], strides = [1, 1]} : vector<2x96xf32> to vector<2x32xf32>
    %344 = arith.mulf %333, %343 : vector<2x32xf32>
    %345 = arith.addf %342, %344 : vector<2x32xf32>
    %346 = math.tanh %345 : vector<2x32xf32>
    %cst_72 = arith.constant 1.000000e+00 : f32
    %347 = vector.broadcast %cst_72 : f32 to vector<2x32xf32>
    %348 = arith.subf %347, %341 : vector<2x32xf32>
    %349 = arith.mulf %348, %346 : vector<2x32xf32>
    %350 = arith.mulf %341, %277 : vector<2x32xf32>
    %351 = arith.addf %349, %350 : vector<2x32xf32>
    %352 = arith.truncf %351 : vector<2x32xf32> to vector<2x32xbf16>
    %cst_73 = arith.constant dense<0.000000e+00> : vector<2x96xf32>
    %353 = tpu.matmul %352, %4, %cst_73 {dimension_numbers = #tpu.dot_dimension_numbers<[1], [0], [0], [1], [0, 0, 1, 1], [], []>} : vector<2x32xbf16>, vector<32x96xbf16>, vector<2x96xf32> -> vector<2x96xf32>
    %354 = vector.broadcast %6 : vector<1x96xf32> to vector<2x96xf32>
    %355 = arith.addf %353, %354 : vector<2x96xf32>
    %356 = arith.truncf %351 : vector<2x32xf32> to vector<2x32xbf16>
    %cst_74 = arith.constant dense<0.000000e+00> : vector<2x16xf32>
    %357 = tpu.matmul %356, %8, %cst_74 {dimension_numbers = #tpu.dot_dimension_numbers<[1], [0], [0], [1], [0, 0, 1, 1], [], []>} : vector<2x32xbf16>, vector<32x16xbf16>, vector<2x16xf32> -> vector<2x16xf32>
    %358 = vector.shape_cast %357 : vector<2x16xf32> to vector<2x1x16xf32>
    %359 = vector.broadcast %358 : vector<2x1x16xf32> to vector<2x8x16xf32>
    %360 = arith.addf %16, %359 : vector<2x8x16xf32>
    %361 = vector.shape_cast %317 : vector<2x8xf32> to vector<2x8x1xf32>
    %362 = vector.broadcast %361 : vector<2x8x1xf32> to vector<2x8x16xf32>
    %363 = vector.broadcast %10 : vector<1x1x16xf32> to vector<2x8x16xf32>
    %364 = arith.mulf %362, %363 : vector<2x8x16xf32>
    %365 = arith.addf %360, %364 : vector<2x8x16xf32>
    %366 = math.tanh %365 : vector<2x8x16xf32>
    %367 = vector.broadcast %12 : vector<1x1x16xf32> to vector<2x8x16xf32>
    %368 = arith.mulf %366, %367 : vector<2x8x16xf32>
    %cst_75 = arith.constant dense<0.000000e+00> : vector<2x8xf32>
    %369 = vector.multi_reduction <add>, %368, %cst_75 [2] : vector<2x8x16xf32> to vector<2x8xf32>
    %370 = arith.addf %369, %1 : vector<2x8xf32>
    %371 = vector.extract_strided_slice %2 {offsets = [4, 0, 0], sizes = [1, 2, 8], strides = [1, 1, 1]} : vector<8x2x8xf32> to vector<1x2x8xf32>
    %372 = vector.shape_cast %371 : vector<1x2x8xf32> to vector<2x8xf32>
    %373 = arith.addf %370, %372 : vector<2x8xf32>
    %374 = tpu.reduce_index %373 {axis = 1 : i32, kind = #tpu.reduction_kind<arg_max>} : vector<2x8xf32> -> vector<2xi32>
    %375 = vector.shape_cast %374 : vector<2xi32> to vector<2x1xi32>
    %376 = vector.broadcast %375 : vector<2x1xi32> to vector<2x8xi32>
    %377 = arith.cmpi eq, %17, %376 : vector<2x8xi32>
    %378 = arith.extui %377 : vector<2x8xi1> to vector<2x8xi32>
    %379 = arith.sitofp %378 : vector<2x8xi32> to vector<2x8xf32>
    %cst_76 = arith.constant dense<0xFF800000> : vector<2xf32>
    %380 = vector.multi_reduction <maximumf>, %370, %cst_76 [1] : vector<2x8xf32> to vector<2xf32>
    %381 = vector.shape_cast %380 : vector<2xf32> to vector<2x1xf32>
    %382 = vector.broadcast %381 : vector<2x1xf32> to vector<2x8xf32>
    %383 = arith.subf %370, %382 : vector<2x8xf32>
    %384 = math.exp %383 : vector<2x8xf32>
    %cst_77 = arith.constant dense<0.000000e+00> : vector<2xf32>
    %385 = vector.multi_reduction <add>, %384, %cst_77 [1] : vector<2x8xf32> to vector<2xf32>
    %386 = vector.shape_cast %385 : vector<2xf32> to vector<2x1xf32>
    %387 = vector.broadcast %386 : vector<2x1xf32> to vector<2x8xf32>
    %388 = arith.divf %384, %387 : vector<2x8xf32>
    %389 = arith.minimumf %388, %317 : vector<2x8xf32>
    %390 = arith.addf %316, %389 : vector<2x8xf32>
    %391 = arith.addf %317, %388 : vector<2x8xf32>
    %392 = vector.shape_cast %379 : vector<2x8xf32> to vector<2x8x1xf32>
    %393 = vector.broadcast %392 : vector<2x8x1xf32> to vector<2x8x32xf32>
    %394 = arith.mulf %0, %393 : vector<2x8x32xf32>
    %cst_78 = arith.constant dense<0.000000e+00> : vector<2x32xf32>
    %395 = vector.multi_reduction <add>, %394, %cst_78 [1] : vector<2x8x32xf32> to vector<2x32xf32>
    %396 = arith.truncf %395 : vector<2x32xf32> to vector<2x32xbf16>
    %cst_79 = arith.constant dense<0.000000e+00> : vector<2x96xf32>
    %397 = tpu.matmul %396, %3, %cst_79 {dimension_numbers = #tpu.dot_dimension_numbers<[1], [0], [0], [1], [0, 0, 1, 1], [], []>} : vector<2x32xbf16>, vector<32x96xbf16>, vector<2x96xf32> -> vector<2x96xf32>
    %398 = vector.broadcast %5 : vector<1x96xf32> to vector<2x96xf32>
    %399 = arith.addf %397, %398 : vector<2x96xf32>
    %400 = vector.extract_strided_slice %399 {offsets = [0, 0], sizes = [2, 32], strides = [1, 1]} : vector<2x96xf32> to vector<2x32xf32>
    %401 = vector.extract_strided_slice %355 {offsets = [0, 0], sizes = [2, 32], strides = [1, 1]} : vector<2x96xf32> to vector<2x32xf32>
    %402 = arith.addf %400, %401 : vector<2x32xf32>
    %403 = arith.negf %402 : vector<2x32xf32>
    %404 = math.exp %403 : vector<2x32xf32>
    %cst_80 = arith.constant 1.000000e+00 : f32
    %405 = vector.broadcast %cst_80 : f32 to vector<2x32xf32>
    %406 = arith.addf %405, %404 : vector<2x32xf32>
    %407 = arith.divf %405, %406 : vector<2x32xf32>
    %408 = vector.extract_strided_slice %399 {offsets = [0, 32], sizes = [2, 32], strides = [1, 1]} : vector<2x96xf32> to vector<2x32xf32>
    %409 = vector.extract_strided_slice %355 {offsets = [0, 32], sizes = [2, 32], strides = [1, 1]} : vector<2x96xf32> to vector<2x32xf32>
    %410 = arith.addf %408, %409 : vector<2x32xf32>
    %411 = arith.negf %410 : vector<2x32xf32>
    %412 = math.exp %411 : vector<2x32xf32>
    %cst_81 = arith.constant 1.000000e+00 : f32
    %413 = vector.broadcast %cst_81 : f32 to vector<2x32xf32>
    %414 = arith.addf %413, %412 : vector<2x32xf32>
    %415 = arith.divf %413, %414 : vector<2x32xf32>
    %416 = vector.extract_strided_slice %399 {offsets = [0, 64], sizes = [2, 32], strides = [1, 1]} : vector<2x96xf32> to vector<2x32xf32>
    %417 = vector.extract_strided_slice %355 {offsets = [0, 64], sizes = [2, 32], strides = [1, 1]} : vector<2x96xf32> to vector<2x32xf32>
    %418 = arith.mulf %407, %417 : vector<2x32xf32>
    %419 = arith.addf %416, %418 : vector<2x32xf32>
    %420 = math.tanh %419 : vector<2x32xf32>
    %cst_82 = arith.constant 1.000000e+00 : f32
    %421 = vector.broadcast %cst_82 : f32 to vector<2x32xf32>
    %422 = arith.subf %421, %415 : vector<2x32xf32>
    %423 = arith.mulf %422, %420 : vector<2x32xf32>
    %424 = arith.mulf %415, %351 : vector<2x32xf32>
    %425 = arith.addf %423, %424 : vector<2x32xf32>
    %426 = arith.truncf %425 : vector<2x32xf32> to vector<2x32xbf16>
    %cst_83 = arith.constant dense<0.000000e+00> : vector<2x96xf32>
    %427 = tpu.matmul %426, %4, %cst_83 {dimension_numbers = #tpu.dot_dimension_numbers<[1], [0], [0], [1], [0, 0, 1, 1], [], []>} : vector<2x32xbf16>, vector<32x96xbf16>, vector<2x96xf32> -> vector<2x96xf32>
    %428 = vector.broadcast %6 : vector<1x96xf32> to vector<2x96xf32>
    %429 = arith.addf %427, %428 : vector<2x96xf32>
    %430 = arith.truncf %425 : vector<2x32xf32> to vector<2x32xbf16>
    %cst_84 = arith.constant dense<0.000000e+00> : vector<2x16xf32>
    %431 = tpu.matmul %430, %8, %cst_84 {dimension_numbers = #tpu.dot_dimension_numbers<[1], [0], [0], [1], [0, 0, 1, 1], [], []>} : vector<2x32xbf16>, vector<32x16xbf16>, vector<2x16xf32> -> vector<2x16xf32>
    %432 = vector.shape_cast %431 : vector<2x16xf32> to vector<2x1x16xf32>
    %433 = vector.broadcast %432 : vector<2x1x16xf32> to vector<2x8x16xf32>
    %434 = arith.addf %16, %433 : vector<2x8x16xf32>
    %435 = vector.shape_cast %391 : vector<2x8xf32> to vector<2x8x1xf32>
    %436 = vector.broadcast %435 : vector<2x8x1xf32> to vector<2x8x16xf32>
    %437 = vector.broadcast %10 : vector<1x1x16xf32> to vector<2x8x16xf32>
    %438 = arith.mulf %436, %437 : vector<2x8x16xf32>
    %439 = arith.addf %434, %438 : vector<2x8x16xf32>
    %440 = math.tanh %439 : vector<2x8x16xf32>
    %441 = vector.broadcast %12 : vector<1x1x16xf32> to vector<2x8x16xf32>
    %442 = arith.mulf %440, %441 : vector<2x8x16xf32>
    %cst_85 = arith.constant dense<0.000000e+00> : vector<2x8xf32>
    %443 = vector.multi_reduction <add>, %442, %cst_85 [2] : vector<2x8x16xf32> to vector<2x8xf32>
    %444 = arith.addf %443, %1 : vector<2x8xf32>
    %445 = vector.extract_strided_slice %2 {offsets = [5, 0, 0], sizes = [1, 2, 8], strides = [1, 1, 1]} : vector<8x2x8xf32> to vector<1x2x8xf32>
    %446 = vector.shape_cast %445 : vector<1x2x8xf32> to vector<2x8xf32>
    %447 = arith.addf %444, %446 : vector<2x8xf32>
    %448 = tpu.reduce_index %447 {axis = 1 : i32, kind = #tpu.reduction_kind<arg_max>} : vector<2x8xf32> -> vector<2xi32>
    %449 = vector.shape_cast %448 : vector<2xi32> to vector<2x1xi32>
    %450 = vector.broadcast %449 : vector<2x1xi32> to vector<2x8xi32>
    %451 = arith.cmpi eq, %17, %450 : vector<2x8xi32>
    %452 = arith.extui %451 : vector<2x8xi1> to vector<2x8xi32>
    %453 = arith.sitofp %452 : vector<2x8xi32> to vector<2x8xf32>
    %cst_86 = arith.constant dense<0xFF800000> : vector<2xf32>
    %454 = vector.multi_reduction <maximumf>, %444, %cst_86 [1] : vector<2x8xf32> to vector<2xf32>
    %455 = vector.shape_cast %454 : vector<2xf32> to vector<2x1xf32>
    %456 = vector.broadcast %455 : vector<2x1xf32> to vector<2x8xf32>
    %457 = arith.subf %444, %456 : vector<2x8xf32>
    %458 = math.exp %457 : vector<2x8xf32>
    %cst_87 = arith.constant dense<0.000000e+00> : vector<2xf32>
    %459 = vector.multi_reduction <add>, %458, %cst_87 [1] : vector<2x8xf32> to vector<2xf32>
    %460 = vector.shape_cast %459 : vector<2xf32> to vector<2x1xf32>
    %461 = vector.broadcast %460 : vector<2x1xf32> to vector<2x8xf32>
    %462 = arith.divf %458, %461 : vector<2x8xf32>
    %463 = arith.minimumf %462, %391 : vector<2x8xf32>
    %464 = arith.addf %390, %463 : vector<2x8xf32>
    %465 = arith.addf %391, %462 : vector<2x8xf32>
    %466 = vector.shape_cast %453 : vector<2x8xf32> to vector<2x8x1xf32>
    %467 = vector.broadcast %466 : vector<2x8x1xf32> to vector<2x8x32xf32>
    %468 = arith.mulf %0, %467 : vector<2x8x32xf32>
    %cst_88 = arith.constant dense<0.000000e+00> : vector<2x32xf32>
    %469 = vector.multi_reduction <add>, %468, %cst_88 [1] : vector<2x8x32xf32> to vector<2x32xf32>
    %470 = arith.truncf %469 : vector<2x32xf32> to vector<2x32xbf16>
    %cst_89 = arith.constant dense<0.000000e+00> : vector<2x96xf32>
    %471 = tpu.matmul %470, %3, %cst_89 {dimension_numbers = #tpu.dot_dimension_numbers<[1], [0], [0], [1], [0, 0, 1, 1], [], []>} : vector<2x32xbf16>, vector<32x96xbf16>, vector<2x96xf32> -> vector<2x96xf32>
    %472 = vector.broadcast %5 : vector<1x96xf32> to vector<2x96xf32>
    %473 = arith.addf %471, %472 : vector<2x96xf32>
    %474 = vector.extract_strided_slice %473 {offsets = [0, 0], sizes = [2, 32], strides = [1, 1]} : vector<2x96xf32> to vector<2x32xf32>
    %475 = vector.extract_strided_slice %429 {offsets = [0, 0], sizes = [2, 32], strides = [1, 1]} : vector<2x96xf32> to vector<2x32xf32>
    %476 = arith.addf %474, %475 : vector<2x32xf32>
    %477 = arith.negf %476 : vector<2x32xf32>
    %478 = math.exp %477 : vector<2x32xf32>
    %cst_90 = arith.constant 1.000000e+00 : f32
    %479 = vector.broadcast %cst_90 : f32 to vector<2x32xf32>
    %480 = arith.addf %479, %478 : vector<2x32xf32>
    %481 = arith.divf %479, %480 : vector<2x32xf32>
    %482 = vector.extract_strided_slice %473 {offsets = [0, 32], sizes = [2, 32], strides = [1, 1]} : vector<2x96xf32> to vector<2x32xf32>
    %483 = vector.extract_strided_slice %429 {offsets = [0, 32], sizes = [2, 32], strides = [1, 1]} : vector<2x96xf32> to vector<2x32xf32>
    %484 = arith.addf %482, %483 : vector<2x32xf32>
    %485 = arith.negf %484 : vector<2x32xf32>
    %486 = math.exp %485 : vector<2x32xf32>
    %cst_91 = arith.constant 1.000000e+00 : f32
    %487 = vector.broadcast %cst_91 : f32 to vector<2x32xf32>
    %488 = arith.addf %487, %486 : vector<2x32xf32>
    %489 = arith.divf %487, %488 : vector<2x32xf32>
    %490 = vector.extract_strided_slice %473 {offsets = [0, 64], sizes = [2, 32], strides = [1, 1]} : vector<2x96xf32> to vector<2x32xf32>
    %491 = vector.extract_strided_slice %429 {offsets = [0, 64], sizes = [2, 32], strides = [1, 1]} : vector<2x96xf32> to vector<2x32xf32>
    %492 = arith.mulf %481, %491 : vector<2x32xf32>
    %493 = arith.addf %490, %492 : vector<2x32xf32>
    %494 = math.tanh %493 : vector<2x32xf32>
    %cst_92 = arith.constant 1.000000e+00 : f32
    %495 = vector.broadcast %cst_92 : f32 to vector<2x32xf32>
    %496 = arith.subf %495, %489 : vector<2x32xf32>
    %497 = arith.mulf %496, %494 : vector<2x32xf32>
    %498 = arith.mulf %489, %425 : vector<2x32xf32>
    %499 = arith.addf %497, %498 : vector<2x32xf32>
    %500 = arith.truncf %499 : vector<2x32xf32> to vector<2x32xbf16>
    %cst_93 = arith.constant dense<0.000000e+00> : vector<2x96xf32>
    %501 = tpu.matmul %500, %4, %cst_93 {dimension_numbers = #tpu.dot_dimension_numbers<[1], [0], [0], [1], [0, 0, 1, 1], [], []>} : vector<2x32xbf16>, vector<32x96xbf16>, vector<2x96xf32> -> vector<2x96xf32>
    %502 = vector.broadcast %6 : vector<1x96xf32> to vector<2x96xf32>
    %503 = arith.addf %501, %502 : vector<2x96xf32>
    %504 = arith.truncf %499 : vector<2x32xf32> to vector<2x32xbf16>
    %cst_94 = arith.constant dense<0.000000e+00> : vector<2x16xf32>
    %505 = tpu.matmul %504, %8, %cst_94 {dimension_numbers = #tpu.dot_dimension_numbers<[1], [0], [0], [1], [0, 0, 1, 1], [], []>} : vector<2x32xbf16>, vector<32x16xbf16>, vector<2x16xf32> -> vector<2x16xf32>
    %506 = vector.shape_cast %505 : vector<2x16xf32> to vector<2x1x16xf32>
    %507 = vector.broadcast %506 : vector<2x1x16xf32> to vector<2x8x16xf32>
    %508 = arith.addf %16, %507 : vector<2x8x16xf32>
    %509 = vector.shape_cast %465 : vector<2x8xf32> to vector<2x8x1xf32>
    %510 = vector.broadcast %509 : vector<2x8x1xf32> to vector<2x8x16xf32>
    %511 = vector.broadcast %10 : vector<1x1x16xf32> to vector<2x8x16xf32>
    %512 = arith.mulf %510, %511 : vector<2x8x16xf32>
    %513 = arith.addf %508, %512 : vector<2x8x16xf32>
    %514 = math.tanh %513 : vector<2x8x16xf32>
    %515 = vector.broadcast %12 : vector<1x1x16xf32> to vector<2x8x16xf32>
    %516 = arith.mulf %514, %515 : vector<2x8x16xf32>
    %cst_95 = arith.constant dense<0.000000e+00> : vector<2x8xf32>
    %517 = vector.multi_reduction <add>, %516, %cst_95 [2] : vector<2x8x16xf32> to vector<2x8xf32>
    %518 = arith.addf %517, %1 : vector<2x8xf32>
    %519 = vector.extract_strided_slice %2 {offsets = [6, 0, 0], sizes = [1, 2, 8], strides = [1, 1, 1]} : vector<8x2x8xf32> to vector<1x2x8xf32>
    %520 = vector.shape_cast %519 : vector<1x2x8xf32> to vector<2x8xf32>
    %521 = arith.addf %518, %520 : vector<2x8xf32>
    %522 = tpu.reduce_index %521 {axis = 1 : i32, kind = #tpu.reduction_kind<arg_max>} : vector<2x8xf32> -> vector<2xi32>
    %523 = vector.shape_cast %522 : vector<2xi32> to vector<2x1xi32>
    %524 = vector.broadcast %523 : vector<2x1xi32> to vector<2x8xi32>
    %525 = arith.cmpi eq, %17, %524 : vector<2x8xi32>
    %526 = arith.extui %525 : vector<2x8xi1> to vector<2x8xi32>
    %527 = arith.sitofp %526 : vector<2x8xi32> to vector<2x8xf32>
    %cst_96 = arith.constant dense<0xFF800000> : vector<2xf32>
    %528 = vector.multi_reduction <maximumf>, %518, %cst_96 [1] : vector<2x8xf32> to vector<2xf32>
    %529 = vector.shape_cast %528 : vector<2xf32> to vector<2x1xf32>
    %530 = vector.broadcast %529 : vector<2x1xf32> to vector<2x8xf32>
    %531 = arith.subf %518, %530 : vector<2x8xf32>
    %532 = math.exp %531 : vector<2x8xf32>
    %cst_97 = arith.constant dense<0.000000e+00> : vector<2xf32>
    %533 = vector.multi_reduction <add>, %532, %cst_97 [1] : vector<2x8xf32> to vector<2xf32>
    %534 = vector.shape_cast %533 : vector<2xf32> to vector<2x1xf32>
    %535 = vector.broadcast %534 : vector<2x1xf32> to vector<2x8xf32>
    %536 = arith.divf %532, %535 : vector<2x8xf32>
    %537 = arith.minimumf %536, %465 : vector<2x8xf32>
    %538 = arith.addf %464, %537 : vector<2x8xf32>
    %539 = arith.addf %465, %536 : vector<2x8xf32>
    %540 = vector.shape_cast %527 : vector<2x8xf32> to vector<2x8x1xf32>
    %541 = vector.broadcast %540 : vector<2x8x1xf32> to vector<2x8x32xf32>
    %542 = arith.mulf %0, %541 : vector<2x8x32xf32>
    %cst_98 = arith.constant dense<0.000000e+00> : vector<2x32xf32>
    %543 = vector.multi_reduction <add>, %542, %cst_98 [1] : vector<2x8x32xf32> to vector<2x32xf32>
    %544 = arith.truncf %543 : vector<2x32xf32> to vector<2x32xbf16>
    %cst_99 = arith.constant dense<0.000000e+00> : vector<2x96xf32>
    %545 = tpu.matmul %544, %3, %cst_99 {dimension_numbers = #tpu.dot_dimension_numbers<[1], [0], [0], [1], [0, 0, 1, 1], [], []>} : vector<2x32xbf16>, vector<32x96xbf16>, vector<2x96xf32> -> vector<2x96xf32>
    %546 = vector.broadcast %5 : vector<1x96xf32> to vector<2x96xf32>
    %547 = arith.addf %545, %546 : vector<2x96xf32>
    %548 = vector.extract_strided_slice %547 {offsets = [0, 0], sizes = [2, 32], strides = [1, 1]} : vector<2x96xf32> to vector<2x32xf32>
    %549 = vector.extract_strided_slice %503 {offsets = [0, 0], sizes = [2, 32], strides = [1, 1]} : vector<2x96xf32> to vector<2x32xf32>
    %550 = arith.addf %548, %549 : vector<2x32xf32>
    %551 = arith.negf %550 : vector<2x32xf32>
    %552 = math.exp %551 : vector<2x32xf32>
    %cst_100 = arith.constant 1.000000e+00 : f32
    %553 = vector.broadcast %cst_100 : f32 to vector<2x32xf32>
    %554 = arith.addf %553, %552 : vector<2x32xf32>
    %555 = arith.divf %553, %554 : vector<2x32xf32>
    %556 = vector.extract_strided_slice %547 {offsets = [0, 32], sizes = [2, 32], strides = [1, 1]} : vector<2x96xf32> to vector<2x32xf32>
    %557 = vector.extract_strided_slice %503 {offsets = [0, 32], sizes = [2, 32], strides = [1, 1]} : vector<2x96xf32> to vector<2x32xf32>
    %558 = arith.addf %556, %557 : vector<2x32xf32>
    %559 = arith.negf %558 : vector<2x32xf32>
    %560 = math.exp %559 : vector<2x32xf32>
    %cst_101 = arith.constant 1.000000e+00 : f32
    %561 = vector.broadcast %cst_101 : f32 to vector<2x32xf32>
    %562 = arith.addf %561, %560 : vector<2x32xf32>
    %563 = arith.divf %561, %562 : vector<2x32xf32>
    %564 = vector.extract_strided_slice %547 {offsets = [0, 64], sizes = [2, 32], strides = [1, 1]} : vector<2x96xf32> to vector<2x32xf32>
    %565 = vector.extract_strided_slice %503 {offsets = [0, 64], sizes = [2, 32], strides = [1, 1]} : vector<2x96xf32> to vector<2x32xf32>
    %566 = arith.mulf %555, %565 : vector<2x32xf32>
    %567 = arith.addf %564, %566 : vector<2x32xf32>
    %568 = math.tanh %567 : vector<2x32xf32>
    %cst_102 = arith.constant 1.000000e+00 : f32
    %569 = vector.broadcast %cst_102 : f32 to vector<2x32xf32>
    %570 = arith.subf %569, %563 : vector<2x32xf32>
    %571 = arith.mulf %570, %568 : vector<2x32xf32>
    %572 = arith.mulf %563, %499 : vector<2x32xf32>
    %573 = arith.addf %571, %572 : vector<2x32xf32>
    %574 = arith.truncf %573 : vector<2x32xf32> to vector<2x32xbf16>
    %cst_103 = arith.constant dense<0.000000e+00> : vector<2x16xf32>
    %575 = tpu.matmul %574, %8, %cst_103 {dimension_numbers = #tpu.dot_dimension_numbers<[1], [0], [0], [1], [0, 0, 1, 1], [], []>} : vector<2x32xbf16>, vector<32x16xbf16>, vector<2x16xf32> -> vector<2x16xf32>
    %576 = vector.shape_cast %575 : vector<2x16xf32> to vector<2x1x16xf32>
    %577 = vector.broadcast %576 : vector<2x1x16xf32> to vector<2x8x16xf32>
    %578 = arith.addf %16, %577 : vector<2x8x16xf32>
    %579 = vector.shape_cast %539 : vector<2x8xf32> to vector<2x8x1xf32>
    %580 = vector.broadcast %579 : vector<2x8x1xf32> to vector<2x8x16xf32>
    %581 = vector.broadcast %10 : vector<1x1x16xf32> to vector<2x8x16xf32>
    %582 = arith.mulf %580, %581 : vector<2x8x16xf32>
    %583 = arith.addf %578, %582 : vector<2x8x16xf32>
    %584 = math.tanh %583 : vector<2x8x16xf32>
    %585 = vector.broadcast %12 : vector<1x1x16xf32> to vector<2x8x16xf32>
    %586 = arith.mulf %584, %585 : vector<2x8x16xf32>
    %cst_104 = arith.constant dense<0.000000e+00> : vector<2x8xf32>
    %587 = vector.multi_reduction <add>, %586, %cst_104 [2] : vector<2x8x16xf32> to vector<2x8xf32>
    %588 = arith.addf %587, %1 : vector<2x8xf32>
    %589 = vector.extract_strided_slice %2 {offsets = [7, 0, 0], sizes = [1, 2, 8], strides = [1, 1, 1]} : vector<8x2x8xf32> to vector<1x2x8xf32>
    %590 = vector.shape_cast %589 : vector<1x2x8xf32> to vector<2x8xf32>
    %591 = arith.addf %588, %590 : vector<2x8xf32>
    %592 = tpu.reduce_index %591 {axis = 1 : i32, kind = #tpu.reduction_kind<arg_max>} : vector<2x8xf32> -> vector<2xi32>
    %cst_105 = arith.constant dense<0xFF800000> : vector<2xf32>
    %593 = vector.multi_reduction <maximumf>, %588, %cst_105 [1] : vector<2x8xf32> to vector<2xf32>
    %594 = vector.shape_cast %593 : vector<2xf32> to vector<2x1xf32>
    %595 = vector.broadcast %594 : vector<2x1xf32> to vector<2x8xf32>
    %596 = arith.subf %588, %595 : vector<2x8xf32>
    %597 = math.exp %596 : vector<2x8xf32>
    %cst_106 = arith.constant dense<0.000000e+00> : vector<2xf32>
    %598 = vector.multi_reduction <add>, %597, %cst_106 [1] : vector<2x8xf32> to vector<2xf32>
    %599 = vector.shape_cast %598 : vector<2xf32> to vector<2x1xf32>
    %600 = vector.broadcast %599 : vector<2x1xf32> to vector<2x8xf32>
    %601 = arith.divf %597, %600 : vector<2x8xf32>
    %602 = arith.minimumf %601, %539 : vector<2x8xf32>
    %603 = arith.addf %538, %602 : vector<2x8xf32>
    %604 = vector.shape_cast %78 : vector<2xi32> to vector<1x2xi32>
    %605 = vector.shape_cast %152 : vector<2xi32> to vector<1x2xi32>
    %606 = vector.shape_cast %226 : vector<2xi32> to vector<1x2xi32>
    %607 = vector.shape_cast %300 : vector<2xi32> to vector<1x2xi32>
    %608 = vector.shape_cast %374 : vector<2xi32> to vector<1x2xi32>
    %609 = vector.shape_cast %448 : vector<2xi32> to vector<1x2xi32>
    %610 = vector.shape_cast %522 : vector<2xi32> to vector<1x2xi32>
    %611 = vector.shape_cast %592 : vector<2xi32> to vector<1x2xi32>
    %612 = tpu.concatenate %604, %605, %606, %607, %608, %609, %610, %611 in 0 : vector<1x2xi32>, vector<1x2xi32>, vector<1x2xi32>, vector<1x2xi32>, vector<1x2xi32>, vector<1x2xi32>, vector<1x2xi32>, vector<1x2xi32> -> vector<8x2xi32>
    %c0_107 = arith.constant 0 : index
    %c0_108 = arith.constant 0 : index
    %613 = vector.load %arg12[%c0_107, %c0_108] : memref<8x2xi32, #tpu.memory_space<vmem>>, vector<8x2xi32>
    tpu.vector_store %arg12[%c0_107, %c0_108], %612 {strides = array<i32>} : memref<8x2xi32, #tpu.memory_space<vmem>>, vector<8x2xi32>,
    %c0_109 = arith.constant 0 : index
    %c0_110 = arith.constant 0 : index
    %614 = vector.load %arg13[%c0_109, %c0_110] : memref<2x8xf32, #tpu.memory_space<vmem>>, vector<2x8xf32>
    tpu.vector_store %arg13[%c0_109, %c0_110], %603 {strides = array<i32>} : memref<2x8xf32, #tpu.memory_space<vmem>>, vector<2x8xf32>,
    return
  }
}

</mosaic_0001>

<llo_original>
// kernel: tpu_custom_call.1
$region0: #{tpu_custom_call.1}
  #allocation0 [shape = 'u32[]', space=smem, size = 0x4, offset = 0x4, fixed_abs, tag = 'smem constant byte address 0x4 - core index']
  #allocation1 [shape = 'u32[144,128]{1,0:T(1,128)}', space=vmem, size = 0x12000, scoped, tag = 'internal scratch']
  %s0 = inlined_call_operand.vmem [shape: f32[2,8,32], index: 0, kind: input, shape index: {}]
  %s1 = inlined_call_operand.vmem [shape: f32[2,8], index: 1, kind: input, shape index: {}]
  %s2 = inlined_call_operand.hbm [shape: f32[2,32], index: 2, kind: input, shape index: {}]
  %s3 = inlined_call_operand.vmem [shape: f32[8,2,8], index: 3, kind: input, shape index: {}]
  %s4 = inlined_call_operand.vmem [shape: bf16[32,96], index: 4, kind: input, shape index: {}]
  %s5 = inlined_call_operand.vmem [shape: bf16[32,96], index: 5, kind: input, shape index: {}]
  %s6 = inlined_call_operand.hbm [shape: f32[1,96], index: 6, kind: input, shape index: {}]
  %s7 = inlined_call_operand.hbm [shape: f32[1,96], index: 7, kind: input, shape index: {}]
  %s8 = inlined_call_operand.vmem [shape: bf16[32,16], index: 8, kind: input, shape index: {}]
  %s9 = inlined_call_operand.vmem [shape: bf16[32,16], index: 9, kind: input, shape index: {}]
  %s10 = inlined_call_operand.vmem [shape: f32[1,16], index: 10, kind: input, shape index: {}]
  %s11 = inlined_call_operand.vmem [shape: f32[1,16], index: 11, kind: input, shape index: {}]
  %s12 = inlined_call_operand.vmem [shape: s32[8,2], index: 12, kind: output, shape index: {0}]
  %s13 = inlined_call_operand.hbm [shape: f32[2,8], index: 13, kind: output, shape index: {1}]
  %14 = xla_tuple %s12, %s13
  %s15 = sld [smem:[#allocation0]]
  $region78: #{tpu_custom_call.1} parent=0
    _
  %s17 = ssub.s32 1, %s15
  %s18 = scalar_select 0, %s17, %s15
  $region1: #{tpu_custom_call.1} parent=0
    #allocation2 [shape = 'u8[1024]{0}', space=vmem, size = 0x400, scoped, tag = 'input window, operand 2, single buffered']
    #allocation3 [shape = 's32[1]{0}', space=sflag, size = 0x4, scoped, tag = 'scoped memory for tpu_custom_call.1']
    #allocation4 [shape = 's32[1]{0}', space=sflag, size = 0x4, scoped, tag = 'scoped memory for tpu_custom_call.1']
    #allocation5 [shape = 'u8[512]{0}', space=vmem, size = 0x400, scoped, tag = 'input window, operand 6, single buffered']
    #allocation6 [shape = 's32[1]{0}', space=sflag, size = 0x4, scoped, tag = 'scoped memory for tpu_custom_call.1']
    #allocation7 [shape = 'u8[512]{0}', space=vmem, size = 0x400, scoped, tag = 'input window, operand 7, single buffered']
    #allocation8 [shape = 'u8[1024]{0}', space=vmem, size = 0x400, scoped, tag = 'output window, operand 1, single buffered']
    %19 = vsyncpa [#allocation3], 0
    %20 = vsyncpa [#allocation6], 0
    %21 = vsyncpa [#allocation4], 0
    // Predicated region
    $region2: #{tpu_custom_call.1} parent=1 // pred_check
      _
    $region3: #{tpu_custom_call.1} parent=1 // pred_check_branch
      %23 = sbr.rel (0) target = $region5
    $region4: #{tpu_custom_call.1} parent=1 // pred_region
      _
    $region5: #{tpu_custom_call.1} parent=1 // pred_fallthru
      _
    // Predicated region
    $region6: #{tpu_custom_call.1} parent=1 // pred_check
      _
    $region7: #{tpu_custom_call.1} parent=1 // pred_check_branch
      %25 = sbr.rel (0) target = $region9
    $region8: #{tpu_custom_call.1} parent=1 // pred_region
      _
    $region9: #{tpu_custom_call.1} parent=1 // pred_fallthru
      _
    // Predicated region
    $region10: #{tpu_custom_call.1} parent=1 // pred_check
      _
    $region11: #{tpu_custom_call.1} parent=1 // pred_check_branch
      %27 = sbr.rel (0) target = $region13
    $region12: #{tpu_custom_call.1} parent=1 // pred_region
      %s29 = ssub.s32 32, 32
      %30 = vsyncadd [#allocation3], %s29
      %s32 = sshll.u32 [#allocation2], 4
      %s33 = int_to_ptr.vmem [resolvable:$true] %s32
      %35 = dma.hbm_to_vmem [thread:$0]  %s2, 32, %s33, [#allocation3]
    $region13: #{tpu_custom_call.1} parent=1 // pred_fallthru
      _
    // Predicated region
    $region14: #{tpu_custom_call.1} parent=1 // pred_check
      _
    $region15: #{tpu_custom_call.1} parent=1 // pred_check_branch
      %37 = sbr.rel (0) target = $region17
    $region16: #{tpu_custom_call.1} parent=1 // pred_region
      _
    $region17: #{tpu_custom_call.1} parent=1 // pred_fallthru
      _
    // Predicated region
    $region18: #{tpu_custom_call.1} parent=1 // pred_check
      _
    $region19: #{tpu_custom_call.1} parent=1 // pred_check_branch
      %39 = sbr.rel (0) target = $region21
    $region20: #{tpu_custom_call.1} parent=1 // pred_region
      _
    $region21: #{tpu_custom_call.1} parent=1 // pred_fallthru
      _
    // Predicated region
    $region22: #{tpu_custom_call.1} parent=1 // pred_check
      _
    $region23: #{tpu_custom_call.1} parent=1 // pred_check_branch
      %41 = sbr.rel (0) target = $region25
    $region24: #{tpu_custom_call.1} parent=1 // pred_region
      _
    $region25: #{tpu_custom_call.1} parent=1 // pred_fallthru
      _
    // Predicated region
    $region26: #{tpu_custom_call.1} parent=1 // pred_check
      _
    $region27: #{tpu_custom_call.1} parent=1 // pred_check_branch
      %43 = sbr.rel (0) target = $region29
    $region28: #{tpu_custom_call.1} parent=1 // pred_region
      %s45 = ssub.s32 16, 16
      %46 = vsyncadd [#allocation6], %s45
      %s48 = sshll.u32 [#allocation5], 4
      %s49 = int_to_ptr.vmem [resolvable:$true] %s48
      %51 = dma.hbm_to_vmem [thread:$0]  %s6, 16, %s49, [#allocation6]
    $region29: #{tpu_custom_call.1} parent=1 // pred_fallthru
      _
    // Predicated region
    $region30: #{tpu_custom_call.1} parent=1 // pred_check
      _
    $region31: #{tpu_custom_call.1} parent=1 // pred_check_branch
      %53 = sbr.rel (0) target = $region33
    $region32: #{tpu_custom_call.1} parent=1 // pred_region
      %s55 = ssub.s32 16, 16
      %56 = vsyncadd [#allocation6], %s55
      %s58 = sshll.u32 [#allocation7], 4
      %s59 = int_to_ptr.vmem [resolvable:$true] %s58
      %61 = dma.hbm_to_vmem [thread:$0]  %s7, 16, %s59, [#allocation6]
    $region33: #{tpu_custom_call.1} parent=1 // pred_fallthru
      _
    // Predicated region
    $region34: #{tpu_custom_call.1} parent=1 // pred_check
      _
    $region35: #{tpu_custom_call.1} parent=1 // pred_check_branch
      %63 = sbr.rel (0) target = $region37
    $region36: #{tpu_custom_call.1} parent=1 // pred_region
      _
    $region37: #{tpu_custom_call.1} parent=1 // pred_fallthru
      _
    // Predicated region
    $region38: #{tpu_custom_call.1} parent=1 // pred_check
      _
    $region39: #{tpu_custom_call.1} parent=1 // pred_check_branch
      %65 = sbr.rel (0) target = $region41
    $region40: #{tpu_custom_call.1} parent=1 // pred_region
      _
    $region41: #{tpu_custom_call.1} parent=1 // pred_fallthru
      _
    // Predicated region
    $region42: #{tpu_custom_call.1} parent=1 // pred_check
      _
    $region43: #{tpu_custom_call.1} parent=1 // pred_check_branch
      %67 = sbr.rel (0) target = $region45
    $region44: #{tpu_custom_call.1} parent=1 // pred_region
      _
    $region45: #{tpu_custom_call.1} parent=1 // pred_fallthru
      _
    // Predicated region
    $region46: #{tpu_custom_call.1} parent=1 // pred_check
      _
    $region47: #{tpu_custom_call.1} parent=1 // pred_check_branch
      %69 = sbr.rel (0) target = $region49
    $region48: #{tpu_custom_call.1} parent=1 // pred_region
      _
    $region49: #{tpu_custom_call.1} parent=1 // pred_fallthru
      _
    // Predicated region
    $region50: #{tpu_custom_call.1} parent=1 // pred_check
      _
    $region51: #{tpu_custom_call.1} parent=1 // pred_check_branch
      %71 = sbr.rel (0) target = $region53
    $region52: #{tpu_custom_call.1} parent=1 // pred_region
      %72 = dma.done [#allocation3], 32
    $region53: #{tpu_custom_call.1} parent=1 // pred_fallthru
      _
    // Predicated region
    $region54: #{tpu_custom_call.1} parent=1 // pred_check
      _
    $region55: #{tpu_custom_call.1} parent=1 // pred_check_branch
      %74 = sbr.rel (0) target = $region57
    $region56: #{tpu_custom_call.1} parent=1 // pred_region
      %75 = dma.done [#allocation6], 16
    $region57: #{tpu_custom_call.1} parent=1 // pred_fallthru
      _
    // Predicated region
    $region58: #{tpu_custom_call.1} parent=1 // pred_check
      _
    $region59: #{tpu_custom_call.1} parent=1 // pred_check_branch
      %77 = sbr.rel (0) target = $region61
    $region60: #{tpu_custom_call.1} parent=1 // pred_region
      %78 = dma.done [#allocation6], 16
    $region61: #{tpu_custom_call.1} parent=1 // pred_fallthru
      _
    %v80 = vld [vmem:[%s0] sm:$0xff]
    %v81 = vld [vmem:[%s0 + $0x8] sm:$0xff]
    %v82 = vld [vmem:[%s1] sm:$0x3]
    %v83 = vld [vmem:[%s3] sm:$0x3]
    %v84 = vld [vmem:[%s3 + $0x2] sm:$0x3]
    %v85 = vld [vmem:[%s3 + $0x4] sm:$0x3]
    %v86 = vld [vmem:[%s3 + $0x6] sm:$0x3]
    %v87 = vld [vmem:[%s3 + $0x8] sm:$0x3]
    %v88 = vld [vmem:[%s3 + $0xa] sm:$0x3]
    %v89 = vld [vmem:[%s3 + $0xc] sm:$0x3]
    %v90 = vld [vmem:[%s3 + $0xe] sm:$0x3]
    %v91 = vld [vmem:[%s4] sm:$0xf]
    %v92 = vld [vmem:[%s4 + $0x4] sm:$0xf]
    %v93 = vld [vmem:[%s4 + $0x8] sm:$0xf]
    %v94 = vld [vmem:[%s4 + $0xc] sm:$0xf]
    %v95 = vld [vmem:[%s5] sm:$0xf]
    %v96 = vld [vmem:[%s5 + $0x4] sm:$0xf]
    %v97 = vld [vmem:[%s5 + $0x8] sm:$0xf]
    %v98 = vld [vmem:[%s5 + $0xc] sm:$0xf]
    %v99 = vld [vmem:[#allocation5] sm:$0x1]
    %v100 = vld [vmem:[#allocation7] sm:$0x1]
    %v101 = vld [vmem:[%s8] sm:$0xf]
    %v102 = vld [vmem:[%s8 + $0x4] sm:$0xf]
    %v103 = vld [vmem:[%s8 + $0x8] sm:$0xf]
    %v104 = vld [vmem:[%s8 + $0xc] sm:$0xf]
    %v105 = vld [vmem:[%s9] sm:$0xf]
    %v106 = vld [vmem:[%s9 + $0x4] sm:$0xf]
    %v107 = vld [vmem:[%s9 + $0x8] sm:$0xf]
    %v108 = vld [vmem:[%s9 + $0xc] sm:$0xf]
    %v109 = vld [vmem:[%s10] sm:$0x1]
    %v110 = vld [vmem:[%s11] sm:$0x1]
    %v111 = vpack.c.bf16 %v80, %v80
    %v112 = vpack.c.bf16 %v81, %v81
    %v115 = vunpack.c.l.b16 %v111
    %v116 = vunpack.c.l.b16 %v112
    %v117 = vpack.c.b16 %v116, %v115
    %v122 = vunpack.c.l.b16 %v101
    %v123 = vunpack.c.l.b16 %v102
    %v124 = vunpack.c.l.b16 %v103
    %v125 = vunpack.c.l.b16 %v104
    %v126 = vpack.c.b16 %v123, %v122
    %v127 = vpack.c.b16 %v125, %v124
    %vm130 = vcmask 261120
    %v132 = vsel %vm130, %v117, 0
    %134 = vmatprep.subr.bf16.mxu0 0
    %135 = vmatpush1.bf16.msra.mxu0 %v126
    %136 = vmatprep.subr.bf16.mxu0 0
    %137 = vmatpush1.bf16.msra.mxu0 %v127
    %138 = vmatprep.subr.bf16.mxu0 0
    %139 = vmatpush1.bf16.msra.mxu0 0
    %140 = vmatprep.subr.bf16.mxu0 0
    %141 = vmatpush1.bf16.msra.mxu0 0
    %142 = vmatprep.subr.bf16.mxu0 0
    %143 = vmatpush1.bf16.msra.mxu0 0
    %144 = vmatprep.subr.bf16.mxu0 0
    %145 = vmatpush1.bf16.msra.mxu0 0
    %146 = vmatprep.subr.bf16.mxu0 0
    %147 = vmatpush1.bf16.msra.mxu0 0
    %148 = vmatprep.subr.bf16.mxu0 0
    %149 = vmatpush1.bf16.msra.mxu0 0
    %150 = vmatprep.subr.bf16.mxu0 0
    %151 = vmatpush1.bf16.msra.mxu0 0
    %152 = vmatprep.subr.bf16.mxu0 0
    %153 = vmatpush1.bf16.msra.mxu0 0
    %154 = vmatprep.subr.bf16.mxu0 0
    %155 = vmatpush1.bf16.msra.mxu0 0
    %156 = vmatprep.subr.bf16.mxu0 0
    %157 = vmatpush1.bf16.msra.mxu0 0
    %158 = vmatprep.subr.bf16.mxu0 0
    %159 = vmatpush1.bf16.msra.mxu0 0
    %160 = vmatprep.subr.bf16.mxu0 0
    %161 = vmatpush1.bf16.msra.mxu0 0
    %162 = vmatprep.subr.bf16.mxu0 0
    %163 = vmatpush1.bf16.msra.mxu0 0
    %164 = vmatprep.subr.bf16.mxu0 0
    %165 = vmatpush1.bf16.msra.mxu0 0
    %166 = vmatprep.mubr.bf16.mxu0 0
    %167 = vmatmul.mubr.bf16.gmra.mrb[0].mxu0 %v132
    %v168 = vpop.f32.mrb[0].mxu0
    %v169 = vadd.f32 0.0, %v168
    %v170 = vpop.f32.mrb[0].mxu0
    %v171 = vpop.f32.mrb[0].mxu0
    %v172 = vadd.f32 0.0, %v171
    %v173 = vpop.f32.mrb[0].mxu0
    %174 = vdwg.mxu0
    %v175 = vlaneseq
    %v176 = vand.u32 %v175, 127
    %v177 = vld [vmem:[#allocation2] sm:$0x3]
    %v178 = vpack.c.bf16 %v177, %v177
    %v180 = vlaneseq
    %v181 = vshrl.u32 %v180, 7
    %v182 = vsub.s32 0, %v181
    %v183 = vrot.slane %v100, %v182
    %v189 = vunpack.c.l.b16 %v95
    %v190 = vunpack.c.l.b16 %v96
    %v191 = vunpack.c.l.b16 %v97
    %v192 = vunpack.c.l.b16 %v98
    %v193 = vpack.c.b16 %v190, %v189
    %v194 = vpack.c.b16 %v192, %v191
    %v198 = vsel %vm130, %v178, 0
    %200 = vmatprep.subr.bf16.mxu0 0
    %201 = vmatpush1.bf16.msra.mxu0 %v193
    %202 = vmatprep.subr.bf16.mxu0 0
    %203 = vmatpush1.bf16.msra.mxu0 %v194
    %204 = vmatprep.subr.bf16.mxu0 0
    %205 = vmatpush1.bf16.msra.mxu0 0
    %206 = vmatprep.subr.bf16.mxu0 0
    %207 = vmatpush1.bf16.msra.mxu0 0
    %208 = vmatprep.subr.bf16.mxu0 0
    %209 = vmatpush1.bf16.msra.mxu0 0
    %210 = vmatprep.subr.bf16.mxu0 0
    %211 = vmatpush1.bf16.msra.mxu0 0
    %212 = vmatprep.subr.bf16.mxu0 0
    %213 = vmatpush1.bf16.msra.mxu0 0
    %214 = vmatprep.subr.bf16.mxu0 0
    %215 = vmatpush1.bf16.msra.mxu0 0
    %216 = vmatprep.subr.bf16.mxu0 0
    %217 = vmatpush1.bf16.msra.mxu0 0
    %218 = vmatprep.subr.bf16.mxu0 0
    %219 = vmatpush1.bf16.msra.mxu0 0
    %220 = vmatprep.subr.bf16.mxu0 0
    %221 = vmatpush1.bf16.msra.mxu0 0
    %222 = vmatprep.subr.bf16.mxu0 0
    %223 = vmatpush1.bf16.msra.mxu0 0
    %224 = vmatprep.subr.bf16.mxu0 0
    %225 = vmatpush1.bf16.msra.mxu0 0
    %226 = vmatprep.subr.bf16.mxu0 0
    %227 = vmatpush1.bf16.msra.mxu0 0
    %228 = vmatprep.subr.bf16.mxu0 0
    %229 = vmatpush1.bf16.msra.mxu0 0
    %230 = vmatprep.subr.bf16.mxu0 0
    %231 = vmatpush1.bf16.msra.mxu0 0
    %232 = vmatprep.mubr.bf16.mxu0 0
    %233 = vmatmul.mubr.bf16.gmra.mrb[0].mxu0 %v198
    %v234 = vpop.f32.mrb[0].mxu0
    %v235 = vadd.f32 %v183, %v234
    %v236 = vpop.f32.mrb[0].mxu0
    %v237 = vpop.f32.mrb[0].mxu0
    %v238 = vpop.f32.mrb[0].mxu0
    %239 = vdwg.mxu0
    %v241 = vlaneseq
    %v242 = vshrl.u32 %v241, 7
    %v243 = vsub.s32 0, %v242
    %v244 = vrot.slane %v99, %v243
    %v250 = vunpack.c.l.b16 %v91
    %v251 = vunpack.c.l.b16 %v92
    %v252 = vunpack.c.l.b16 %v93
    %v253 = vunpack.c.l.b16 %v94
    %v254 = vpack.c.b16 %v251, %v250
    %v255 = vpack.c.b16 %v253, %v252
    %v259 = vsel %vm130, 0, 0
    %261 = vmatprep.subr.bf16.mxu0 0
    %262 = vmatpush1.bf16.msra.mxu0 %v254
    %263 = vmatprep.subr.bf16.mxu0 0
    %264 = vmatpush1.bf16.msra.mxu0 %v255
    %265 = vmatprep.subr.bf16.mxu0 0
    %266 = vmatpush1.bf16.msra.mxu0 0
    %267 = vmatprep.subr.bf16.mxu0 0
    %268 = vmatpush1.bf16.msra.mxu0 0
    %269 = vmatprep.subr.bf16.mxu0 0
    %270 = vmatpush1.bf16.msra.mxu0 0
    %271 = vmatprep.subr.bf16.mxu0 0
    %272 = vmatpush1.bf16.msra.mxu0 0
    %273 = vmatprep.subr.bf16.mxu0 0
    %274 = vmatpush1.bf16.msra.mxu0 0
    %275 = vmatprep.subr.bf16.mxu0 0
    %276 = vmatpush1.bf16.msra.mxu0 0
    %277 = vmatprep.subr.bf16.mxu0 0
    %278 = vmatpush1.bf16.msra.mxu0 0
    %279 = vmatprep.subr.bf16.mxu0 0
    %280 = vmatpush1.bf16.msra.mxu0 0
    %281 = vmatprep.subr.bf16.mxu0 0
    %282 = vmatpush1.bf16.msra.mxu0 0
    %283 = vmatprep.subr.bf16.mxu0 0
    %284 = vmatpush1.bf16.msra.mxu0 0
    %285 = vmatprep.subr.bf16.mxu0 0
    %286 = vmatpush1.bf16.msra.mxu0 0
    %287 = vmatprep.subr.bf16.mxu0 0
    %288 = vmatpush1.bf16.msra.mxu0 0
    %289 = vmatprep.subr.bf16.mxu0 0
    %290 = vmatpush1.bf16.msra.mxu0 0
    %291 = vmatprep.subr.bf16.mxu0 0
    %292 = vmatpush1.bf16.msra.mxu0 0
    %293 = vmatprep.mubr.bf16.mxu0 0
    %294 = vmatmul.mubr.bf16.gmra.mrb[0].mxu0 %v259
    %v295 = vpop.f32.mrb[0].mxu0
    %v296 = vadd.f32 %v244, %v295
    %v297 = vpop.f32.mrb[0].mxu0
    %v298 = vpop.f32.mrb[0].mxu0
    %v299 = vpop.f32.mrb[0].mxu0
    %300 = vdwg.mxu0
    %v301 = vadd.f32 %v296, %v235
    %v302 = vxor.u32 %v301, 2147483648
    %v303 = vmul.f32 %v302, 1.442695
    %v304 = vpow.pop %v303
    %v305 = vadd.f32 %v304, 1.0
    %v306 = vrcp.pop %v305
    %v307 = vmul.f32 1.0, %v306
    %309 = vrot.lane.b32.xlu0 %v235, 64
    %v310 = vpop.permute.xlu0 %309
    %v312 = vmul.f32 %v307, %v310
    %314 = vrot.lane.b32.xlu0 %v312, 64
    %v315 = vpop.permute.xlu0 %314
    %v317 = vadd.f32 %v296, %v315
    %v318 = vtanh.pop %v317
    %v319 = vsub.f32 1.0, %v307
    %321 = vrot.lane.b32.xlu0 %v318, 96
    %v322 = vpop.permute.xlu0 %321
    %v324 = vmul.f32 %v319, %v322
    %326 = vrot.lane.b32.xlu0 %v177, 32
    %v327 = vpop.permute.xlu0 %326
    %v329 = vmul.f32 %v307, %v327
    %v330 = vadd.f32 %v324, %v329
    %v331 = vpack.c.bf16 %v330, %v330
    %333 = vrot.lane.b32.xlu0 %v331, 96
    %v334 = vpop.permute.xlu0 %333
    %v336 = vsel %vm130, %v334, 0
    %338 = vmatprep.subr.bf16.mxu0 0
    %339 = vmatpush1.bf16.msra.mxu0 %v193
    %340 = vmatprep.subr.bf16.mxu0 0
    %341 = vmatpush1.bf16.msra.mxu0 %v194
    %342 = vmatprep.subr.bf16.mxu0 0
    %343 = vmatpush1.bf16.msra.mxu0 0
    %344 = vmatprep.subr.bf16.mxu0 0
    %345 = vmatpush1.bf16.msra.mxu0 0
    %346 = vmatprep.subr.bf16.mxu0 0
    %347 = vmatpush1.bf16.msra.mxu0 0
    %348 = vmatprep.subr.bf16.mxu0 0
    %349 = vmatpush1.bf16.msra.mxu0 0
    %350 = vmatprep.subr.bf16.mxu0 0
    %351 = vmatpush1.bf16.msra.mxu0 0
    %352 = vmatprep.subr.bf16.mxu0 0
    %353 = vmatpush1.bf16.msra.mxu0 0
    %354 = vmatprep.subr.bf16.mxu0 0
    %355 = vmatpush1.bf16.msra.mxu0 0
    %356 = vmatprep.subr.bf16.mxu0 0
    %357 = vmatpush1.bf16.msra.mxu0 0
    %358 = vmatprep.subr.bf16.mxu0 0
    %359 = vmatpush1.bf16.msra.mxu0 0
    %360 = vmatprep.subr.bf16.mxu0 0
    %361 = vmatpush1.bf16.msra.mxu0 0
    %362 = vmatprep.subr.bf16.mxu0 0
    %363 = vmatpush1.bf16.msra.mxu0 0
    %364 = vmatprep.subr.bf16.mxu0 0
    %365 = vmatpush1.bf16.msra.mxu0 0
    %366 = vmatprep.subr.bf16.mxu0 0
    %367 = vmatpush1.bf16.msra.mxu0 0
    %368 = vmatprep.subr.bf16.mxu0 0
    %369 = vmatpush1.bf16.msra.mxu0 0
    %370 = vmatprep.mubr.bf16.mxu0 0
    %371 = vmatmul.mubr.bf16.gmra.mrb[0].mxu0 %v336
    %v372 = vpop.f32.mrb[0].mxu0
    %v373 = vadd.f32 %v183, %v372
    %v374 = vpop.f32.mrb[0].mxu0
    %v375 = vpop.f32.mrb[0].mxu0
    %v376 = vpop.f32.mrb[0].mxu0
    %377 = vdwg.mxu0
    %v382 = vunpack.c.l.b16 %v105
    %v383 = vunpack.c.l.b16 %v106
    %v384 = vunpack.c.l.b16 %v107
    %v385 = vunpack.c.l.b16 %v108
    %v386 = vpack.c.b16 %v383, %v382
    %v387 = vpack.c.b16 %v385, %v384
    %390 = vmatprep.subr.bf16.mxu0 0
    %391 = vmatpush1.bf16.msra.mxu0 %v386
    %392 = vmatprep.subr.bf16.mxu0 0
    %393 = vmatpush1.bf16.msra.mxu0 %v387
    %394 = vmatprep.subr.bf16.mxu0 0
    %395 = vmatpush1.bf16.msra.mxu0 0
    %396 = vmatprep.subr.bf16.mxu0 0
    %397 = vmatpush1.bf16.msra.mxu0 0
    %398 = vmatprep.subr.bf16.mxu0 0
    %399 = vmatpush1.bf16.msra.mxu0 0
    %400 = vmatprep.subr.bf16.mxu0 0
    %401 = vmatpush1.bf16.msra.mxu0 0
    %402 = vmatprep.subr.bf16.mxu0 0
    %403 = vmatpush1.bf16.msra.mxu0 0
    %404 = vmatprep.subr.bf16.mxu0 0
    %405 = vmatpush1.bf16.msra.mxu0 0
    %406 = vmatprep.subr.bf16.mxu0 0
    %407 = vmatpush1.bf16.msra.mxu0 0
    %408 = vmatprep.subr.bf16.mxu0 0
    %409 = vmatpush1.bf16.msra.mxu0 0
    %410 = vmatprep.subr.bf16.mxu0 0
    %411 = vmatpush1.bf16.msra.mxu0 0
    %412 = vmatprep.subr.bf16.mxu0 0
    %413 = vmatpush1.bf16.msra.mxu0 0
    %414 = vmatprep.subr.bf16.mxu0 0
    %415 = vmatpush1.bf16.msra.mxu0 0
    %416 = vmatprep.subr.bf16.mxu0 0
    %417 = vmatpush1.bf16.msra.mxu0 0
    %418 = vmatprep.subr.bf16.mxu0 0
    %419 = vmatpush1.bf16.msra.mxu0 0
    %420 = vmatprep.subr.bf16.mxu0 0
    %421 = vmatpush1.bf16.msra.mxu0 0
    %422 = vmatprep.mubr.bf16.mxu0 0
    %423 = vmatmul.mubr.bf16.gmra.mrb[0].mxu0 %v336
    %v424 = vpop.f32.mrb[0].mxu0
    %v425 = vadd.f32 0.0, %v424
    %v426 = vpop.f32.mrb[0].mxu0
    %v427 = vpop.f32.mrb[0].mxu0
    %v428 = vpop.f32.mrb[0].mxu0
    %429 = vdwg.mxu0
    %v432 = vunpack.c.l.s4 1966171168
    %v433 = vunpack.c.0.s8 %v432
    %v434 = vlaneseq
    %v435 = vshrl.u32 %v434, 7
    %v436 = vsub.s32 %v433, %v435
    %v437 = vrot.slane %v425, %v436
    %v438 = vcombine.high %v437, %v437
    %v440 = vunpack.c.l.s4 1966171168
    %v441 = vunpack.c.0.s8 %v440
    %v442 = vlaneseq
    %v443 = vshrl.u32 %v442, 7
    %v444 = vsub.s32 %v441, %v443
    %v445 = vrot.slane %v437, %v444
    %v447 = vunpack.c.l.s4 1966171168
    %v448 = vunpack.c.0.s8 %v447
    %v449 = vlaneseq
    %v450 = vshrl.u32 %v449, 7
    %v451 = vsub.s32 %v448, %v450
    %v452 = vrot.slane %v438, %v451
    %v453 = vlaneseq
    %v454 = vshrl.u32 %v453, 7
    %v455 = vsub.s32 0, %v454
    %v456 = vrot.slane %v445, %v455
    %v457 = vlaneseq
    %v458 = vshrl.u32 %v457, 7
    %v459 = vsub.s32 0, %v458
    %v460 = vrot.slane %v452, %v459
    %v463 = vadd.f32 %v169, %v456
    %v464 = vadd.f32 %v172, %v460
    %v466 = vlaneseq
    %v467 = vshrl.u32 %v466, 7
    %v468 = vsub.s32 0, %v467
    %v469 = vrot.slane %v109, %v468
    %v471 = vmul.f32 %v469, 0.0
    %v472 = vadd.f32 %v463, %v471
    %v473 = vadd.f32 %v464, %v471
    %v474 = vtanh.pop %v472
    %v475 = vtanh.pop %v473
    %v477 = vlaneseq
    %v478 = vshrl.u32 %v477, 7
    %v479 = vsub.s32 0, %v478
    %v480 = vrot.slane %v110, %v479
    %v482 = vmul.f32 %v474, %v480
    %v483 = vmul.f32 %v475, %v480
    %vm484 = vcmask 130048
    %v485 = vsel %vm484, %v482, 0.0
    %486 = vadd.xlane.f32.xlu0 %v485
    %v487 = vpop.xlane.xlu0 %486
    %v488 = vsel %vm484, %v483, 0.0
    %489 = vadd.xlane.f32.xlu0 %v488
    %v490 = vpop.xlane.xlu0 %489
    %v492 = vlaneseq
    %v493 = vshrl.u32 %v492, 7
    %v494 = vsub.s32 0, %v493
    %v495 = vrot.slane %v82, %v494
    %497 = vbcast.lane.b32.xlu0 %v495, 256
    %v498 = vpop.permute.xlu0 %497
    %v499 = vlaneseq
    %v500 = vshrl.u32 %v499, 7
    %v501 = vsub.s32 1, %v500
    %v502 = vrot.slane %v82, %v501
    %504 = vbcast.lane.b32.xlu0 %v502, 256
    %v505 = vpop.permute.xlu0 %504
    %v508 = vadd.f32 %v487, %v498
    %v509 = vadd.f32 %v490, %v505
    %v511 = vlaneseq
    %v512 = vshrl.u32 %v511, 7
    %v513 = vsub.s32 0, %v512
    %v514 = vrot.slane %v83, %v513
    %516 = vbcast.lane.b32.xlu0 %v514, 256
    %v517 = vpop.permute.xlu0 %516
    %v518 = vlaneseq
    %v519 = vshrl.u32 %v518, 7
    %v520 = vsub.s32 1, %v519
    %v521 = vrot.slane %v83, %v520
    %523 = vbcast.lane.b32.xlu0 %v521, 256
    %v524 = vpop.permute.xlu0 %523
    %v527 = vadd.f32 %v508, %v517
    %v528 = vadd.f32 %v509, %v524
    %531 = vset.pattern.permute.xlu0 0
    %532 = vperm.xlu0 %531, %v527
    %v533 = vpop.permute.xlu0 %532
    %534 = vset.pattern.permute.xlu0 0
    %535 = vperm.xlu0 %534, %v528
    %v536 = vpop.permute.xlu0 %535
    %v537 = vlaneseq
    %v538 = vshrl.u32 %v537, 7
    %v539 = vsub.s32 %v176, %v538
    %v540 = vrot.slane %v533, %v539
    %v541 = vlaneseq
    %v542 = vshrl.u32 %v541, 7
    %v543 = vsub.s32 %v176, %v542
    %v544 = vrot.slane %v536, %v543
    %vm545 = vcmask 1041409
    %v546 = vsel %vm545, %v544, %v540
    %vm548 = vcmask 58368
    %v549 = vsel %vm548, %v546, -inf
    %550 = vmax.index.xlane.f32.xlu0 %v549
    %v551 = vpop.xlane.xlu0 %550
    %vm552 = vcmp.eq.s32.totalorder %v176, %v551
    %v553 = vsel %vm552, 1, 0
    %v554 = vcvt.s32.f32 %v553
    %557 = vset.pattern.permute.xlu0 0
    %558 = vperm.xlu0 %557, %v508
    %v559 = vpop.permute.xlu0 %558
    %560 = vset.pattern.permute.xlu0 0
    %561 = vperm.xlu0 %560, %v509
    %v562 = vpop.permute.xlu0 %561
    %v563 = vlaneseq
    %v564 = vshrl.u32 %v563, 7
    %v565 = vsub.s32 %v176, %v564
    %v566 = vrot.slane %v559, %v565
    %v567 = vlaneseq
    %v568 = vshrl.u32 %v567, 7
    %v569 = vsub.s32 %v176, %v568
    %v570 = vrot.slane %v562, %v569
    %v571 = vsel %vm545, %v570, %v566
    %v573 = vsel %vm548, %v571, -inf
    %574 = vmax.xlane.f32.xlu0 %v573
    %v575 = vpop.xlane.xlu0 %574
    %v577 = vlaneseq
    %v578 = vshrl.u32 %v577, 7
    %v579 = vsub.s32 0, %v578
    %v580 = vrot.slane %v575, %v579
    %v581 = vlaneseq
    %v582 = vshrl.u32 %v581, 7
    %v583 = vsub.s32 1, %v582
    %v584 = vrot.slane %v575, %v583
    %v587 = vsub.f32 %v508, %v580
    %v588 = vsub.f32 %v509, %v584
    %v589 = vmul.f32 %v587, 1.442695
    %v590 = vpow.pop %v589
    %v591 = vmul.f32 %v588, 1.442695
    %v592 = vpow.pop %v591
    %595 = vset.pattern.permute.xlu0 0
    %596 = vperm.xlu0 %595, %v590
    %v597 = vpop.permute.xlu0 %596
    %598 = vset.pattern.permute.xlu0 0
    %599 = vperm.xlu0 %598, %v592
    %v600 = vpop.permute.xlu0 %599
    %v601 = vlaneseq
    %v602 = vshrl.u32 %v601, 7
    %v603 = vsub.s32 %v176, %v602
    %v604 = vrot.slane %v597, %v603
    %v605 = vlaneseq
    %v606 = vshrl.u32 %v605, 7
    %v607 = vsub.s32 %v176, %v606
    %v608 = vrot.slane %v600, %v607
    %v609 = vsel %vm545, %v608, %v604
    %v611 = vsel %vm548, %v609, 0.0
    %612 = vadd.xlane.f32.xlu0 %v611
    %v613 = vpop.xlane.xlu0 %612
    %v615 = vlaneseq
    %v616 = vshrl.u32 %v615, 7
    %v617 = vsub.s32 0, %v616
    %v618 = vrot.slane %v613, %v617
    %v619 = vlaneseq
    %v620 = vshrl.u32 %v619, 7
    %v621 = vsub.s32 1, %v620
    %v622 = vrot.slane %v613, %v621
    %v625 = vrcp.pop %v618
    %v626 = vmul.f32 %v590, %v625
    %v627 = vrcp.pop %v622
    %v628 = vmul.f32 %v592, %v627
    %v629 = vmin.f32 %v626, 0.0
    %v630 = vmin.f32 %v628, 0.0
    %v631 = vadd.f32 %v629, 0.0
    %v632 = vadd.f32 %v630, 0.0
    %v633 = vadd.f32 %v626, 0.0
    %v634 = vadd.f32 %v628, 0.0
    %v635 = vlaneseq
    %v636 = vshrl.u32 %v635, 7
    %v637 = vsub.s32 0, %v636
    %v638 = vrot.slane %v554, %v637
    %640 = vbcast.lane.b32.xlu0 %v638, 256
    %v641 = vpop.permute.xlu0 %640
    %v642 = vlaneseq
    %v643 = vshrl.u32 %v642, 7
    %v644 = vsub.s32 1, %v643
    %v645 = vrot.slane %v554, %v644
    %647 = vbcast.lane.b32.xlu0 %v645, 256
    %v648 = vpop.permute.xlu0 %647
    %v649 = vmul.f32 %v80, %v641
    %v650 = vmul.f32 %v81, %v648
    %v651 = vsel %vm130, %v649, 0.0
    %v652 = vrot.slane %v651, 4
    %v653 = vadd.f32 %v651, %v652
    %v654 = vrot.slane %v653, 2
    %v655 = vadd.f32 %v653, %v654
    %v656 = vrot.slane %v655, 1
    %v657 = vadd.f32 %v655, %v656
    %v658 = vsel %vm130, %v650, 0.0
    %v659 = vrot.slane %v658, 4
    %v660 = vadd.f32 %v658, %v659
    %v661 = vrot.slane %v660, 2
    %v662 = vadd.f32 %v660, %v661
    %v663 = vrot.slane %v662, 1
    %v664 = vadd.f32 %v662, %v663
    %v665 = vpack.c.bf16 %v657, %v657
    %v666 = vpack.c.bf16 %v664, %v664
    %v669 = vunpack.c.l.b16 %v665
    %v670 = vunpack.c.l.b16 %v666
    %v671 = vsel %vm545, %v670, %v669
    %v672 = vpack.c.b16 %v671, %v671
    %v674 = vsel %vm130, %v672, 0
    %676 = vmatprep.subr.bf16.mxu0 0
    %677 = vmatpush1.bf16.msra.mxu0 %v254
    %678 = vmatprep.subr.bf16.mxu0 0
    %679 = vmatpush1.bf16.msra.mxu0 %v255
    %680 = vmatprep.subr.bf16.mxu0 0
    %681 = vmatpush1.bf16.msra.mxu0 0
    %682 = vmatprep.subr.bf16.mxu0 0
    %683 = vmatpush1.bf16.msra.mxu0 0
    %684 = vmatprep.subr.bf16.mxu0 0
    %685 = vmatpush1.bf16.msra.mxu0 0
    %686 = vmatprep.subr.bf16.mxu0 0
    %687 = vmatpush1.bf16.msra.mxu0 0
    %688 = vmatprep.subr.bf16.mxu0 0
    %689 = vmatpush1.bf16.msra.mxu0 0
    %690 = vmatprep.subr.bf16.mxu0 0
    %691 = vmatpush1.bf16.msra.mxu0 0
    %692 = vmatprep.subr.bf16.mxu0 0
    %693 = vmatpush1.bf16.msra.mxu0 0
    %694 = vmatprep.subr.bf16.mxu0 0
    %695 = vmatpush1.bf16.msra.mxu0 0
    %696 = vmatprep.subr.bf16.mxu0 0
    %697 = vmatpush1.bf16.msra.mxu0 0
    %698 = vmatprep.subr.bf16.mxu0 0
    %699 = vmatpush1.bf16.msra.mxu0 0
    %700 = vmatprep.subr.bf16.mxu0 0
    %701 = vmatpush1.bf16.msra.mxu0 0
    %702 = vmatprep.subr.bf16.mxu0 0
    %703 = vmatpush1.bf16.msra.mxu0 0
    %704 = vmatprep.subr.bf16.mxu0 0
    %705 = vmatpush1.bf16.msra.mxu0 0
    %706 = vmatprep.subr.bf16.mxu0 0
    %707 = vmatpush1.bf16.msra.mxu0 0
    %708 = vmatprep.mubr.bf16.mxu0 0
    %709 = vmatmul.mubr.bf16.gmra.mrb[0].mxu0 %v674
    %v710 = vpop.f32.mrb[0].mxu0
    %v711 = vadd.f32 %v244, %v710
    %v712 = vpop.f32.mrb[0].mxu0
    %v713 = vpop.f32.mrb[0].mxu0
    %v714 = vpop.f32.mrb[0].mxu0
    %715 = vdwg.mxu0
    %v716 = vadd.f32 %v711, %v373
    %v717 = vxor.u32 %v716, 2147483648
    %v718 = vmul.f32 %v717, 1.442695
    %v719 = vpow.pop %v718
    %v720 = vadd.f32 %v719, 1.0
    %v721 = vrcp.pop %v720
    %v722 = vmul.f32 1.0, %v721
    %724 = vrot.lane.b32.xlu0 %v373, 64
    %v725 = vpop.permute.xlu0 %724
    %v727 = vmul.f32 %v722, %v725
    %729 = vrot.lane.b32.xlu0 %v727, 64
    %v730 = vpop.permute.xlu0 %729
    %v732 = vadd.f32 %v711, %v730
    %v733 = vtanh.pop %v732
    %v734 = vsub.f32 1.0, %v722
    %736 = vrot.lane.b32.xlu0 %v733, 96
    %v737 = vpop.permute.xlu0 %736
    %v739 = vmul.f32 %v734, %v737
    %v740 = vmul.f32 %v722, %v330
    %v741 = vadd.f32 %v739, %v740
    %v742 = vpack.c.bf16 %v741, %v741
    %744 = vrot.lane.b32.xlu0 %v742, 96
    %v745 = vpop.permute.xlu0 %744
    %v747 = vsel %vm130, %v745, 0
    %749 = vmatprep.subr.bf16.mxu0 0
    %750 = vmatpush1.bf16.msra.mxu0 %v193
    %751 = vmatprep.subr.bf16.mxu0 0
    %752 = vmatpush1.bf16.msra.mxu0 %v194
    %753 = vmatprep.subr.bf16.mxu0 0
    %754 = vmatpush1.bf16.msra.mxu0 0
    %755 = vmatprep.subr.bf16.mxu0 0
    %756 = vmatpush1.bf16.msra.mxu0 0
    %757 = vmatprep.subr.bf16.mxu0 0
    %758 = vmatpush1.bf16.msra.mxu0 0
    %759 = vmatprep.subr.bf16.mxu0 0
    %760 = vmatpush1.bf16.msra.mxu0 0
    %761 = vmatprep.subr.bf16.mxu0 0
    %762 = vmatpush1.bf16.msra.mxu0 0
    %763 = vmatprep.subr.bf16.mxu0 0
    %764 = vmatpush1.bf16.msra.mxu0 0
    %765 = vmatprep.subr.bf16.mxu0 0
    %766 = vmatpush1.bf16.msra.mxu0 0
    %767 = vmatprep.subr.bf16.mxu0 0
    %768 = vmatpush1.bf16.msra.mxu0 0
    %769 = vmatprep.subr.bf16.mxu0 0
    %770 = vmatpush1.bf16.msra.mxu0 0
    %771 = vmatprep.subr.bf16.mxu0 0
    %772 = vmatpush1.bf16.msra.mxu0 0
    %773 = vmatprep.subr.bf16.mxu0 0
    %774 = vmatpush1.bf16.msra.mxu0 0
    %775 = vmatprep.subr.bf16.mxu0 0
    %776 = vmatpush1.bf16.msra.mxu0 0
    %777 = vmatprep.subr.bf16.mxu0 0
    %778 = vmatpush1.bf16.msra.mxu0 0
    %779 = vmatprep.subr.bf16.mxu0 0
    %780 = vmatpush1.bf16.msra.mxu0 0
    %781 = vmatprep.mubr.bf16.mxu0 0
    %782 = vmatmul.mubr.bf16.gmra.mrb[0].mxu0 %v747
    %v783 = vpop.f32.mrb[0].mxu0
    %v784 = vadd.f32 %v183, %v783
    %v785 = vpop.f32.mrb[0].mxu0
    %v786 = vpop.f32.mrb[0].mxu0
    %v787 = vpop.f32.mrb[0].mxu0
    %788 = vdwg.mxu0
    %789 = vmatprep.subr.bf16.mxu0 0
    %790 = vmatpush1.bf16.msra.mxu0 %v386
    %791 = vmatprep.subr.bf16.mxu0 0
    %792 = vmatpush1.bf16.msra.mxu0 %v387
    %793 = vmatprep.subr.bf16.mxu0 0
    %794 = vmatpush1.bf16.msra.mxu0 0
    %795 = vmatprep.subr.bf16.mxu0 0
    %796 = vmatpush1.bf16.msra.mxu0 0
    %797 = vmatprep.subr.bf16.mxu0 0
    %798 = vmatpush1.bf16.msra.mxu0 0
    %799 = vmatprep.subr.bf16.mxu0 0
    %800 = vmatpush1.bf16.msra.mxu0 0
    %801 = vmatprep.subr.bf16.mxu0 0
    %802 = vmatpush1.bf16.msra.mxu0 0
    %803 = vmatprep.subr.bf16.mxu0 0
    %804 = vmatpush1.bf16.msra.mxu0 0
    %805 = vmatprep.subr.bf16.mxu0 0
    %806 = vmatpush1.bf16.msra.mxu0 0
    %807 = vmatprep.subr.bf16.mxu0 0
    %808 = vmatpush1.bf16.msra.mxu0 0
    %809 = vmatprep.subr.bf16.mxu0 0
    %810 = vmatpush1.bf16.msra.mxu0 0
    %811 = vmatprep.subr.bf16.mxu0 0
    %812 = vmatpush1.bf16.msra.mxu0 0
    %813 = vmatprep.subr.bf16.mxu0 0
    %814 = vmatpush1.bf16.msra.mxu0 0
    %815 = vmatprep.subr.bf16.mxu0 0
    %816 = vmatpush1.bf16.msra.mxu0 0
    %817 = vmatprep.subr.bf16.mxu0 0
    %818 = vmatpush1.bf16.msra.mxu0 0
    %819 = vmatprep.subr.bf16.mxu0 0
    %820 = vmatpush1.bf16.msra.mxu0 0
    %821 = vmatprep.mubr.bf16.mxu0 0
    %822 = vmatmul.mubr.bf16.gmra.mrb[0].mxu0 %v747
    %v823 = vpop.f32.mrb[0].mxu0
    %v824 = vadd.f32 0.0, %v823
    %v825 = vpop.f32.mrb[0].mxu0
    %v826 = vpop.f32.mrb[0].mxu0
    %v827 = vpop.f32.mrb[0].mxu0
    %828 = vdwg.mxu0
    %v831 = vunpack.c.l.s4 1966171168
    %v832 = vunpack.c.0.s8 %v831
    %v833 = vlaneseq
    %v834 = vshrl.u32 %v833, 7
    %v835 = vsub.s32 %v832, %v834
    %v836 = vrot.slane %v824, %v835
    %v837 = vcombine.high %v836, %v836
    %v839 = vunpack.c.l.s4 1966171168
    %v840 = vunpack.c.0.s8 %v839
    %v841 = vlaneseq
    %v842 = vshrl.u32 %v841, 7
    %v843 = vsub.s32 %v840, %v842
    %v844 = vrot.slane %v836, %v843
    %v846 = vunpack.c.l.s4 1966171168
    %v847 = vunpack.c.0.s8 %v846
    %v848 = vlaneseq
    %v849 = vshrl.u32 %v848, 7
    %v850 = vsub.s32 %v847, %v849
    %v851 = vrot.slane %v837, %v850
    %v852 = vlaneseq
    %v853 = vshrl.u32 %v852, 7
    %v854 = vsub.s32 0, %v853
    %v855 = vrot.slane %v844, %v854
    %v856 = vlaneseq
    %v857 = vshrl.u32 %v856, 7
    %v858 = vsub.s32 0, %v857
    %v859 = vrot.slane %v851, %v858
    %v862 = vadd.f32 %v169, %v855
    %v863 = vadd.f32 %v172, %v859
    %865 = vset.pattern.permute.xlu0 0
    %866 = vperm.xlu0 %865, %v633
    %v867 = vpop.permute.xlu0 %866
    %870 = vset.pattern.permute.xlu0 0
    %871 = vperm.xlu0 %870, %v634
    %v872 = vpop.permute.xlu0 %871
    %v874 = vmul.f32 %v867, %v469
    %v875 = vmul.f32 %v872, %v469
    %v876 = vadd.f32 %v862, %v874
    %v877 = vadd.f32 %v863, %v875
    %v878 = vtanh.pop %v876
    %v879 = vtanh.pop %v877
    %v880 = vmul.f32 %v878, %v480
    %v881 = vmul.f32 %v879, %v480
    %v882 = vsel %vm484, %v880, 0.0
    %883 = vadd.xlane.f32.xlu0 %v882
    %v884 = vpop.xlane.xlu0 %883
    %v885 = vsel %vm484, %v881, 0.0
    %886 = vadd.xlane.f32.xlu0 %v885
    %v887 = vpop.xlane.xlu0 %886
    %v888 = vadd.f32 %v884, %v498
    %v889 = vadd.f32 %v887, %v505
    %v891 = vlaneseq
    %v892 = vshrl.u32 %v891, 7
    %v893 = vsub.s32 0, %v892
    %v894 = vrot.slane %v84, %v893
    %896 = vbcast.lane.b32.xlu0 %v894, 256
    %v897 = vpop.permute.xlu0 %896
    %v898 = vlaneseq
    %v899 = vshrl.u32 %v898, 7
    %v900 = vsub.s32 1, %v899
    %v901 = vrot.slane %v84, %v900
    %903 = vbcast.lane.b32.xlu0 %v901, 256
    %v904 = vpop.permute.xlu0 %903
    %v907 = vadd.f32 %v888, %v897
    %v908 = vadd.f32 %v889, %v904
    %911 = vset.pattern.permute.xlu0 0
    %912 = vperm.xlu0 %911, %v907
    %v913 = vpop.permute.xlu0 %912
    %914 = vset.pattern.permute.xlu0 0
    %915 = vperm.xlu0 %914, %v908
    %v916 = vpop.permute.xlu0 %915
    %v917 = vlaneseq
    %v918 = vshrl.u32 %v917, 7
    %v919 = vsub.s32 %v176, %v918
    %v920 = vrot.slane %v913, %v919
    %v921 = vlaneseq
    %v922 = vshrl.u32 %v921, 7
    %v923 = vsub.s32 %v176, %v922
    %v924 = vrot.slane %v916, %v923
    %v925 = vsel %vm545, %v924, %v920
    %v927 = vsel %vm548, %v925, -inf
    %928 = vmax.index.xlane.f32.xlu0 %v927
    %v929 = vpop.xlane.xlu0 %928
    %vm930 = vcmp.eq.s32.totalorder %v176, %v929
    %v931 = vsel %vm930, 1, 0
    %v932 = vcvt.s32.f32 %v931
    %935 = vset.pattern.permute.xlu0 0
    %936 = vperm.xlu0 %935, %v888
    %v937 = vpop.permute.xlu0 %936
    %938 = vset.pattern.permute.xlu0 0
    %939 = vperm.xlu0 %938, %v889
    %v940 = vpop.permute.xlu0 %939
    %v941 = vlaneseq
    %v942 = vshrl.u32 %v941, 7
    %v943 = vsub.s32 %v176, %v942
    %v944 = vrot.slane %v937, %v943
    %v945 = vlaneseq
    %v946 = vshrl.u32 %v945, 7
    %v947 = vsub.s32 %v176, %v946
    %v948 = vrot.slane %v940, %v947
    %v949 = vsel %vm545, %v948, %v944
    %v951 = vsel %vm548, %v949, -inf
    %952 = vmax.xlane.f32.xlu0 %v951
    %v953 = vpop.xlane.xlu0 %952
    %v955 = vlaneseq
    %v956 = vshrl.u32 %v955, 7
    %v957 = vsub.s32 0, %v956
    %v958 = vrot.slane %v953, %v957
    %v959 = vlaneseq
    %v960 = vshrl.u32 %v959, 7
    %v961 = vsub.s32 1, %v960
    %v962 = vrot.slane %v953, %v961
    %v965 = vsub.f32 %v888, %v958
    %v966 = vsub.f32 %v889, %v962
    %v967 = vmul.f32 %v965, 1.442695
    %v968 = vpow.pop %v967
    %v969 = vmul.f32 %v966, 1.442695
    %v970 = vpow.pop %v969
    %973 = vset.pattern.permute.xlu0 0
    %974 = vperm.xlu0 %973, %v968
    %v975 = vpop.permute.xlu0 %974
    %976 = vset.pattern.permute.xlu0 0
    %977 = vperm.xlu0 %976, %v970
    %v978 = vpop.permute.xlu0 %977
    %v979 = vlaneseq
    %v980 = vshrl.u32 %v979, 7
    %v981 = vsub.s32 %v176, %v980
    %v982 = vrot.slane %v975, %v981
    %v983 = vlaneseq
    %v984 = vshrl.u32 %v983, 7
    %v985 = vsub.s32 %v176, %v984
    %v986 = vrot.slane %v978, %v985
    %v987 = vsel %vm545, %v986, %v982
    %v989 = vsel %vm548, %v987, 0.0
    %990 = vadd.xlane.f32.xlu0 %v989
    %v991 = vpop.xlane.xlu0 %990
    %v993 = vlaneseq
    %v994 = vshrl.u32 %v993, 7
    %v995 = vsub.s32 0, %v994
    %v996 = vrot.slane %v991, %v995
    %v997 = vlaneseq
    %v998 = vshrl.u32 %v997, 7
    %v999 = vsub.s32 1, %v998
    %v1000 = vrot.slane %v991, %v999
    %v1003 = vrcp.pop %v996
    %v1004 = vmul.f32 %v968, %v1003
    %v1005 = vrcp.pop %v1000
    %v1006 = vmul.f32 %v970, %v1005
    %v1007 = vmin.f32 %v1004, %v633
    %v1008 = vmin.f32 %v1006, %v634
    %v1009 = vadd.f32 %v631, %v1007
    %v1010 = vadd.f32 %v632, %v1008
    %v1011 = vadd.f32 %v633, %v1004
    %v1012 = vadd.f32 %v634, %v1006
    %v1013 = vlaneseq
    %v1014 = vshrl.u32 %v1013, 7
    %v1015 = vsub.s32 0, %v1014
    %v1016 = vrot.slane %v932, %v1015
    %1018 = vbcast.lane.b32.xlu0 %v1016, 256
    %v1019 = vpop.permute.xlu0 %1018
    %v1020 = vlaneseq
    %v1021 = vshrl.u32 %v1020, 7
    %v1022 = vsub.s32 1, %v1021
    %v1023 = vrot.slane %v932, %v1022
    %1025 = vbcast.lane.b32.xlu0 %v1023, 256
    %v1026 = vpop.permute.xlu0 %1025
    %v1027 = vmul.f32 %v80, %v1019
    %v1028 = vmul.f32 %v81, %v1026
    %v1029 = vsel %vm130, %v1027, 0.0
    %v1030 = vrot.slane %v1029, 4
    %v1031 = vadd.f32 %v1029, %v1030
    %v1032 = vrot.slane %v1031, 2
    %v1033 = vadd.f32 %v1031, %v1032
    %v1034 = vrot.slane %v1033, 1
    %v1035 = vadd.f32 %v1033, %v1034
    %v1036 = vsel %vm130, %v1028, 0.0
    %v1037 = vrot.slane %v1036, 4
    %v1038 = vadd.f32 %v1036, %v1037
    %v1039 = vrot.slane %v1038, 2
    %v1040 = vadd.f32 %v1038, %v1039
    %v1041 = vrot.slane %v1040, 1
    %v1042 = vadd.f32 %v1040, %v1041
    %v1043 = vpack.c.bf16 %v1035, %v1035
    %v1044 = vpack.c.bf16 %v1042, %v1042
    %v1047 = vunpack.c.l.b16 %v1043
    %v1048 = vunpack.c.l.b16 %v1044
    %v1049 = vsel %vm545, %v1048, %v1047
    %v1050 = vpack.c.b16 %v1049, %v1049
    %v1052 = vsel %vm130, %v1050, 0
    %1054 = vmatprep.subr.bf16.mxu0 0
    %1055 = vmatpush1.bf16.msra.mxu0 %v254
    %1056 = vmatprep.subr.bf16.mxu0 0
    %1057 = vmatpush1.bf16.msra.mxu0 %v255
    %1058 = vmatprep.subr.bf16.mxu0 0
    %1059 = vmatpush1.bf16.msra.mxu0 0
    %1060 = vmatprep.subr.bf16.mxu0 0
    %1061 = vmatpush1.bf16.msra.mxu0 0
    %1062 = vmatprep.subr.bf16.mxu0 0
    %1063 = vmatpush1.bf16.msra.mxu0 0
    %1064 = vmatprep.subr.bf16.mxu0 0
    %1065 = vmatpush1.bf16.msra.mxu0 0
    %1066 = vmatprep.subr.bf16.mxu0 0
    %1067 = vmatpush1.bf16.msra.mxu0 0
    %1068 = vmatprep.subr.bf16.mxu0 0
    %1069 = vmatpush1.bf16.msra.mxu0 0
    %1070 = vmatprep.subr.bf16.mxu0 0
    %1071 = vmatpush1.bf16.msra.mxu0 0
    %1072 = vmatprep.subr.bf16.mxu0 0
    %1073 = vmatpush1.bf16.msra.mxu0 0
    %1074 = vmatprep.subr.bf16.mxu0 0
    %1075 = vmatpush1.bf16.msra.mxu0 0
    %1076 = vmatprep.subr.bf16.mxu0 0
    %1077 = vmatpush1.bf16.msra.mxu0 0
    %1078 = vmatprep.subr.bf16.mxu0 0
    %1079 = vmatpush1.bf16.msra.mxu0 0
    %1080 = vmatprep.subr.bf16.mxu0 0
    %1081 = vmatpush1.bf16.msra.mxu0 0
    %1082 = vmatprep.subr.bf16.mxu0 0
    %1083 = vmatpush1.bf16.msra.mxu0 0
    %1084 = vmatprep.subr.bf16.mxu0 0
    %1085 = vmatpush1.bf16.msra.mxu0 0
    %1086 = vmatprep.mubr.bf16.mxu0 0
    %1087 = vmatmul.mubr.bf16.gmra.mrb[0].mxu0 %v1052
    %v1088 = vpop.f32.mrb[0].mxu0
    %v1089 = vadd.f32 %v244, %v1088
    %v1090 = vpop.f32.mrb[0].mxu0
    %v1091 = vpop.f32.mrb[0].mxu0
    %v1092 = vpop.f32.mrb[0].mxu0
    %1093 = vdwg.mxu0
    %v1094 = vadd.f32 %v1089, %v784
    %v1095 = vxor.u32 %v1094, 2147483648
    %v1096 = vmul.f32 %v1095, 1.442695
    %v1097 = vpow.pop %v1096
    %v1098 = vadd.f32 %v1097, 1.0
    %v1099 = vrcp.pop %v1098
    %v1100 = vmul.f32 1.0, %v1099
    %1102 = vrot.lane.b32.xlu0 %v784, 64
    %v1103 = vpop.permute.xlu0 %1102
    %v1105 = vmul.f32 %v1100, %v1103
    %1107 = vrot.lane.b32.xlu0 %v1105, 64
    %v1108 = vpop.permute.xlu0 %1107
    %v1110 = vadd.f32 %v1089, %v1108
    %v1111 = vtanh.pop %v1110
    %v1112 = vsub.f32 1.0, %v1100
    %1114 = vrot.lane.b32.xlu0 %v1111, 96
    %v1115 = vpop.permute.xlu0 %1114
    %v1117 = vmul.f32 %v1112, %v1115
    %v1118 = vmul.f32 %v1100, %v741
    %v1119 = vadd.f32 %v1117, %v1118
    %v1120 = vpack.c.bf16 %v1119, %v1119
    %1122 = vrot.lane.b32.xlu0 %v1120, 96
    %v1123 = vpop.permute.xlu0 %1122
    %v1125 = vsel %vm130, %v1123, 0
    %1127 = vmatprep.subr.bf16.mxu0 0
    %1128 = vmatpush1.bf16.msra.mxu0 %v193
    %1129 = vmatprep.subr.bf16.mxu0 0
    %1130 = vmatpush1.bf16.msra.mxu0 %v194
    %1131 = vmatprep.subr.bf16.mxu0 0
    %1132 = vmatpush1.bf16.msra.mxu0 0
    %1133 = vmatprep.subr.bf16.mxu0 0
    %1134 = vmatpush1.bf16.msra.mxu0 0
    %1135 = vmatprep.subr.bf16.mxu0 0
    %1136 = vmatpush1.bf16.msra.mxu0 0
    %1137 = vmatprep.subr.bf16.mxu0 0
    %1138 = vmatpush1.bf16.msra.mxu0 0
    %1139 = vmatprep.subr.bf16.mxu0 0
    %1140 = vmatpush1.bf16.msra.mxu0 0
    %1141 = vmatprep.subr.bf16.mxu0 0
    %1142 = vmatpush1.bf16.msra.mxu0 0
    %1143 = vmatprep.subr.bf16.mxu0 0
    %1144 = vmatpush1.bf16.msra.mxu0 0
    %1145 = vmatprep.subr.bf16.mxu0 0
    %1146 = vmatpush1.bf16.msra.mxu0 0
    %1147 = vmatprep.subr.bf16.mxu0 0
    %1148 = vmatpush1.bf16.msra.mxu0 0
    %1149 = vmatprep.subr.bf16.mxu0 0
    %1150 = vmatpush1.bf16.msra.mxu0 0
    %1151 = vmatprep.subr.bf16.mxu0 0
    %1152 = vmatpush1.bf16.msra.mxu0 0
    %1153 = vmatprep.subr.bf16.mxu0 0
    %1154 = vmatpush1.bf16.msra.mxu0 0
    %1155 = vmatprep.subr.bf16.mxu0 0
    %1156 = vmatpush1.bf16.msra.mxu0 0
    %1157 = vmatprep.subr.bf16.mxu0 0
    %1158 = vmatpush1.bf16.msra.mxu0 0
    %1159 = vmatprep.mubr.bf16.mxu0 0
    %1160 = vmatmul.mubr.bf16.gmra.mrb[0].mxu0 %v1125
    %v1161 = vpop.f32.mrb[0].mxu0
    %v1162 = vadd.f32 %v183, %v1161
    %v1163 = vpop.f32.mrb[0].mxu0
    %v1164 = vpop.f32.mrb[0].mxu0
    %v1165 = vpop.f32.mrb[0].mxu0
    %1166 = vdwg.mxu0
    %1167 = vmatprep.subr.bf16.mxu0 0
    %1168 = vmatpush1.bf16.msra.mxu0 %v386
    %1169 = vmatprep.subr.bf16.mxu0 0
    %1170 = vmatpush1.bf16.msra.mxu0 %v387
    %1171 = vmatprep.subr.bf16.mxu0 0
    %1172 = vmatpush1.bf16.msra.mxu0 0
    %1173 = vmatprep.subr.bf16.mxu0 0
    %1174 = vmatpush1.bf16.msra.mxu0 0
    %1175 = vmatprep.subr.bf16.mxu0 0
    %1176 = vmatpush1.bf16.msra.mxu0 0
    %1177 = vmatprep.subr.bf16.mxu0 0
    %1178 = vmatpush1.bf16.msra.mxu0 0
    %1179 = vmatprep.subr.bf16.mxu0 0
    %1180 = vmatpush1.bf16.msra.mxu0 0
    %1181 = vmatprep.subr.bf16.mxu0 0
    %1182 = vmatpush1.bf16.msra.mxu0 0
    %1183 = vmatprep.subr.bf16.mxu0 0
    %1184 = vmatpush1.bf16.msra.mxu0 0
    %1185 = vmatprep.subr.bf16.mxu0 0
    %1186 = vmatpush1.bf16.msra.mxu0 0
    %1187 = vmatprep.subr.bf16.mxu0 0
    %1188 = vmatpush1.bf16.msra.mxu0 0
    %1189 = vmatprep.subr.bf16.mxu0 0
    %1190 = vmatpush1.bf16.msra.mxu0 0
    %1191 = vmatprep.subr.bf16.mxu0 0
    %1192 = vmatpush1.bf16.msra.mxu0 0
    %1193 = vmatprep.subr.bf16.mxu0 0
    %1194 = vmatpush1.bf16.msra.mxu0 0
    %1195 = vmatprep.subr.bf16.mxu0 0
    %1196 = vmatpush1.bf16.msra.mxu0 0
    %1197 = vmatprep.subr.bf16.mxu0 0
    %1198 = vmatpush1.bf16.msra.mxu0 0
    %1199 = vmatprep.mubr.bf16.mxu0 0
    %1200 = vmatmul.mubr.bf16.gmra.mrb[0].mxu0 %v1125
    %v1201 = vpop.f32.mrb[0].mxu0
    %v1202 = vadd.f32 0.0, %v1201
    %v1203 = vpop.f32.mrb[0].mxu0
    %v1204 = vpop.f32.mrb[0].mxu0
    %v1205 = vpop.f32.mrb[0].mxu0
    %1206 = vdwg.mxu0
    %v1209 = vunpack.c.l.s4 1966171168
    %v1210 = vunpack.c.0.s8 %v1209
    %v1211 = vlaneseq
    %v1212 = vshrl.u32 %v1211, 7
    %v1213 = vsub.s32 %v1210, %v1212
    %v1214 = vrot.slane %v1202, %v1213
    %v1215 = vcombine.high %v1214, %v1214
    %v1217 = vunpack.c.l.s4 1966171168
    %v1218 = vunpack.c.0.s8 %v1217
    %v1219 = vlaneseq
    %v1220 = vshrl.u32 %v1219, 7
    %v1221 = vsub.s32 %v1218, %v1220
    %v1222 = vrot.slane %v1214, %v1221
    %v1224 = vunpack.c.l.s4 1966171168
    %v1225 = vunpack.c.0.s8 %v1224
    %v1226 = vlaneseq
    %v1227 = vshrl.u32 %v1226, 7
    %v1228 = vsub.s32 %v1225, %v1227
    %v1229 = vrot.slane %v1215, %v1228
    %v1230 = vlaneseq
    %v1231 = vshrl.u32 %v1230, 7
    %v1232 = vsub.s32 0, %v1231
    %v1233 = vrot.slane %v1222, %v1232
    %v1234 = vlaneseq
    %v1235 = vshrl.u32 %v1234, 7
    %v1236 = vsub.s32 0, %v1235
    %v1237 = vrot.slane %v1229, %v1236
    %v1240 = vadd.f32 %v169, %v1233
    %v1241 = vadd.f32 %v172, %v1237
    %1243 = vset.pattern.permute.xlu0 0
    %1244 = vperm.xlu0 %1243, %v1011
    %v1245 = vpop.permute.xlu0 %1244
    %1248 = vset.pattern.permute.xlu0 0
    %1249 = vperm.xlu0 %1248, %v1012
    %v1250 = vpop.permute.xlu0 %1249
    %v1252 = vmul.f32 %v1245, %v469
    %v1253 = vmul.f32 %v1250, %v469
    %v1254 = vadd.f32 %v1240, %v1252
    %v1255 = vadd.f32 %v1241, %v1253
    %v1256 = vtanh.pop %v1254
    %v1257 = vtanh.pop %v1255
    %v1258 = vmul.f32 %v1256, %v480
    %v1259 = vmul.f32 %v1257, %v480
    %v1260 = vsel %vm484, %v1258, 0.0
    %1261 = vadd.xlane.f32.xlu0 %v1260
    %v1262 = vpop.xlane.xlu0 %1261
    %v1263 = vsel %vm484, %v1259, 0.0
    %1264 = vadd.xlane.f32.xlu0 %v1263
    %v1265 = vpop.xlane.xlu0 %1264
    %v1266 = vadd.f32 %v1262, %v498
    %v1267 = vadd.f32 %v1265, %v505
    %v1269 = vlaneseq
    %v1270 = vshrl.u32 %v1269, 7
    %v1271 = vsub.s32 0, %v1270
    %v1272 = vrot.slane %v85, %v1271
    %1274 = vbcast.lane.b32.xlu0 %v1272, 256
    %v1275 = vpop.permute.xlu0 %1274
    %v1276 = vlaneseq
    %v1277 = vshrl.u32 %v1276, 7
    %v1278 = vsub.s32 1, %v1277
    %v1279 = vrot.slane %v85, %v1278
    %1281 = vbcast.lane.b32.xlu0 %v1279, 256
    %v1282 = vpop.permute.xlu0 %1281
    %v1285 = vadd.f32 %v1266, %v1275
    %v1286 = vadd.f32 %v1267, %v1282
    %1289 = vset.pattern.permute.xlu0 0
    %1290 = vperm.xlu0 %1289, %v1285
    %v1291 = vpop.permute.xlu0 %1290
    %1292 = vset.pattern.permute.xlu0 0
    %1293 = vperm.xlu0 %1292, %v1286
    %v1294 = vpop.permute.xlu0 %1293
    %v1295 = vlaneseq
    %v1296 = vshrl.u32 %v1295, 7
    %v1297 = vsub.s32 %v176, %v1296
    %v1298 = vrot.slane %v1291, %v1297
    %v1299 = vlaneseq
    %v1300 = vshrl.u32 %v1299, 7
    %v1301 = vsub.s32 %v176, %v1300
    %v1302 = vrot.slane %v1294, %v1301
    %v1303 = vsel %vm545, %v1302, %v1298
    %v1305 = vsel %vm548, %v1303, -inf
    %1306 = vmax.index.xlane.f32.xlu0 %v1305
    %v1307 = vpop.xlane.xlu0 %1306
    %vm1308 = vcmp.eq.s32.totalorder %v176, %v1307
    %v1309 = vsel %vm1308, 1, 0
    %v1310 = vcvt.s32.f32 %v1309
    %1313 = vset.pattern.permute.xlu0 0
    %1314 = vperm.xlu0 %1313, %v1266
    %v1315 = vpop.permute.xlu0 %1314
    %1316 = vset.pattern.permute.xlu0 0
    %1317 = vperm.xlu0 %1316, %v1267
    %v1318 = vpop.permute.xlu0 %1317
    %v1319 = vlaneseq
    %v1320 = vshrl.u32 %v1319, 7
    %v1321 = vsub.s32 %v176, %v1320
    %v1322 = vrot.slane %v1315, %v1321
    %v1323 = vlaneseq
    %v1324 = vshrl.u32 %v1323, 7
    %v1325 = vsub.s32 %v176, %v1324
    %v1326 = vrot.slane %v1318, %v1325
    %v1327 = vsel %vm545, %v1326, %v1322
    %v1329 = vsel %vm548, %v1327, -inf
    %1330 = vmax.xlane.f32.xlu0 %v1329
    %v1331 = vpop.xlane.xlu0 %1330
    %v1333 = vlaneseq
    %v1334 = vshrl.u32 %v1333, 7
    %v1335 = vsub.s32 0, %v1334
    %v1336 = vrot.slane %v1331, %v1335
    %v1337 = vlaneseq
    %v1338 = vshrl.u32 %v1337, 7
    %v1339 = vsub.s32 1, %v1338
    %v1340 = vrot.slane %v1331, %v1339
    %v1343 = vsub.f32 %v1266, %v1336
    %v1344 = vsub.f32 %v1267, %v1340
    %v1345 = vmul.f32 %v1343, 1.442695
    %v1346 = vpow.pop %v1345
    %v1347 = vmul.f32 %v1344, 1.442695
    %v1348 = vpow.pop %v1347
    %1351 = vset.pattern.permute.xlu0 0
    %1352 = vperm.xlu0 %1351, %v1346
    %v1353 = vpop.permute.xlu0 %1352
    %1354 = vset.pattern.permute.xlu0 0
    %1355 = vperm.xlu0 %1354, %v1348
    %v1356 = vpop.permute.xlu0 %1355
    %v1357 = vlaneseq
    %v1358 = vshrl.u32 %v1357, 7
    %v1359 = vsub.s32 %v176, %v1358
    %v1360 = vrot.slane %v1353, %v1359
    %v1361 = vlaneseq
    %v1362 = vshrl.u32 %v1361, 7
    %v1363 = vsub.s32 %v176, %v1362
    %v1364 = vrot.slane %v1356, %v1363
    %v1365 = vsel %vm545, %v1364, %v1360
    %v1367 = vsel %vm548, %v1365, 0.0
    %1368 = vadd.xlane.f32.xlu0 %v1367
    %v1369 = vpop.xlane.xlu0 %1368
    %v1371 = vlaneseq
    %v1372 = vshrl.u32 %v1371, 7
    %v1373 = vsub.s32 0, %v1372
    %v1374 = vrot.slane %v1369, %v1373
    %v1375 = vlaneseq
    %v1376 = vshrl.u32 %v1375, 7
    %v1377 = vsub.s32 1, %v1376
    %v1378 = vrot.slane %v1369, %v1377
    %v1381 = vrcp.pop %v1374
    %v1382 = vmul.f32 %v1346, %v1381
    %v1383 = vrcp.pop %v1378
    %v1384 = vmul.f32 %v1348, %v1383
    %v1385 = vmin.f32 %v1382, %v1011
    %v1386 = vmin.f32 %v1384, %v1012
    %v1387 = vadd.f32 %v1009, %v1385
    %v1388 = vadd.f32 %v1010, %v1386
    %v1389 = vadd.f32 %v1011, %v1382
    %v1390 = vadd.f32 %v1012, %v1384
    %v1391 = vlaneseq
    %v1392 = vshrl.u32 %v1391, 7
    %v1393 = vsub.s32 0, %v1392
    %v1394 = vrot.slane %v1310, %v1393
    %1396 = vbcast.lane.b32.xlu0 %v1394, 256
    %v1397 = vpop.permute.xlu0 %1396
    %v1398 = vlaneseq
    %v1399 = vshrl.u32 %v1398, 7
    %v1400 = vsub.s32 1, %v1399
    %v1401 = vrot.slane %v1310, %v1400
    %1403 = vbcast.lane.b32.xlu0 %v1401, 256
    %v1404 = vpop.permute.xlu0 %1403
    %v1405 = vmul.f32 %v80, %v1397
    %v1406 = vmul.f32 %v81, %v1404
    %v1407 = vsel %vm130, %v1405, 0.0
    %v1408 = vrot.slane %v1407, 4
    %v1409 = vadd.f32 %v1407, %v1408
    %v1410 = vrot.slane %v1409, 2
    %v1411 = vadd.f32 %v1409, %v1410
    %v1412 = vrot.slane %v1411, 1
    %v1413 = vadd.f32 %v1411, %v1412
    %v1414 = vsel %vm130, %v1406, 0.0
    %v1415 = vrot.slane %v1414, 4
    %v1416 = vadd.f32 %v1414, %v1415
    %v1417 = vrot.slane %v1416, 2
    %v1418 = vadd.f32 %v1416, %v1417
    %v1419 = vrot.slane %v1418, 1
    %v1420 = vadd.f32 %v1418, %v1419
    %v1421 = vpack.c.bf16 %v1413, %v1413
    %v1422 = vpack.c.bf16 %v1420, %v1420
    %v1425 = vunpack.c.l.b16 %v1421
    %v1426 = vunpack.c.l.b16 %v1422
    %v1427 = vsel %vm545, %v1426, %v1425
    %v1428 = vpack.c.b16 %v1427, %v1427
    %v1430 = vsel %vm130, %v1428, 0
    %1432 = vmatprep.subr.bf16.mxu0 0
    %1433 = vmatpush1.bf16.msra.mxu0 %v254
    %1434 = vmatprep.subr.bf16.mxu0 0
    %1435 = vmatpush1.bf16.msra.mxu0 %v255
    %1436 = vmatprep.subr.bf16.mxu0 0
    %1437 = vmatpush1.bf16.msra.mxu0 0
    %1438 = vmatprep.subr.bf16.mxu0 0
    %1439 = vmatpush1.bf16.msra.mxu0 0
    %1440 = vmatprep.subr.bf16.mxu0 0
    %1441 = vmatpush1.bf16.msra.mxu0 0
    %1442 = vmatprep.subr.bf16.mxu0 0
    %1443 = vmatpush1.bf16.msra.mxu0 0
    %1444 = vmatprep.subr.bf16.mxu0 0
    %1445 = vmatpush1.bf16.msra.mxu0 0
    %1446 = vmatprep.subr.bf16.mxu0 0
    %1447 = vmatpush1.bf16.msra.mxu0 0
    %1448 = vmatprep.subr.bf16.mxu0 0
    %1449 = vmatpush1.bf16.msra.mxu0 0
    %1450 = vmatprep.subr.bf16.mxu0 0
    %1451 = vmatpush1.bf16.msra.mxu0 0
    %1452 = vmatprep.subr.bf16.mxu0 0
    %1453 = vmatpush1.bf16.msra.mxu0 0
    %1454 = vmatprep.subr.bf16.mxu0 0
    %1455 = vmatpush1.bf16.msra.mxu0 0
    %1456 = vmatprep.subr.bf16.mxu0 0
    %1457 = vmatpush1.bf16.msra.mxu0 0
    %1458 = vmatprep.subr.bf16.mxu0 0
    %1459 = vmatpush1.bf16.msra.mxu0 0
    %1460 = vmatprep.subr.bf16.mxu0 0
    %1461 = vmatpush1.bf16.msra.mxu0 0
    %1462 = vmatprep.subr.bf16.mxu0 0
    %1463 = vmatpush1.bf16.msra.mxu0 0
    %1464 = vmatprep.mubr.bf16.mxu0 0
    %1465 = vmatmul.mubr.bf16.gmra.mrb[0].mxu0 %v1430
    %v1466 = vpop.f32.mrb[0].mxu0
    %v1467 = vadd.f32 %v244, %v1466
    %v1468 = vpop.f32.mrb[0].mxu0
    %v1469 = vpop.f32.mrb[0].mxu0
    %v1470 = vpop.f32.mrb[0].mxu0
    %1471 = vdwg.mxu0
    %v1472 = vadd.f32 %v1467, %v1162
    %v1473 = vxor.u32 %v1472, 2147483648
    %v1474 = vmul.f32 %v1473, 1.442695
    %v1475 = vpow.pop %v1474
    %v1476 = vadd.f32 %v1475, 1.0
    %v1477 = vrcp.pop %v1476
    %v1478 = vmul.f32 1.0, %v1477
    %1480 = vrot.lane.b32.xlu0 %v1162, 64
    %v1481 = vpop.permute.xlu0 %1480
    %v1483 = vmul.f32 %v1478, %v1481
    %1485 = vrot.lane.b32.xlu0 %v1483, 64
    %v1486 = vpop.permute.xlu0 %1485
    %v1488 = vadd.f32 %v1467, %v1486
    %v1489 = vtanh.pop %v1488
    %v1490 = vsub.f32 1.0, %v1478
    %1492 = vrot.lane.b32.xlu0 %v1489, 96
    %v1493 = vpop.permute.xlu0 %1492
    %v1495 = vmul.f32 %v1490, %v1493
    %v1496 = vmul.f32 %v1478, %v1119
    %v1497 = vadd.f32 %v1495, %v1496
    %v1498 = vpack.c.bf16 %v1497, %v1497
    %1500 = vrot.lane.b32.xlu0 %v1498, 96
    %v1501 = vpop.permute.xlu0 %1500
    %v1503 = vsel %vm130, %v1501, 0
    %1505 = vmatprep.subr.bf16.mxu0 0
    %1506 = vmatpush1.bf16.msra.mxu0 %v193
    %1507 = vmatprep.subr.bf16.mxu0 0
    %1508 = vmatpush1.bf16.msra.mxu0 %v194
    %1509 = vmatprep.subr.bf16.mxu0 0
    %1510 = vmatpush1.bf16.msra.mxu0 0
    %1511 = vmatprep.subr.bf16.mxu0 0
    %1512 = vmatpush1.bf16.msra.mxu0 0
    %1513 = vmatprep.subr.bf16.mxu0 0
    %1514 = vmatpush1.bf16.msra.mxu0 0
    %1515 = vmatprep.subr.bf16.mxu0 0
    %1516 = vmatpush1.bf16.msra.mxu0 0
    %1517 = vmatprep.subr.bf16.mxu0 0
    %1518 = vmatpush1.bf16.msra.mxu0 0
    %1519 = vmatprep.subr.bf16.mxu0 0
    %1520 = vmatpush1.bf16.msra.mxu0 0
    %1521 = vmatprep.subr.bf16.mxu0 0
    %1522 = vmatpush1.bf16.msra.mxu0 0
    %1523 = vmatprep.subr.bf16.mxu0 0
    %1524 = vmatpush1.bf16.msra.mxu0 0
    %1525 = vmatprep.subr.bf16.mxu0 0
    %1526 = vmatpush1.bf16.msra.mxu0 0
    %1527 = vmatprep.subr.bf16.mxu0 0
    %1528 = vmatpush1.bf16.msra.mxu0 0
    %1529 = vmatprep.subr.bf16.mxu0 0
    %1530 = vmatpush1.bf16.msra.mxu0 0
    %1531 = vmatprep.subr.bf16.mxu0 0
    %1532 = vmatpush1.bf16.msra.mxu0 0
    %1533 = vmatprep.subr.bf16.mxu0 0
    %1534 = vmatpush1.bf16.msra.mxu0 0
    %1535 = vmatprep.subr.bf16.mxu0 0
    %1536 = vmatpush1.bf16.msra.mxu0 0
    %1537 = vmatprep.mubr.bf16.mxu0 0
    %1538 = vmatmul.mubr.bf16.gmra.mrb[0].mxu0 %v1503
    %v1539 = vpop.f32.mrb[0].mxu0
    %v1540 = vadd.f32 %v183, %v1539
    %v1541 = vpop.f32.mrb[0].mxu0
    %v1542 = vpop.f32.mrb[0].mxu0
    %v1543 = vpop.f32.mrb[0].mxu0
    %1544 = vdwg.mxu0
    %1545 = vmatprep.subr.bf16.mxu0 0
    %1546 = vmatpush1.bf16.msra.mxu0 %v386
    %1547 = vmatprep.subr.bf16.mxu0 0
    %1548 = vmatpush1.bf16.msra.mxu0 %v387
    %1549 = vmatprep.subr.bf16.mxu0 0
    %1550 = vmatpush1.bf16.msra.mxu0 0
    %1551 = vmatprep.subr.bf16.mxu0 0
    %1552 = vmatpush1.bf16.msra.mxu0 0
    %1553 = vmatprep.subr.bf16.mxu0 0
    %1554 = vmatpush1.bf16.msra.mxu0 0
    %1555 = vmatprep.subr.bf16.mxu0 0
    %1556 = vmatpush1.bf16.msra.mxu0 0
    %1557 = vmatprep.subr.bf16.mxu0 0
    %1558 = vmatpush1.bf16.msra.mxu0 0
    %1559 = vmatprep.subr.bf16.mxu0 0
    %1560 = vmatpush1.bf16.msra.mxu0 0
    %1561 = vmatprep.subr.bf16.mxu0 0
    %1562 = vmatpush1.bf16.msra.mxu0 0
    %1563 = vmatprep.subr.bf16.mxu0 0
    %1564 = vmatpush1.bf16.msra.mxu0 0
    %1565 = vmatprep.subr.bf16.mxu0 0
    %1566 = vmatpush1.bf16.msra.mxu0 0
    %1567 = vmatprep.subr.bf16.mxu0 0
    %1568 = vmatpush1.bf16.msra.mxu0 0
    %1569 = vmatprep.subr.bf16.mxu0 0
    %1570 = vmatpush1.bf16.msra.mxu0 0
    %1571 = vmatprep.subr.bf16.mxu0 0
    %1572 = vmatpush1.bf16.msra.mxu0 0
    %1573 = vmatprep.subr.bf16.mxu0 0
    %1574 = vmatpush1.bf16.msra.mxu0 0
    %1575 = vmatprep.subr.bf16.mxu0 0
    %1576 = vmatpush1.bf16.msra.mxu0 0
    %1577 = vmatprep.mubr.bf16.mxu0 0
    %1578 = vmatmul.mubr.bf16.gmra.mrb[0].mxu0 %v1503
    %v1579 = vpop.f32.mrb[0].mxu0
    %v1580 = vadd.f32 0.0, %v1579
    %v1581 = vpop.f32.mrb[0].mxu0
    %v1582 = vpop.f32.mrb[0].mxu0
    %v1583 = vpop.f32.mrb[0].mxu0
    %1584 = vdwg.mxu0
    %v1587 = vunpack.c.l.s4 1966171168
    %v1588 = vunpack.c.0.s8 %v1587
    %v1589 = vlaneseq
    %v1590 = vshrl.u32 %v1589, 7
    %v1591 = vsub.s32 %v1588, %v1590
    %v1592 = vrot.slane %v1580, %v1591
    %v1593 = vcombine.high %v1592, %v1592
    %v1595 = vunpack.c.l.s4 1966171168
    %v1596 = vunpack.c.0.s8 %v1595
    %v1597 = vlaneseq
    %v1598 = vshrl.u32 %v1597, 7
    %v1599 = vsub.s32 %v1596, %v1598
    %v1600 = vrot.slane %v1592, %v1599
    %v1602 = vunpack.c.l.s4 1966171168
    %v1603 = vunpack.c.0.s8 %v1602
    %v1604 = vlaneseq
    %v1605 = vshrl.u32 %v1604, 7
    %v1606 = vsub.s32 %v1603, %v1605
    %v1607 = vrot.slane %v1593, %v1606
    %v1608 = vlaneseq
    %v1609 = vshrl.u32 %v1608, 7
    %v1610 = vsub.s32 0, %v1609
    %v1611 = vrot.slane %v1600, %v1610
    %v1612 = vlaneseq
    %v1613 = vshrl.u32 %v1612, 7
    %v1614 = vsub.s32 0, %v1613
    %v1615 = vrot.slane %v1607, %v1614
    %v1618 = vadd.f32 %v169, %v1611
    %v1619 = vadd.f32 %v172, %v1615
    %1621 = vset.pattern.permute.xlu0 0
    %1622 = vperm.xlu0 %1621, %v1389
    %v1623 = vpop.permute.xlu0 %1622
    %1626 = vset.pattern.permute.xlu0 0
    %1627 = vperm.xlu0 %1626, %v1390
    %v1628 = vpop.permute.xlu0 %1627
    %v1630 = vmul.f32 %v1623, %v469
    %v1631 = vmul.f32 %v1628, %v469
    %v1632 = vadd.f32 %v1618, %v1630
    %v1633 = vadd.f32 %v1619, %v1631
    %v1634 = vtanh.pop %v1632
    %v1635 = vtanh.pop %v1633
    %v1636 = vmul.f32 %v1634, %v480
    %v1637 = vmul.f32 %v1635, %v480
    %v1638 = vsel %vm484, %v1636, 0.0
    %1639 = vadd.xlane.f32.xlu0 %v1638
    %v1640 = vpop.xlane.xlu0 %1639
    %v1641 = vsel %vm484, %v1637, 0.0
    %1642 = vadd.xlane.f32.xlu0 %v1641
    %v1643 = vpop.xlane.xlu0 %1642
    %v1644 = vadd.f32 %v1640, %v498
    %v1645 = vadd.f32 %v1643, %v505
    %v1647 = vlaneseq
    %v1648 = vshrl.u32 %v1647, 7
    %v1649 = vsub.s32 0, %v1648
    %v1650 = vrot.slane %v86, %v1649
    %1652 = vbcast.lane.b32.xlu0 %v1650, 256
    %v1653 = vpop.permute.xlu0 %1652
    %v1654 = vlaneseq
    %v1655 = vshrl.u32 %v1654, 7
    %v1656 = vsub.s32 1, %v1655
    %v1657 = vrot.slane %v86, %v1656
    %1659 = vbcast.lane.b32.xlu0 %v1657, 256
    %v1660 = vpop.permute.xlu0 %1659
    %v1663 = vadd.f32 %v1644, %v1653
    %v1664 = vadd.f32 %v1645, %v1660
    %1667 = vset.pattern.permute.xlu0 0
    %1668 = vperm.xlu0 %1667, %v1663
    %v1669 = vpop.permute.xlu0 %1668
    %1670 = vset.pattern.permute.xlu0 0
    %1671 = vperm.xlu0 %1670, %v1664
    %v1672 = vpop.permute.xlu0 %1671
    %v1673 = vlaneseq
    %v1674 = vshrl.u32 %v1673, 7
    %v1675 = vsub.s32 %v176, %v1674
    %v1676 = vrot.slane %v1669, %v1675
    %v1677 = vlaneseq
    %v1678 = vshrl.u32 %v1677, 7
    %v1679 = vsub.s32 %v176, %v1678
    %v1680 = vrot.slane %v1672, %v1679
    %v1681 = vsel %vm545, %v1680, %v1676
    %v1683 = vsel %vm548, %v1681, -inf
    %1684 = vmax.index.xlane.f32.xlu0 %v1683
    %v1685 = vpop.xlane.xlu0 %1684
    %vm1686 = vcmp.eq.s32.totalorder %v176, %v1685
    %v1687 = vsel %vm1686, 1, 0
    %v1688 = vcvt.s32.f32 %v1687
    %1691 = vset.pattern.permute.xlu0 0
    %1692 = vperm.xlu0 %1691, %v1644
    %v1693 = vpop.permute.xlu0 %1692
    %1694 = vset.pattern.permute.xlu0 0
    %1695 = vperm.xlu0 %1694, %v1645
    %v1696 = vpop.permute.xlu0 %1695
    %v1697 = vlaneseq
    %v1698 = vshrl.u32 %v1697, 7
    %v1699 = vsub.s32 %v176, %v1698
    %v1700 = vrot.slane %v1693, %v1699
    %v1701 = vlaneseq
    %v1702 = vshrl.u32 %v1701, 7
    %v1703 = vsub.s32 %v176, %v1702
    %v1704 = vrot.slane %v1696, %v1703
    %v1705 = vsel %vm545, %v1704, %v1700
    %v1707 = vsel %vm548, %v1705, -inf
    %1708 = vmax.xlane.f32.xlu0 %v1707
    %v1709 = vpop.xlane.xlu0 %1708
    %v1711 = vlaneseq
    %v1712 = vshrl.u32 %v1711, 7
    %v1713 = vsub.s32 0, %v1712
    %v1714 = vrot.slane %v1709, %v1713
    %v1715 = vlaneseq
    %v1716 = vshrl.u32 %v1715, 7
    %v1717 = vsub.s32 1, %v1716
    %v1718 = vrot.slane %v1709, %v1717
    %v1721 = vsub.f32 %v1644, %v1714
    %v1722 = vsub.f32 %v1645, %v1718
    %v1723 = vmul.f32 %v1721, 1.442695
    %v1724 = vpow.pop %v1723
    %v1725 = vmul.f32 %v1722, 1.442695
    %v1726 = vpow.pop %v1725
    %1729 = vset.pattern.permute.xlu0 0
    %1730 = vperm.xlu0 %1729, %v1724
    %v1731 = vpop.permute.xlu0 %1730
    %1732 = vset.pattern.permute.xlu0 0
    %1733 = vperm.xlu0 %1732, %v1726
    %v1734 = vpop.permute.xlu0 %1733
    %v1735 = vlaneseq
    %v1736 = vshrl.u32 %v1735, 7
    %v1737 = vsub.s32 %v176, %v1736
    %v1738 = vrot.slane %v1731, %v1737
    %v1739 = vlaneseq
    %v1740 = vshrl.u32 %v1739, 7
    %v1741 = vsub.s32 %v176, %v1740
    %v1742 = vrot.slane %v1734, %v1741
    %v1743 = vsel %vm545, %v1742, %v1738
    %v1745 = vsel %vm548, %v1743, 0.0
    %1746 = vadd.xlane.f32.xlu0 %v1745
    %v1747 = vpop.xlane.xlu0 %1746
    %v1749 = vlaneseq
    %v1750 = vshrl.u32 %v1749, 7
    %v1751 = vsub.s32 0, %v1750
    %v1752 = vrot.slane %v1747, %v1751
    %v1753 = vlaneseq
    %v1754 = vshrl.u32 %v1753, 7
    %v1755 = vsub.s32 1, %v1754
    %v1756 = vrot.slane %v1747, %v1755
    %v1759 = vrcp.pop %v1752
    %v1760 = vmul.f32 %v1724, %v1759
    %v1761 = vrcp.pop %v1756
    %v1762 = vmul.f32 %v1726, %v1761
    %v1763 = vmin.f32 %v1760, %v1389
    %v1764 = vmin.f32 %v1762, %v1390
    %v1765 = vadd.f32 %v1387, %v1763
    %v1766 = vadd.f32 %v1388, %v1764
    %v1767 = vadd.f32 %v1389, %v1760
    %v1768 = vadd.f32 %v1390, %v1762
    %v1769 = vlaneseq
    %v1770 = vshrl.u32 %v1769, 7
    %v1771 = vsub.s32 0, %v1770
    %v1772 = vrot.slane %v1688, %v1771
    %1774 = vbcast.lane.b32.xlu0 %v1772, 256
    %v1775 = vpop.permute.xlu0 %1774
    %v1776 = vlaneseq
    %v1777 = vshrl.u32 %v1776, 7
    %v1778 = vsub.s32 1, %v1777
    %v1779 = vrot.slane %v1688, %v1778
    %1781 = vbcast.lane.b32.xlu0 %v1779, 256
    %v1782 = vpop.permute.xlu0 %1781
    %v1783 = vmul.f32 %v80, %v1775
    %v1784 = vmul.f32 %v81, %v1782
    %v1785 = vsel %vm130, %v1783, 0.0
    %v1786 = vrot.slane %v1785, 4
    %v1787 = vadd.f32 %v1785, %v1786
    %v1788 = vrot.slane %v1787, 2
    %v1789 = vadd.f32 %v1787, %v1788
    %v1790 = vrot.slane %v1789, 1
    %v1791 = vadd.f32 %v1789, %v1790
    %v1792 = vsel %vm130, %v1784, 0.0
    %v1793 = vrot.slane %v1792, 4
    %v1794 = vadd.f32 %v1792, %v1793
    %v1795 = vrot.slane %v1794, 2
    %v1796 = vadd.f32 %v1794, %v1795
    %v1797 = vrot.slane %v1796, 1
    %v1798 = vadd.f32 %v1796, %v1797
    %v1799 = vpack.c.bf16 %v1791, %v1791
    %v1800 = vpack.c.bf16 %v1798, %v1798
    %v1803 = vunpack.c.l.b16 %v1799
    %v1804 = vunpack.c.l.b16 %v1800
    %v1805 = vsel %vm545, %v1804, %v1803
    %v1806 = vpack.c.b16 %v1805, %v1805
    %v1808 = vsel %vm130, %v1806, 0
    %1810 = vmatprep.subr.bf16.mxu0 0
    %1811 = vmatpush1.bf16.msra.mxu0 %v254
    %1812 = vmatprep.subr.bf16.mxu0 0
    %1813 = vmatpush1.bf16.msra.mxu0 %v255
    %1814 = vmatprep.subr.bf16.mxu0 0
    %1815 = vmatpush1.bf16.msra.mxu0 0
    %1816 = vmatprep.subr.bf16.mxu0 0
    %1817 = vmatpush1.bf16.msra.mxu0 0
    %1818 = vmatprep.subr.bf16.mxu0 0
    %1819 = vmatpush1.bf16.msra.mxu0 0
    %1820 = vmatprep.subr.bf16.mxu0 0
    %1821 = vmatpush1.bf16.msra.mxu0 0
    %1822 = vmatprep.subr.bf16.mxu0 0
    %1823 = vmatpush1.bf16.msra.mxu0 0
    %1824 = vmatprep.subr.bf16.mxu0 0
    %1825 = vmatpush1.bf16.msra.mxu0 0
    %1826 = vmatprep.subr.bf16.mxu0 0
    %1827 = vmatpush1.bf16.msra.mxu0 0
    %1828 = vmatprep.subr.bf16.mxu0 0
    %1829 = vmatpush1.bf16.msra.mxu0 0
    %1830 = vmatprep.subr.bf16.mxu0 0
    %1831 = vmatpush1.bf16.msra.mxu0 0
    %1832 = vmatprep.subr.bf16.mxu0 0
    %1833 = vmatpush1.bf16.msra.mxu0 0
    %1834 = vmatprep.subr.bf16.mxu0 0
    %1835 = vmatpush1.bf16.msra.mxu0 0
    %1836 = vmatprep.subr.bf16.mxu0 0
    %1837 = vmatpush1.bf16.msra.mxu0 0
    %1838 = vmatprep.subr.bf16.mxu0 0
    %1839 = vmatpush1.bf16.msra.mxu0 0
    %1840 = vmatprep.subr.bf16.mxu0 0
    %1841 = vmatpush1.bf16.msra.mxu0 0
    %1842 = vmatprep.mubr.bf16.mxu0 0
    %1843 = vmatmul.mubr.bf16.gmra.mrb[0].mxu0 %v1808
    %v1844 = vpop.f32.mrb[0].mxu0
    %v1845 = vadd.f32 %v244, %v1844
    %v1846 = vpop.f32.mrb[0].mxu0
    %v1847 = vpop.f32.mrb[0].mxu0
    %v1848 = vpop.f32.mrb[0].mxu0
    %1849 = vdwg.mxu0
    %v1850 = vadd.f32 %v1845, %v1540
    %v1851 = vxor.u32 %v1850, 2147483648
    %v1852 = vmul.f32 %v1851, 1.442695
    %v1853 = vpow.pop %v1852
    %v1854 = vadd.f32 %v1853, 1.0
    %v1855 = vrcp.pop %v1854
    %v1856 = vmul.f32 1.0, %v1855
    %1858 = vrot.lane.b32.xlu0 %v1540, 64
    %v1859 = vpop.permute.xlu0 %1858
    %v1861 = vmul.f32 %v1856, %v1859
    %1863 = vrot.lane.b32.xlu0 %v1861, 64
    %v1864 = vpop.permute.xlu0 %1863
    %v1866 = vadd.f32 %v1845, %v1864
    %v1867 = vtanh.pop %v1866
    %v1868 = vsub.f32 1.0, %v1856
    %1870 = vrot.lane.b32.xlu0 %v1867, 96
    %v1871 = vpop.permute.xlu0 %1870
    %v1873 = vmul.f32 %v1868, %v1871
    %v1874 = vmul.f32 %v1856, %v1497
    %v1875 = vadd.f32 %v1873, %v1874
    %v1876 = vpack.c.bf16 %v1875, %v1875
    %1878 = vrot.lane.b32.xlu0 %v1876, 96
    %v1879 = vpop.permute.xlu0 %1878
    %v1881 = vsel %vm130, %v1879, 0
    %1883 = vmatprep.subr.bf16.mxu0 0
    %1884 = vmatpush1.bf16.msra.mxu0 %v193
    %1885 = vmatprep.subr.bf16.mxu0 0
    %1886 = vmatpush1.bf16.msra.mxu0 %v194
    %1887 = vmatprep.subr.bf16.mxu0 0
    %1888 = vmatpush1.bf16.msra.mxu0 0
    %1889 = vmatprep.subr.bf16.mxu0 0
    %1890 = vmatpush1.bf16.msra.mxu0 0
    %1891 = vmatprep.subr.bf16.mxu0 0
    %1892 = vmatpush1.bf16.msra.mxu0 0
    %1893 = vmatprep.subr.bf16.mxu0 0
    %1894 = vmatpush1.bf16.msra.mxu0 0
    %1895 = vmatprep.subr.bf16.mxu0 0
    %1896 = vmatpush1.bf16.msra.mxu0 0
    %1897 = vmatprep.subr.bf16.mxu0 0
    %1898 = vmatpush1.bf16.msra.mxu0 0
    %1899 = vmatprep.subr.bf16.mxu0 0
    %1900 = vmatpush1.bf16.msra.mxu0 0
    %1901 = vmatprep.subr.bf16.mxu0 0
    %1902 = vmatpush1.bf16.msra.mxu0 0
    %1903 = vmatprep.subr.bf16.mxu0 0
    %1904 = vmatpush1.bf16.msra.mxu0 0
    %1905 = vmatprep.subr.bf16.mxu0 0
    %1906 = vmatpush1.bf16.msra.mxu0 0
    %1907 = vmatprep.subr.bf16.mxu0 0
    %1908 = vmatpush1.bf16.msra.mxu0 0
    %1909 = vmatprep.subr.bf16.mxu0 0
    %1910 = vmatpush1.bf16.msra.mxu0 0
    %1911 = vmatprep.subr.bf16.mxu0 0
    %1912 = vmatpush1.bf16.msra.mxu0 0
    %1913 = vmatprep.subr.bf16.mxu0 0
    %1914 = vmatpush1.bf16.msra.mxu0 0
    %1915 = vmatprep.mubr.bf16.mxu0 0
    %1916 = vmatmul.mubr.bf16.gmra.mrb[0].mxu0 %v1881
    %v1917 = vpop.f32.mrb[0].mxu0
    %v1918 = vadd.f32 %v183, %v1917
    %v1919 = vpop.f32.mrb[0].mxu0
    %v1920 = vpop.f32.mrb[0].mxu0
    %v1921 = vpop.f32.mrb[0].mxu0
    %1922 = vdwg.mxu0
    %1923 = vmatprep.subr.bf16.mxu0 0
    %1924 = vmatpush1.bf16.msra.mxu0 %v386
    %1925 = vmatprep.subr.bf16.mxu0 0
    %1926 = vmatpush1.bf16.msra.mxu0 %v387
    %1927 = vmatprep.subr.bf16.mxu0 0
    %1928 = vmatpush1.bf16.msra.mxu0 0
    %1929 = vmatprep.subr.bf16.mxu0 0
    %1930 = vmatpush1.bf16.msra.mxu0 0
    %1931 = vmatprep.subr.bf16.mxu0 0
    %1932 = vmatpush1.bf16.msra.mxu0 0
    %1933 = vmatprep.subr.bf16.mxu0 0
    %1934 = vmatpush1.bf16.msra.mxu0 0
    %1935 = vmatprep.subr.bf16.mxu0 0
    %1936 = vmatpush1.bf16.msra.mxu0 0
    %1937 = vmatprep.subr.bf16.mxu0 0
    %1938 = vmatpush1.bf16.msra.mxu0 0
    %1939 = vmatprep.subr.bf16.mxu0 0
    %1940 = vmatpush1.bf16.msra.mxu0 0
    %1941 = vmatprep.subr.bf16.mxu0 0
    %1942 = vmatpush1.bf16.msra.mxu0 0
    %1943 = vmatprep.subr.bf16.mxu0 0
    %1944 = vmatpush1.bf16.msra.mxu0 0
    %1945 = vmatprep.subr.bf16.mxu0 0
    %1946 = vmatpush1.bf16.msra.mxu0 0
    %1947 = vmatprep.subr.bf16.mxu0 0
    %1948 = vmatpush1.bf16.msra.mxu0 0
    %1949 = vmatprep.subr.bf16.mxu0 0
    %1950 = vmatpush1.bf16.msra.mxu0 0
    %1951 = vmatprep.subr.bf16.mxu0 0
    %1952 = vmatpush1.bf16.msra.mxu0 0
    %1953 = vmatprep.subr.bf16.mxu0 0
    %1954 = vmatpush1.bf16.msra.mxu0 0
    %1955 = vmatprep.mubr.bf16.mxu0 0
    %1956 = vmatmul.mubr.bf16.gmra.mrb[0].mxu0 %v1881
    %v1957 = vpop.f32.mrb[0].mxu0
    %v1958 = vadd.f32 0.0, %v1957
    %v1959 = vpop.f32.mrb[0].mxu0
    %v1960 = vpop.f32.mrb[0].mxu0
    %v1961 = vpop.f32.mrb[0].mxu0
    %1962 = vdwg.mxu0
    %v1965 = vunpack.c.l.s4 1966171168
    %v1966 = vunpack.c.0.s8 %v1965
    %v1967 = vlaneseq
    %v1968 = vshrl.u32 %v1967, 7
    %v1969 = vsub.s32 %v1966, %v1968
    %v1970 = vrot.slane %v1958, %v1969
    %v1971 = vcombine.high %v1970, %v1970
    %v1973 = vunpack.c.l.s4 1966171168
    %v1974 = vunpack.c.0.s8 %v1973
    %v1975 = vlaneseq
    %v1976 = vshrl.u32 %v1975, 7
    %v1977 = vsub.s32 %v1974, %v1976
    %v1978 = vrot.slane %v1970, %v1977
    %v1980 = vunpack.c.l.s4 1966171168
    %v1981 = vunpack.c.0.s8 %v1980
    %v1982 = vlaneseq
    %v1983 = vshrl.u32 %v1982, 7
    %v1984 = vsub.s32 %v1981, %v1983
    %v1985 = vrot.slane %v1971, %v1984
    %v1986 = vlaneseq
    %v1987 = vshrl.u32 %v1986, 7
    %v1988 = vsub.s32 0, %v1987
    %v1989 = vrot.slane %v1978, %v1988
    %v1990 = vlaneseq
    %v1991 = vshrl.u32 %v1990, 7
    %v1992 = vsub.s32 0, %v1991
    %v1993 = vrot.slane %v1985, %v1992
    %v1996 = vadd.f32 %v169, %v1989
    %v1997 = vadd.f32 %v172, %v1993
    %1999 = vset.pattern.permute.xlu0 0
    %2000 = vperm.xlu0 %1999, %v1767
    %v2001 = vpop.permute.xlu0 %2000
    %2004 = vset.pattern.permute.xlu0 0
    %2005 = vperm.xlu0 %2004, %v1768
    %v2006 = vpop.permute.xlu0 %2005
    %v2008 = vmul.f32 %v2001, %v469
    %v2009 = vmul.f32 %v2006, %v469
    %v2010 = vadd.f32 %v1996, %v2008
    %v2011 = vadd.f32 %v1997, %v2009
    %v2012 = vtanh.pop %v2010
    %v2013 = vtanh.pop %v2011
    %v2014 = vmul.f32 %v2012, %v480
    %v2015 = vmul.f32 %v2013, %v480
    %v2016 = vsel %vm484, %v2014, 0.0
    %2017 = vadd.xlane.f32.xlu0 %v2016
    %v2018 = vpop.xlane.xlu0 %2017
    %v2019 = vsel %vm484, %v2015, 0.0
    %2020 = vadd.xlane.f32.xlu0 %v2019
    %v2021 = vpop.xlane.xlu0 %2020
    %v2022 = vadd.f32 %v2018, %v498
    %v2023 = vadd.f32 %v2021, %v505
    %v2025 = vlaneseq
    %v2026 = vshrl.u32 %v2025, 7
    %v2027 = vsub.s32 0, %v2026
    %v2028 = vrot.slane %v87, %v2027
    %2030 = vbcast.lane.b32.xlu0 %v2028, 256
    %v2031 = vpop.permute.xlu0 %2030
    %v2032 = vlaneseq
    %v2033 = vshrl.u32 %v2032, 7
    %v2034 = vsub.s32 1, %v2033
    %v2035 = vrot.slane %v87, %v2034
    %2037 = vbcast.lane.b32.xlu0 %v2035, 256
    %v2038 = vpop.permute.xlu0 %2037
    %v2041 = vadd.f32 %v2022, %v2031
    %v2042 = vadd.f32 %v2023, %v2038
    %2045 = vset.pattern.permute.xlu0 0
    %2046 = vperm.xlu0 %2045, %v2041
    %v2047 = vpop.permute.xlu0 %2046
    %2048 = vset.pattern.permute.xlu0 0
    %2049 = vperm.xlu0 %2048, %v2042
    %v2050 = vpop.permute.xlu0 %2049
    %v2051 = vlaneseq
    %v2052 = vshrl.u32 %v2051, 7
    %v2053 = vsub.s32 %v176, %v2052
    %v2054 = vrot.slane %v2047, %v2053
    %v2055 = vlaneseq
    %v2056 = vshrl.u32 %v2055, 7
    %v2057 = vsub.s32 %v176, %v2056
    %v2058 = vrot.slane %v2050, %v2057
    %v2059 = vsel %vm545, %v2058, %v2054
    %v2061 = vsel %vm548, %v2059, -inf
    %2062 = vmax.index.xlane.f32.xlu0 %v2061
    %v2063 = vpop.xlane.xlu0 %2062
    %vm2064 = vcmp.eq.s32.totalorder %v176, %v2063
    %v2065 = vsel %vm2064, 1, 0
    %v2066 = vcvt.s32.f32 %v2065
    %2069 = vset.pattern.permute.xlu0 0
    %2070 = vperm.xlu0 %2069, %v2022
    %v2071 = vpop.permute.xlu0 %2070
    %2072 = vset.pattern.permute.xlu0 0
    %2073 = vperm.xlu0 %2072, %v2023
    %v2074 = vpop.permute.xlu0 %2073
    %v2075 = vlaneseq
    %v2076 = vshrl.u32 %v2075, 7
    %v2077 = vsub.s32 %v176, %v2076
    %v2078 = vrot.slane %v2071, %v2077
    %v2079 = vlaneseq
    %v2080 = vshrl.u32 %v2079, 7
    %v2081 = vsub.s32 %v176, %v2080
    %v2082 = vrot.slane %v2074, %v2081
    %v2083 = vsel %vm545, %v2082, %v2078
    %v2085 = vsel %vm548, %v2083, -inf
    %2086 = vmax.xlane.f32.xlu0 %v2085
    %v2087 = vpop.xlane.xlu0 %2086
    %v2089 = vlaneseq
    %v2090 = vshrl.u32 %v2089, 7
    %v2091 = vsub.s32 0, %v2090
    %v2092 = vrot.slane %v2087, %v2091
    %v2093 = vlaneseq
    %v2094 = vshrl.u32 %v2093, 7
    %v2095 = vsub.s32 1, %v2094
    %v2096 = vrot.slane %v2087, %v2095
    %v2099 = vsub.f32 %v2022, %v2092
    %v2100 = vsub.f32 %v2023, %v2096
    %v2101 = vmul.f32 %v2099, 1.442695
    %v2102 = vpow.pop %v2101
    %v2103 = vmul.f32 %v2100, 1.442695
    %v2104 = vpow.pop %v2103
    %2107 = vset.pattern.permute.xlu0 0
    %2108 = vperm.xlu0 %2107, %v2102
    %v2109 = vpop.permute.xlu0 %2108
    %2110 = vset.pattern.permute.xlu0 0
    %2111 = vperm.xlu0 %2110, %v2104
    %v2112 = vpop.permute.xlu0 %2111
    %v2113 = vlaneseq
    %v2114 = vshrl.u32 %v2113, 7
    %v2115 = vsub.s32 %v176, %v2114
    %v2116 = vrot.slane %v2109, %v2115
    %v2117 = vlaneseq
    %v2118 = vshrl.u32 %v2117, 7
    %v2119 = vsub.s32 %v176, %v2118
    %v2120 = vrot.slane %v2112, %v2119
    %v2121 = vsel %vm545, %v2120, %v2116
    %v2123 = vsel %vm548, %v2121, 0.0
    %2124 = vadd.xlane.f32.xlu0 %v2123
    %v2125 = vpop.xlane.xlu0 %2124
    %v2127 = vlaneseq
    %v2128 = vshrl.u32 %v2127, 7
    %v2129 = vsub.s32 0, %v2128
    %v2130 = vrot.slane %v2125, %v2129
    %v2131 = vlaneseq
    %v2132 = vshrl.u32 %v2131, 7
    %v2133 = vsub.s32 1, %v2132
    %v2134 = vrot.slane %v2125, %v2133
    %v2137 = vrcp.pop %v2130
    %v2138 = vmul.f32 %v2102, %v2137
    %v2139 = vrcp.pop %v2134
    %v2140 = vmul.f32 %v2104, %v2139
    %v2141 = vmin.f32 %v2138, %v1767
    %v2142 = vmin.f32 %v2140, %v1768
    %v2143 = vadd.f32 %v1765, %v2141
    %v2144 = vadd.f32 %v1766, %v2142
    %v2145 = vadd.f32 %v1767, %v2138
    %v2146 = vadd.f32 %v1768, %v2140
    %v2147 = vlaneseq
    %v2148 = vshrl.u32 %v2147, 7
    %v2149 = vsub.s32 0, %v2148
    %v2150 = vrot.slane %v2066, %v2149
    %2152 = vbcast.lane.b32.xlu0 %v2150, 256
    %v2153 = vpop.permute.xlu0 %2152
    %v2154 = vlaneseq
    %v2155 = vshrl.u32 %v2154, 7
    %v2156 = vsub.s32 1, %v2155
    %v2157 = vrot.slane %v2066, %v2156
    %2159 = vbcast.lane.b32.xlu0 %v2157, 256
    %v2160 = vpop.permute.xlu0 %2159
    %v2161 = vmul.f32 %v80, %v2153
    %v2162 = vmul.f32 %v81, %v2160
    %v2163 = vsel %vm130, %v2161, 0.0
    %v2164 = vrot.slane %v2163, 4
    %v2165 = vadd.f32 %v2163, %v2164
    %v2166 = vrot.slane %v2165, 2
    %v2167 = vadd.f32 %v2165, %v2166
    %v2168 = vrot.slane %v2167, 1
    %v2169 = vadd.f32 %v2167, %v2168
    %v2170 = vsel %vm130, %v2162, 0.0
    %v2171 = vrot.slane %v2170, 4
    %v2172 = vadd.f32 %v2170, %v2171
    %v2173 = vrot.slane %v2172, 2
    %v2174 = vadd.f32 %v2172, %v2173
    %v2175 = vrot.slane %v2174, 1
    %v2176 = vadd.f32 %v2174, %v2175
    %v2177 = vpack.c.bf16 %v2169, %v2169
    %v2178 = vpack.c.bf16 %v2176, %v2176
    %v2181 = vunpack.c.l.b16 %v2177
    %v2182 = vunpack.c.l.b16 %v2178
    %v2183 = vsel %vm545, %v2182, %v2181
    %v2184 = vpack.c.b16 %v2183, %v2183
    %v2186 = vsel %vm130, %v2184, 0
    %2188 = vmatprep.subr.bf16.mxu0 0
    %2189 = vmatpush1.bf16.msra.mxu0 %v254
    %2190 = vmatprep.subr.bf16.mxu0 0
    %2191 = vmatpush1.bf16.msra.mxu0 %v255
    %2192 = vmatprep.subr.bf16.mxu0 0
    %2193 = vmatpush1.bf16.msra.mxu0 0
    %2194 = vmatprep.subr.bf16.mxu0 0
    %2195 = vmatpush1.bf16.msra.mxu0 0
    %2196 = vmatprep.subr.bf16.mxu0 0
    %2197 = vmatpush1.bf16.msra.mxu0 0
    %2198 = vmatprep.subr.bf16.mxu0 0
    %2199 = vmatpush1.bf16.msra.mxu0 0
    %2200 = vmatprep.subr.bf16.mxu0 0
    %2201 = vmatpush1.bf16.msra.mxu0 0
    %2202 = vmatprep.subr.bf16.mxu0 0
    %2203 = vmatpush1.bf16.msra.mxu0 0
    %2204 = vmatprep.subr.bf16.mxu0 0
    %2205 = vmatpush1.bf16.msra.mxu0 0
    %2206 = vmatprep.subr.bf16.mxu0 0
    %2207 = vmatpush1.bf16.msra.mxu0 0
    %2208 = vmatprep.subr.bf16.mxu0 0
    %2209 = vmatpush1.bf16.msra.mxu0 0
    %2210 = vmatprep.subr.bf16.mxu0 0
    %2211 = vmatpush1.bf16.msra.mxu0 0
    %2212 = vmatprep.subr.bf16.mxu0 0
    %2213 = vmatpush1.bf16.msra.mxu0 0
    %2214 = vmatprep.subr.bf16.mxu0 0
    %2215 = vmatpush1.bf16.msra.mxu0 0
    %2216 = vmatprep.subr.bf16.mxu0 0
    %2217 = vmatpush1.bf16.msra.mxu0 0
    %2218 = vmatprep.subr.bf16.mxu0 0
    %2219 = vmatpush1.bf16.msra.mxu0 0
    %2220 = vmatprep.mubr.bf16.mxu0 0
    %2221 = vmatmul.mubr.bf16.gmra.mrb[0].mxu0 %v2186
    %v2222 = vpop.f32.mrb[0].mxu0
    %v2223 = vadd.f32 %v244, %v2222
    %v2224 = vpop.f32.mrb[0].mxu0
    %v2225 = vpop.f32.mrb[0].mxu0
    %v2226 = vpop.f32.mrb[0].mxu0
    %2227 = vdwg.mxu0
    %v2228 = vadd.f32 %v2223, %v1918
    %v2229 = vxor.u32 %v2228, 2147483648
    %v2230 = vmul.f32 %v2229, 1.442695
    %v2231 = vpow.pop %v2230
    %v2232 = vadd.f32 %v2231, 1.0
    %v2233 = vrcp.pop %v2232
    %v2234 = vmul.f32 1.0, %v2233
    %2236 = vrot.lane.b32.xlu0 %v1918, 64
    %v2237 = vpop.permute.xlu0 %2236
    %v2239 = vmul.f32 %v2234, %v2237
    %2241 = vrot.lane.b32.xlu0 %v2239, 64
    %v2242 = vpop.permute.xlu0 %2241
    %v2244 = vadd.f32 %v2223, %v2242
    %v2245 = vtanh.pop %v2244
    %v2246 = vsub.f32 1.0, %v2234
    %2248 = vrot.lane.b32.xlu0 %v2245, 96
    %v2249 = vpop.permute.xlu0 %2248
    %v2251 = vmul.f32 %v2246, %v2249
    %v2252 = vmul.f32 %v2234, %v1875
    %v2253 = vadd.f32 %v2251, %v2252
    %v2254 = vpack.c.bf16 %v2253, %v2253
    %2256 = vrot.lane.b32.xlu0 %v2254, 96
    %v2257 = vpop.permute.xlu0 %2256
    %v2259 = vsel %vm130, %v2257, 0
    %2261 = vmatprep.subr.bf16.mxu0 0
    %2262 = vmatpush1.bf16.msra.mxu0 %v193
    %2263 = vmatprep.subr.bf16.mxu0 0
    %2264 = vmatpush1.bf16.msra.mxu0 %v194
    %2265 = vmatprep.subr.bf16.mxu0 0
    %2266 = vmatpush1.bf16.msra.mxu0 0
    %2267 = vmatprep.subr.bf16.mxu0 0
    %2268 = vmatpush1.bf16.msra.mxu0 0
    %2269 = vmatprep.subr.bf16.mxu0 0
    %2270 = vmatpush1.bf16.msra.mxu0 0
    %2271 = vmatprep.subr.bf16.mxu0 0
    %2272 = vmatpush1.bf16.msra.mxu0 0
    %2273 = vmatprep.subr.bf16.mxu0 0
    %2274 = vmatpush1.bf16.msra.mxu0 0
    %2275 = vmatprep.subr.bf16.mxu0 0
    %2276 = vmatpush1.bf16.msra.mxu0 0
    %2277 = vmatprep.subr.bf16.mxu0 0
    %2278 = vmatpush1.bf16.msra.mxu0 0
    %2279 = vmatprep.subr.bf16.mxu0 0
    %2280 = vmatpush1.bf16.msra.mxu0 0
    %2281 = vmatprep.subr.bf16.mxu0 0
    %2282 = vmatpush1.bf16.msra.mxu0 0
    %2283 = vmatprep.subr.bf16.mxu0 0
    %2284 = vmatpush1.bf16.msra.mxu0 0
    %2285 = vmatprep.subr.bf16.mxu0 0
    %2286 = vmatpush1.bf16.msra.mxu0 0
    %2287 = vmatprep.subr.bf16.mxu0 0
    %2288 = vmatpush1.bf16.msra.mxu0 0
    %2289 = vmatprep.subr.bf16.mxu0 0
    %2290 = vmatpush1.bf16.msra.mxu0 0
    %2291 = vmatprep.subr.bf16.mxu0 0
    %2292 = vmatpush1.bf16.msra.mxu0 0
    %2293 = vmatprep.mubr.bf16.mxu0 0
    %2294 = vmatmul.mubr.bf16.gmra.mrb[0].mxu0 %v2259
    %v2295 = vpop.f32.mrb[0].mxu0
    %v2296 = vadd.f32 %v183, %v2295
    %v2297 = vpop.f32.mrb[0].mxu0
    %v2298 = vpop.f32.mrb[0].mxu0
    %v2299 = vpop.f32.mrb[0].mxu0
    %2300 = vdwg.mxu0
    %2301 = vmatprep.subr.bf16.mxu0 0
    %2302 = vmatpush1.bf16.msra.mxu0 %v386
    %2303 = vmatprep.subr.bf16.mxu0 0
    %2304 = vmatpush1.bf16.msra.mxu0 %v387
    %2305 = vmatprep.subr.bf16.mxu0 0
    %2306 = vmatpush1.bf16.msra.mxu0 0
    %2307 = vmatprep.subr.bf16.mxu0 0
    %2308 = vmatpush1.bf16.msra.mxu0 0
    %2309 = vmatprep.subr.bf16.mxu0 0
    %2310 = vmatpush1.bf16.msra.mxu0 0
    %2311 = vmatprep.subr.bf16.mxu0 0
    %2312 = vmatpush1.bf16.msra.mxu0 0
    %2313 = vmatprep.subr.bf16.mxu0 0
    %2314 = vmatpush1.bf16.msra.mxu0 0
    %2315 = vmatprep.subr.bf16.mxu0 0
    %2316 = vmatpush1.bf16.msra.mxu0 0
    %2317 = vmatprep.subr.bf16.mxu0 0
    %2318 = vmatpush1.bf16.msra.mxu0 0
    %2319 = vmatprep.subr.bf16.mxu0 0
    %2320 = vmatpush1.bf16.msra.mxu0 0
    %2321 = vmatprep.subr.bf16.mxu0 0
    %2322 = vmatpush1.bf16.msra.mxu0 0
    %2323 = vmatprep.subr.bf16.mxu0 0
    %2324 = vmatpush1.bf16.msra.mxu0 0
    %2325 = vmatprep.subr.bf16.mxu0 0
    %2326 = vmatpush1.bf16.msra.mxu0 0
    %2327 = vmatprep.subr.bf16.mxu0 0
    %2328 = vmatpush1.bf16.msra.mxu0 0
    %2329 = vmatprep.subr.bf16.mxu0 0
    %2330 = vmatpush1.bf16.msra.mxu0 0
    %2331 = vmatprep.subr.bf16.mxu0 0
    %2332 = vmatpush1.bf16.msra.mxu0 0
    %2333 = vmatprep.mubr.bf16.mxu0 0
    %2334 = vmatmul.mubr.bf16.gmra.mrb[0].mxu0 %v2259
    %v2335 = vpop.f32.mrb[0].mxu0
    %v2336 = vadd.f32 0.0, %v2335
    %v2337 = vpop.f32.mrb[0].mxu0
    %v2338 = vpop.f32.mrb[0].mxu0
    %v2339 = vpop.f32.mrb[0].mxu0
    %2340 = vdwg.mxu0
    %v2343 = vunpack.c.l.s4 1966171168
    %v2344 = vunpack.c.0.s8 %v2343
    %v2345 = vlaneseq
    %v2346 = vshrl.u32 %v2345, 7
    %v2347 = vsub.s32 %v2344, %v2346
    %v2348 = vrot.slane %v2336, %v2347
    %v2349 = vcombine.high %v2348, %v2348
    %v2351 = vunpack.c.l.s4 1966171168
    %v2352 = vunpack.c.0.s8 %v2351
    %v2353 = vlaneseq
    %v2354 = vshrl.u32 %v2353, 7
    %v2355 = vsub.s32 %v2352, %v2354
    %v2356 = vrot.slane %v2348, %v2355
    %v2358 = vunpack.c.l.s4 1966171168
    %v2359 = vunpack.c.0.s8 %v2358
    %v2360 = vlaneseq
    %v2361 = vshrl.u32 %v2360, 7
    %v2362 = vsub.s32 %v2359, %v2361
    %v2363 = vrot.slane %v2349, %v2362
    %v2364 = vlaneseq
    %v2365 = vshrl.u32 %v2364, 7
    %v2366 = vsub.s32 0, %v2365
    %v2367 = vrot.slane %v2356, %v2366
    %v2368 = vlaneseq
    %v2369 = vshrl.u32 %v2368, 7
    %v2370 = vsub.s32 0, %v2369
    %v2371 = vrot.slane %v2363, %v2370
    %v2374 = vadd.f32 %v169, %v2367
    %v2375 = vadd.f32 %v172, %v2371
    %2377 = vset.pattern.permute.xlu0 0
    %2378 = vperm.xlu0 %2377, %v2145
    %v2379 = vpop.permute.xlu0 %2378
    %2382 = vset.pattern.permute.xlu0 0
    %2383 = vperm.xlu0 %2382, %v2146
    %v2384 = vpop.permute.xlu0 %2383
    %v2386 = vmul.f32 %v2379, %v469
    %v2387 = vmul.f32 %v2384, %v469
    %v2388 = vadd.f32 %v2374, %v2386
    %v2389 = vadd.f32 %v2375, %v2387
    %v2390 = vtanh.pop %v2388
    %v2391 = vtanh.pop %v2389
    %v2392 = vmul.f32 %v2390, %v480
    %v2393 = vmul.f32 %v2391, %v480
    %v2394 = vsel %vm484, %v2392, 0.0
    %2395 = vadd.xlane.f32.xlu0 %v2394
    %v2396 = vpop.xlane.xlu0 %2395
    %v2397 = vsel %vm484, %v2393, 0.0
    %2398 = vadd.xlane.f32.xlu0 %v2397
    %v2399 = vpop.xlane.xlu0 %2398
    %v2400 = vadd.f32 %v2396, %v498
    %v2401 = vadd.f32 %v2399, %v505
    %v2403 = vlaneseq
    %v2404 = vshrl.u32 %v2403, 7
    %v2405 = vsub.s32 0, %v2404
    %v2406 = vrot.slane %v88, %v2405
    %2408 = vbcast.lane.b32.xlu0 %v2406, 256
    %v2409 = vpop.permute.xlu0 %2408
    %v2410 = vlaneseq
    %v2411 = vshrl.u32 %v2410, 7
    %v2412 = vsub.s32 1, %v2411
    %v2413 = vrot.slane %v88, %v2412
    %2415 = vbcast.lane.b32.xlu0 %v2413, 256
    %v2416 = vpop.permute.xlu0 %2415
    %v2419 = vadd.f32 %v2400, %v2409
    %v2420 = vadd.f32 %v2401, %v2416
    %2423 = vset.pattern.permute.xlu0 0
    %2424 = vperm.xlu0 %2423, %v2419
    %v2425 = vpop.permute.xlu0 %2424
    %2426 = vset.pattern.permute.xlu0 0
    %2427 = vperm.xlu0 %2426, %v2420
    %v2428 = vpop.permute.xlu0 %2427
    %v2429 = vlaneseq
    %v2430 = vshrl.u32 %v2429, 7
    %v2431 = vsub.s32 %v176, %v2430
    %v2432 = vrot.slane %v2425, %v2431
    %v2433 = vlaneseq
    %v2434 = vshrl.u32 %v2433, 7
    %v2435 = vsub.s32 %v176, %v2434
    %v2436 = vrot.slane %v2428, %v2435
    %v2437 = vsel %vm545, %v2436, %v2432
    %v2439 = vsel %vm548, %v2437, -inf
    %2440 = vmax.index.xlane.f32.xlu0 %v2439
    %v2441 = vpop.xlane.xlu0 %2440
    %vm2442 = vcmp.eq.s32.totalorder %v176, %v2441
    %v2443 = vsel %vm2442, 1, 0
    %v2444 = vcvt.s32.f32 %v2443
    %2447 = vset.pattern.permute.xlu0 0
    %2448 = vperm.xlu0 %2447, %v2400
    %v2449 = vpop.permute.xlu0 %2448
    %2450 = vset.pattern.permute.xlu0 0
    %2451 = vperm.xlu0 %2450, %v2401
    %v2452 = vpop.permute.xlu0 %2451
    %v2453 = vlaneseq
    %v2454 = vshrl.u32 %v2453, 7
    %v2455 = vsub.s32 %v176, %v2454
    %v2456 = vrot.slane %v2449, %v2455
    %v2457 = vlaneseq
    %v2458 = vshrl.u32 %v2457, 7
    %v2459 = vsub.s32 %v176, %v2458
    %v2460 = vrot.slane %v2452, %v2459
    %v2461 = vsel %vm545, %v2460, %v2456
    %v2463 = vsel %vm548, %v2461, -inf
    %2464 = vmax.xlane.f32.xlu0 %v2463
    %v2465 = vpop.xlane.xlu0 %2464
    %v2467 = vlaneseq
    %v2468 = vshrl.u32 %v2467, 7
    %v2469 = vsub.s32 0, %v2468
    %v2470 = vrot.slane %v2465, %v2469
    %v2471 = vlaneseq
    %v2472 = vshrl.u32 %v2471, 7
    %v2473 = vsub.s32 1, %v2472
    %v2474 = vrot.slane %v2465, %v2473
    %v2477 = vsub.f32 %v2400, %v2470
    %v2478 = vsub.f32 %v2401, %v2474
    %v2479 = vmul.f32 %v2477, 1.442695
    %v2480 = vpow.pop %v2479
    %v2481 = vmul.f32 %v2478, 1.442695
    %v2482 = vpow.pop %v2481
    %2485 = vset.pattern.permute.xlu0 0
    %2486 = vperm.xlu0 %2485, %v2480
    %v2487 = vpop.permute.xlu0 %2486
    %2488 = vset.pattern.permute.xlu0 0
    %2489 = vperm.xlu0 %2488, %v2482
    %v2490 = vpop.permute.xlu0 %2489
    %v2491 = vlaneseq
    %v2492 = vshrl.u32 %v2491, 7
    %v2493 = vsub.s32 %v176, %v2492
    %v2494 = vrot.slane %v2487, %v2493
    %v2495 = vlaneseq
    %v2496 = vshrl.u32 %v2495, 7
    %v2497 = vsub.s32 %v176, %v2496
    %v2498 = vrot.slane %v2490, %v2497
    %v2499 = vsel %vm545, %v2498, %v2494
    %v2501 = vsel %vm548, %v2499, 0.0
    %2502 = vadd.xlane.f32.xlu0 %v2501
    %v2503 = vpop.xlane.xlu0 %2502
    %v2505 = vlaneseq
    %v2506 = vshrl.u32 %v2505, 7
    %v2507 = vsub.s32 0, %v2506
    %v2508 = vrot.slane %v2503, %v2507
    %v2509 = vlaneseq
    %v2510 = vshrl.u32 %v2509, 7
    %v2511 = vsub.s32 1, %v2510
    %v2512 = vrot.slane %v2503, %v2511
    %v2515 = vrcp.pop %v2508
    %v2516 = vmul.f32 %v2480, %v2515
    %v2517 = vrcp.pop %v2512
    %v2518 = vmul.f32 %v2482, %v2517
    %v2519 = vmin.f32 %v2516, %v2145
    %v2520 = vmin.f32 %v2518, %v2146
    %v2521 = vadd.f32 %v2143, %v2519
    %v2522 = vadd.f32 %v2144, %v2520
    %v2523 = vadd.f32 %v2145, %v2516
    %v2524 = vadd.f32 %v2146, %v2518
    %v2525 = vlaneseq
    %v2526 = vshrl.u32 %v2525, 7
    %v2527 = vsub.s32 0, %v2526
    %v2528 = vrot.slane %v2444, %v2527
    %2530 = vbcast.lane.b32.xlu0 %v2528, 256
    %v2531 = vpop.permute.xlu0 %2530
    %v2532 = vlaneseq
    %v2533 = vshrl.u32 %v2532, 7
    %v2534 = vsub.s32 1, %v2533
    %v2535 = vrot.slane %v2444, %v2534
    %2537 = vbcast.lane.b32.xlu0 %v2535, 256
    %v2538 = vpop.permute.xlu0 %2537
    %v2539 = vmul.f32 %v80, %v2531
    %v2540 = vmul.f32 %v81, %v2538
    %v2541 = vsel %vm130, %v2539, 0.0
    %v2542 = vrot.slane %v2541, 4
    %v2543 = vadd.f32 %v2541, %v2542
    %v2544 = vrot.slane %v2543, 2
    %v2545 = vadd.f32 %v2543, %v2544
    %v2546 = vrot.slane %v2545, 1
    %v2547 = vadd.f32 %v2545, %v2546
    %v2548 = vsel %vm130, %v2540, 0.0
    %v2549 = vrot.slane %v2548, 4
    %v2550 = vadd.f32 %v2548, %v2549
    %v2551 = vrot.slane %v2550, 2
    %v2552 = vadd.f32 %v2550, %v2551
    %v2553 = vrot.slane %v2552, 1
    %v2554 = vadd.f32 %v2552, %v2553
    %v2555 = vpack.c.bf16 %v2547, %v2547
    %v2556 = vpack.c.bf16 %v2554, %v2554
    %v2559 = vunpack.c.l.b16 %v2555
    %v2560 = vunpack.c.l.b16 %v2556
    %v2561 = vsel %vm545, %v2560, %v2559
    %v2562 = vpack.c.b16 %v2561, %v2561
    %v2564 = vsel %vm130, %v2562, 0
    %2566 = vmatprep.subr.bf16.mxu0 0
    %2567 = vmatpush1.bf16.msra.mxu0 %v254
    %2568 = vmatprep.subr.bf16.mxu0 0
    %2569 = vmatpush1.bf16.msra.mxu0 %v255
    %2570 = vmatprep.subr.bf16.mxu0 0
    %2571 = vmatpush1.bf16.msra.mxu0 0
    %2572 = vmatprep.subr.bf16.mxu0 0
    %2573 = vmatpush1.bf16.msra.mxu0 0
    %2574 = vmatprep.subr.bf16.mxu0 0
    %2575 = vmatpush1.bf16.msra.mxu0 0
    %2576 = vmatprep.subr.bf16.mxu0 0
    %2577 = vmatpush1.bf16.msra.mxu0 0
    %2578 = vmatprep.subr.bf16.mxu0 0
    %2579 = vmatpush1.bf16.msra.mxu0 0
    %2580 = vmatprep.subr.bf16.mxu0 0
    %2581 = vmatpush1.bf16.msra.mxu0 0
    %2582 = vmatprep.subr.bf16.mxu0 0
    %2583 = vmatpush1.bf16.msra.mxu0 0
    %2584 = vmatprep.subr.bf16.mxu0 0
    %2585 = vmatpush1.bf16.msra.mxu0 0
    %2586 = vmatprep.subr.bf16.mxu0 0
    %2587 = vmatpush1.bf16.msra.mxu0 0
    %2588 = vmatprep.subr.bf16.mxu0 0
    %2589 = vmatpush1.bf16.msra.mxu0 0
    %2590 = vmatprep.subr.bf16.mxu0 0
    %2591 = vmatpush1.bf16.msra.mxu0 0
    %2592 = vmatprep.subr.bf16.mxu0 0
    %2593 = vmatpush1.bf16.msra.mxu0 0
    %2594 = vmatprep.subr.bf16.mxu0 0
    %2595 = vmatpush1.bf16.msra.mxu0 0
    %2596 = vmatprep.subr.bf16.mxu0 0
    %2597 = vmatpush1.bf16.msra.mxu0 0
    %2598 = vmatprep.mubr.bf16.mxu0 0
    %2599 = vmatmul.mubr.bf16.gmra.mrb[0].mxu0 %v2564
    %v2600 = vpop.f32.mrb[0].mxu0
    %v2601 = vadd.f32 %v244, %v2600
    %v2602 = vpop.f32.mrb[0].mxu0
    %v2603 = vpop.f32.mrb[0].mxu0
    %v2604 = vpop.f32.mrb[0].mxu0
    %2605 = vdwg.mxu0
    %v2606 = vadd.f32 %v2601, %v2296
    %v2607 = vxor.u32 %v2606, 2147483648
    %v2608 = vmul.f32 %v2607, 1.442695
    %v2609 = vpow.pop %v2608
    %v2610 = vadd.f32 %v2609, 1.0
    %v2611 = vrcp.pop %v2610
    %v2612 = vmul.f32 1.0, %v2611
    %2614 = vrot.lane.b32.xlu0 %v2296, 64
    %v2615 = vpop.permute.xlu0 %2614
    %v2617 = vmul.f32 %v2612, %v2615
    %2619 = vrot.lane.b32.xlu0 %v2617, 64
    %v2620 = vpop.permute.xlu0 %2619
    %v2622 = vadd.f32 %v2601, %v2620
    %v2623 = vtanh.pop %v2622
    %v2624 = vsub.f32 1.0, %v2612
    %2626 = vrot.lane.b32.xlu0 %v2623, 96
    %v2627 = vpop.permute.xlu0 %2626
    %v2629 = vmul.f32 %v2624, %v2627
    %v2630 = vmul.f32 %v2612, %v2253
    %v2631 = vadd.f32 %v2629, %v2630
    %v2632 = vpack.c.bf16 %v2631, %v2631
    %2634 = vrot.lane.b32.xlu0 %v2632, 96
    %v2635 = vpop.permute.xlu0 %2634
    %v2637 = vsel %vm130, %v2635, 0
    %2639 = vmatprep.subr.bf16.mxu0 0
    %2640 = vmatpush1.bf16.msra.mxu0 %v193
    %2641 = vmatprep.subr.bf16.mxu0 0
    %2642 = vmatpush1.bf16.msra.mxu0 %v194
    %2643 = vmatprep.subr.bf16.mxu0 0
    %2644 = vmatpush1.bf16.msra.mxu0 0
    %2645 = vmatprep.subr.bf16.mxu0 0
    %2646 = vmatpush1.bf16.msra.mxu0 0
    %2647 = vmatprep.subr.bf16.mxu0 0
    %2648 = vmatpush1.bf16.msra.mxu0 0
    %2649 = vmatprep.subr.bf16.mxu0 0
    %2650 = vmatpush1.bf16.msra.mxu0 0
    %2651 = vmatprep.subr.bf16.mxu0 0
    %2652 = vmatpush1.bf16.msra.mxu0 0
    %2653 = vmatprep.subr.bf16.mxu0 0
    %2654 = vmatpush1.bf16.msra.mxu0 0
    %2655 = vmatprep.subr.bf16.mxu0 0
    %2656 = vmatpush1.bf16.msra.mxu0 0
    %2657 = vmatprep.subr.bf16.mxu0 0
    %2658 = vmatpush1.bf16.msra.mxu0 0
    %2659 = vmatprep.subr.bf16.mxu0 0
    %2660 = vmatpush1.bf16.msra.mxu0 0
    %2661 = vmatprep.subr.bf16.mxu0 0
    %2662 = vmatpush1.bf16.msra.mxu0 0
    %2663 = vmatprep.subr.bf16.mxu0 0
    %2664 = vmatpush1.bf16.msra.mxu0 0
    %2665 = vmatprep.subr.bf16.mxu0 0
    %2666 = vmatpush1.bf16.msra.mxu0 0
    %2667 = vmatprep.subr.bf16.mxu0 0
    %2668 = vmatpush1.bf16.msra.mxu0 0
    %2669 = vmatprep.subr.bf16.mxu0 0
    %2670 = vmatpush1.bf16.msra.mxu0 0
    %2671 = vmatprep.mubr.bf16.mxu0 0
    %2672 = vmatmul.mubr.bf16.gmra.mrb[0].mxu0 %v2637
    %v2673 = vpop.f32.mrb[0].mxu0
    %v2674 = vadd.f32 %v183, %v2673
    %v2675 = vpop.f32.mrb[0].mxu0
    %v2676 = vpop.f32.mrb[0].mxu0
    %v2677 = vpop.f32.mrb[0].mxu0
    %2678 = vdwg.mxu0
    %2679 = vmatprep.subr.bf16.mxu0 0
    %2680 = vmatpush1.bf16.msra.mxu0 %v386
    %2681 = vmatprep.subr.bf16.mxu0 0
    %2682 = vmatpush1.bf16.msra.mxu0 %v387
    %2683 = vmatprep.subr.bf16.mxu0 0
    %2684 = vmatpush1.bf16.msra.mxu0 0
    %2685 = vmatprep.subr.bf16.mxu0 0
    %2686 = vmatpush1.bf16.msra.mxu0 0
    %2687 = vmatprep.subr.bf16.mxu0 0
    %2688 = vmatpush1.bf16.msra.mxu0 0
    %2689 = vmatprep.subr.bf16.mxu0 0
    %2690 = vmatpush1.bf16.msra.mxu0 0
    %2691 = vmatprep.subr.bf16.mxu0 0
    %2692 = vmatpush1.bf16.msra.mxu0 0
    %2693 = vmatprep.subr.bf16.mxu0 0
    %2694 = vmatpush1.bf16.msra.mxu0 0
    %2695 = vmatprep.subr.bf16.mxu0 0
    %2696 = vmatpush1.bf16.msra.mxu0 0
    %2697 = vmatprep.subr.bf16.mxu0 0
    %2698 = vmatpush1.bf16.msra.mxu0 0
    %2699 = vmatprep.subr.bf16.mxu0 0
    %2700 = vmatpush1.bf16.msra.mxu0 0
    %2701 = vmatprep.subr.bf16.mxu0 0
    %2702 = vmatpush1.bf16.msra.mxu0 0
    %2703 = vmatprep.subr.bf16.mxu0 0
    %2704 = vmatpush1.bf16.msra.mxu0 0
    %2705 = vmatprep.subr.bf16.mxu0 0
    %2706 = vmatpush1.bf16.msra.mxu0 0
    %2707 = vmatprep.subr.bf16.mxu0 0
    %2708 = vmatpush1.bf16.msra.mxu0 0
    %2709 = vmatprep.subr.bf16.mxu0 0
    %2710 = vmatpush1.bf16.msra.mxu0 0
    %2711 = vmatprep.mubr.bf16.mxu0 0
    %2712 = vmatmul.mubr.bf16.gmra.mrb[0].mxu0 %v2637
    %v2713 = vpop.f32.mrb[0].mxu0
    %v2714 = vadd.f32 0.0, %v2713
    %v2715 = vpop.f32.mrb[0].mxu0
    %v2716 = vpop.f32.mrb[0].mxu0
    %v2717 = vpop.f32.mrb[0].mxu0
    %2718 = vdwg.mxu0
    %v2721 = vunpack.c.l.s4 1966171168
    %v2722 = vunpack.c.0.s8 %v2721
    %v2723 = vlaneseq
    %v2724 = vshrl.u32 %v2723, 7
    %v2725 = vsub.s32 %v2722, %v2724
    %v2726 = vrot.slane %v2714, %v2725
    %v2727 = vcombine.high %v2726, %v2726
    %v2729 = vunpack.c.l.s4 1966171168
    %v2730 = vunpack.c.0.s8 %v2729
    %v2731 = vlaneseq
    %v2732 = vshrl.u32 %v2731, 7
    %v2733 = vsub.s32 %v2730, %v2732
    %v2734 = vrot.slane %v2726, %v2733
    %v2736 = vunpack.c.l.s4 1966171168
    %v2737 = vunpack.c.0.s8 %v2736
    %v2738 = vlaneseq
    %v2739 = vshrl.u32 %v2738, 7
    %v2740 = vsub.s32 %v2737, %v2739
    %v2741 = vrot.slane %v2727, %v2740
    %v2742 = vlaneseq
    %v2743 = vshrl.u32 %v2742, 7
    %v2744 = vsub.s32 0, %v2743
    %v2745 = vrot.slane %v2734, %v2744
    %v2746 = vlaneseq
    %v2747 = vshrl.u32 %v2746, 7
    %v2748 = vsub.s32 0, %v2747
    %v2749 = vrot.slane %v2741, %v2748
    %v2752 = vadd.f32 %v169, %v2745
    %v2753 = vadd.f32 %v172, %v2749
    %2755 = vset.pattern.permute.xlu0 0
    %2756 = vperm.xlu0 %2755, %v2523
    %v2757 = vpop.permute.xlu0 %2756
    %2760 = vset.pattern.permute.xlu0 0
    %2761 = vperm.xlu0 %2760, %v2524
    %v2762 = vpop.permute.xlu0 %2761
    %v2764 = vmul.f32 %v2757, %v469
    %v2765 = vmul.f32 %v2762, %v469
    %v2766 = vadd.f32 %v2752, %v2764
    %v2767 = vadd.f32 %v2753, %v2765
    %v2768 = vtanh.pop %v2766
    %v2769 = vtanh.pop %v2767
    %v2770 = vmul.f32 %v2768, %v480
    %v2771 = vmul.f32 %v2769, %v480
    %v2772 = vsel %vm484, %v2770, 0.0
    %2773 = vadd.xlane.f32.xlu0 %v2772
    %v2774 = vpop.xlane.xlu0 %2773
    %v2775 = vsel %vm484, %v2771, 0.0
    %2776 = vadd.xlane.f32.xlu0 %v2775
    %v2777 = vpop.xlane.xlu0 %2776
    %v2778 = vadd.f32 %v2774, %v498
    %v2779 = vadd.f32 %v2777, %v505
    %v2781 = vlaneseq
    %v2782 = vshrl.u32 %v2781, 7
    %v2783 = vsub.s32 0, %v2782
    %v2784 = vrot.slane %v89, %v2783
    %2786 = vbcast.lane.b32.xlu0 %v2784, 256
    %v2787 = vpop.permute.xlu0 %2786
    %v2788 = vlaneseq
    %v2789 = vshrl.u32 %v2788, 7
    %v2790 = vsub.s32 1, %v2789
    %v2791 = vrot.slane %v89, %v2790
    %2793 = vbcast.lane.b32.xlu0 %v2791, 256
    %v2794 = vpop.permute.xlu0 %2793
    %v2797 = vadd.f32 %v2778, %v2787
    %v2798 = vadd.f32 %v2779, %v2794
    %2801 = vset.pattern.permute.xlu0 0
    %2802 = vperm.xlu0 %2801, %v2797
    %v2803 = vpop.permute.xlu0 %2802
    %2804 = vset.pattern.permute.xlu0 0
    %2805 = vperm.xlu0 %2804, %v2798
    %v2806 = vpop.permute.xlu0 %2805
    %v2807 = vlaneseq
    %v2808 = vshrl.u32 %v2807, 7
    %v2809 = vsub.s32 %v176, %v2808
    %v2810 = vrot.slane %v2803, %v2809
    %v2811 = vlaneseq
    %v2812 = vshrl.u32 %v2811, 7
    %v2813 = vsub.s32 %v176, %v2812
    %v2814 = vrot.slane %v2806, %v2813
    %v2815 = vsel %vm545, %v2814, %v2810
    %v2817 = vsel %vm548, %v2815, -inf
    %2818 = vmax.index.xlane.f32.xlu0 %v2817
    %v2819 = vpop.xlane.xlu0 %2818
    %vm2820 = vcmp.eq.s32.totalorder %v176, %v2819
    %v2821 = vsel %vm2820, 1, 0
    %v2822 = vcvt.s32.f32 %v2821
    %2825 = vset.pattern.permute.xlu0 0
    %2826 = vperm.xlu0 %2825, %v2778
    %v2827 = vpop.permute.xlu0 %2826
    %2828 = vset.pattern.permute.xlu0 0
    %2829 = vperm.xlu0 %2828, %v2779
    %v2830 = vpop.permute.xlu0 %2829
    %v2831 = vlaneseq
    %v2832 = vshrl.u32 %v2831, 7
    %v2833 = vsub.s32 %v176, %v2832
    %v2834 = vrot.slane %v2827, %v2833
    %v2835 = vlaneseq
    %v2836 = vshrl.u32 %v2835, 7
    %v2837 = vsub.s32 %v176, %v2836
    %v2838 = vrot.slane %v2830, %v2837
    %v2839 = vsel %vm545, %v2838, %v2834
    %v2841 = vsel %vm548, %v2839, -inf
    %2842 = vmax.xlane.f32.xlu0 %v2841
    %v2843 = vpop.xlane.xlu0 %2842
    %v2845 = vlaneseq
    %v2846 = vshrl.u32 %v2845, 7
    %v2847 = vsub.s32 0, %v2846
    %v2848 = vrot.slane %v2843, %v2847
    %v2849 = vlaneseq
    %v2850 = vshrl.u32 %v2849, 7
    %v2851 = vsub.s32 1, %v2850
    %v2852 = vrot.slane %v2843, %v2851
    %v2855 = vsub.f32 %v2778, %v2848
    %v2856 = vsub.f32 %v2779, %v2852
    %v2857 = vmul.f32 %v2855, 1.442695
    %v2858 = vpow.pop %v2857
    %v2859 = vmul.f32 %v2856, 1.442695
    %v2860 = vpow.pop %v2859
    %2863 = vset.pattern.permute.xlu0 0
    %2864 = vperm.xlu0 %2863, %v2858
    %v2865 = vpop.permute.xlu0 %2864
    %2866 = vset.pattern.permute.xlu0 0
    %2867 = vperm.xlu0 %2866, %v2860
    %v2868 = vpop.permute.xlu0 %2867
    %v2869 = vlaneseq
    %v2870 = vshrl.u32 %v2869, 7
    %v2871 = vsub.s32 %v176, %v2870
    %v2872 = vrot.slane %v2865, %v2871
    %v2873 = vlaneseq
    %v2874 = vshrl.u32 %v2873, 7
    %v2875 = vsub.s32 %v176, %v2874
    %v2876 = vrot.slane %v2868, %v2875
    %v2877 = vsel %vm545, %v2876, %v2872
    %v2879 = vsel %vm548, %v2877, 0.0
    %2880 = vadd.xlane.f32.xlu0 %v2879
    %v2881 = vpop.xlane.xlu0 %2880
    %v2883 = vlaneseq
    %v2884 = vshrl.u32 %v2883, 7
    %v2885 = vsub.s32 0, %v2884
    %v2886 = vrot.slane %v2881, %v2885
    %v2887 = vlaneseq
    %v2888 = vshrl.u32 %v2887, 7
    %v2889 = vsub.s32 1, %v2888
    %v2890 = vrot.slane %v2881, %v2889
    %v2893 = vrcp.pop %v2886
    %v2894 = vmul.f32 %v2858, %v2893
    %v2895 = vrcp.pop %v2890
    %v2896 = vmul.f32 %v2860, %v2895
    %v2897 = vmin.f32 %v2894, %v2523
    %v2898 = vmin.f32 %v2896, %v2524
    %v2899 = vadd.f32 %v2521, %v2897
    %v2900 = vadd.f32 %v2522, %v2898
    %v2901 = vadd.f32 %v2523, %v2894
    %v2902 = vadd.f32 %v2524, %v2896
    %v2903 = vlaneseq
    %v2904 = vshrl.u32 %v2903, 7
    %v2905 = vsub.s32 0, %v2904
    %v2906 = vrot.slane %v2822, %v2905
    %2908 = vbcast.lane.b32.xlu0 %v2906, 256
    %v2909 = vpop.permute.xlu0 %2908
    %v2910 = vlaneseq
    %v2911 = vshrl.u32 %v2910, 7
    %v2912 = vsub.s32 1, %v2911
    %v2913 = vrot.slane %v2822, %v2912
    %2915 = vbcast.lane.b32.xlu0 %v2913, 256
    %v2916 = vpop.permute.xlu0 %2915
    %v2917 = vmul.f32 %v80, %v2909
    %v2918 = vmul.f32 %v81, %v2916
    %v2919 = vsel %vm130, %v2917, 0.0
    %v2920 = vrot.slane %v2919, 4
    %v2921 = vadd.f32 %v2919, %v2920
    %v2922 = vrot.slane %v2921, 2
    %v2923 = vadd.f32 %v2921, %v2922
    %v2924 = vrot.slane %v2923, 1
    %v2925 = vadd.f32 %v2923, %v2924
    %v2926 = vsel %vm130, %v2918, 0.0
    %v2927 = vrot.slane %v2926, 4
    %v2928 = vadd.f32 %v2926, %v2927
    %v2929 = vrot.slane %v2928, 2
    %v2930 = vadd.f32 %v2928, %v2929
    %v2931 = vrot.slane %v2930, 1
    %v2932 = vadd.f32 %v2930, %v2931
    %v2933 = vpack.c.bf16 %v2925, %v2925
    %v2934 = vpack.c.bf16 %v2932, %v2932
    %v2937 = vunpack.c.l.b16 %v2933
    %v2938 = vunpack.c.l.b16 %v2934
    %v2939 = vsel %vm545, %v2938, %v2937
    %v2940 = vpack.c.b16 %v2939, %v2939
    %v2942 = vsel %vm130, %v2940, 0
    %2944 = vmatprep.subr.bf16.mxu0 0
    %2945 = vmatpush1.bf16.msra.mxu0 %v254
    %2946 = vmatprep.subr.bf16.mxu0 0
    %2947 = vmatpush1.bf16.msra.mxu0 %v255
    %2948 = vmatprep.subr.bf16.mxu0 0
    %2949 = vmatpush1.bf16.msra.mxu0 0
    %2950 = vmatprep.subr.bf16.mxu0 0
    %2951 = vmatpush1.bf16.msra.mxu0 0
    %2952 = vmatprep.subr.bf16.mxu0 0
    %2953 = vmatpush1.bf16.msra.mxu0 0
    %2954 = vmatprep.subr.bf16.mxu0 0
    %2955 = vmatpush1.bf16.msra.mxu0 0
    %2956 = vmatprep.subr.bf16.mxu0 0
    %2957 = vmatpush1.bf16.msra.mxu0 0
    %2958 = vmatprep.subr.bf16.mxu0 0
    %2959 = vmatpush1.bf16.msra.mxu0 0
    %2960 = vmatprep.subr.bf16.mxu0 0
    %2961 = vmatpush1.bf16.msra.mxu0 0
    %2962 = vmatprep.subr.bf16.mxu0 0
    %2963 = vmatpush1.bf16.msra.mxu0 0
    %2964 = vmatprep.subr.bf16.mxu0 0
    %2965 = vmatpush1.bf16.msra.mxu0 0
    %2966 = vmatprep.subr.bf16.mxu0 0
    %2967 = vmatpush1.bf16.msra.mxu0 0
    %2968 = vmatprep.subr.bf16.mxu0 0
    %2969 = vmatpush1.bf16.msra.mxu0 0
    %2970 = vmatprep.subr.bf16.mxu0 0
    %2971 = vmatpush1.bf16.msra.mxu0 0
    %2972 = vmatprep.subr.bf16.mxu0 0
    %2973 = vmatpush1.bf16.msra.mxu0 0
    %2974 = vmatprep.subr.bf16.mxu0 0
    %2975 = vmatpush1.bf16.msra.mxu0 0
    %2976 = vmatprep.mubr.bf16.mxu0 0
    %2977 = vmatmul.mubr.bf16.gmra.mrb[0].mxu0 %v2942
    %v2978 = vpop.f32.mrb[0].mxu0
    %v2979 = vadd.f32 %v244, %v2978
    %v2980 = vpop.f32.mrb[0].mxu0
    %v2981 = vpop.f32.mrb[0].mxu0
    %v2982 = vpop.f32.mrb[0].mxu0
    %2983 = vdwg.mxu0
    %v2984 = vadd.f32 %v2979, %v2674
    %v2985 = vxor.u32 %v2984, 2147483648
    %v2986 = vmul.f32 %v2985, 1.442695
    %v2987 = vpow.pop %v2986
    %v2988 = vadd.f32 %v2987, 1.0
    %v2989 = vrcp.pop %v2988
    %v2990 = vmul.f32 1.0, %v2989
    %2992 = vrot.lane.b32.xlu0 %v2674, 64
    %v2993 = vpop.permute.xlu0 %2992
    %v2995 = vmul.f32 %v2990, %v2993
    %2997 = vrot.lane.b32.xlu0 %v2995, 64
    %v2998 = vpop.permute.xlu0 %2997
    %v3000 = vadd.f32 %v2979, %v2998
    %v3001 = vtanh.pop %v3000
    %v3002 = vsub.f32 1.0, %v2990
    %3004 = vrot.lane.b32.xlu0 %v3001, 96
    %v3005 = vpop.permute.xlu0 %3004
    %v3007 = vmul.f32 %v3002, %v3005
    %v3008 = vmul.f32 %v2990, %v2631
    %v3009 = vadd.f32 %v3007, %v3008
    %v3010 = vpack.c.bf16 %v3009, %v3009
    %3012 = vrot.lane.b32.xlu0 %v3010, 96
    %v3013 = vpop.permute.xlu0 %3012
    %v3015 = vsel %vm130, %v3013, 0
    %3017 = vmatprep.subr.bf16.mxu0 0
    %3018 = vmatpush1.bf16.msra.mxu0 %v386
    %3019 = vmatprep.subr.bf16.mxu0 0
    %3020 = vmatpush1.bf16.msra.mxu0 %v387
    %3021 = vmatprep.subr.bf16.mxu0 0
    %3022 = vmatpush1.bf16.msra.mxu0 0
    %3023 = vmatprep.subr.bf16.mxu0 0
    %3024 = vmatpush1.bf16.msra.mxu0 0
    %3025 = vmatprep.subr.bf16.mxu0 0
    %3026 = vmatpush1.bf16.msra.mxu0 0
    %3027 = vmatprep.subr.bf16.mxu0 0
    %3028 = vmatpush1.bf16.msra.mxu0 0
    %3029 = vmatprep.subr.bf16.mxu0 0
    %3030 = vmatpush1.bf16.msra.mxu0 0
    %3031 = vmatprep.subr.bf16.mxu0 0
    %3032 = vmatpush1.bf16.msra.mxu0 0
    %3033 = vmatprep.subr.bf16.mxu0 0
    %3034 = vmatpush1.bf16.msra.mxu0 0
    %3035 = vmatprep.subr.bf16.mxu0 0
    %3036 = vmatpush1.bf16.msra.mxu0 0
    %3037 = vmatprep.subr.bf16.mxu0 0
    %3038 = vmatpush1.bf16.msra.mxu0 0
    %3039 = vmatprep.subr.bf16.mxu0 0
    %3040 = vmatpush1.bf16.msra.mxu0 0
    %3041 = vmatprep.subr.bf16.mxu0 0
    %3042 = vmatpush1.bf16.msra.mxu0 0
    %3043 = vmatprep.subr.bf16.mxu0 0
    %3044 = vmatpush1.bf16.msra.mxu0 0
    %3045 = vmatprep.subr.bf16.mxu0 0
    %3046 = vmatpush1.bf16.msra.mxu0 0
    %3047 = vmatprep.subr.bf16.mxu0 0
    %3048 = vmatpush1.bf16.msra.mxu0 0
    %3049 = vmatprep.mubr.bf16.mxu0 0
    %3050 = vmatmul.mubr.bf16.gmra.mrb[0].mxu0 %v3015
    %v3051 = vpop.f32.mrb[0].mxu0
    %v3052 = vadd.f32 0.0, %v3051
    %v3053 = vpop.f32.mrb[0].mxu0
    %v3054 = vpop.f32.mrb[0].mxu0
    %v3055 = vpop.f32.mrb[0].mxu0
    %3056 = vdwg.mxu0
    %v3059 = vunpack.c.l.s4 1966171168
    %v3060 = vunpack.c.0.s8 %v3059
    %v3061 = vlaneseq
    %v3062 = vshrl.u32 %v3061, 7
    %v3063 = vsub.s32 %v3060, %v3062
    %v3064 = vrot.slane %v3052, %v3063
    %v3065 = vcombine.high %v3064, %v3064
    %v3067 = vunpack.c.l.s4 1966171168
    %v3068 = vunpack.c.0.s8 %v3067
    %v3069 = vlaneseq
    %v3070 = vshrl.u32 %v3069, 7
    %v3071 = vsub.s32 %v3068, %v3070
    %v3072 = vrot.slane %v3064, %v3071
    %v3074 = vunpack.c.l.s4 1966171168
    %v3075 = vunpack.c.0.s8 %v3074
    %v3076 = vlaneseq
    %v3077 = vshrl.u32 %v3076, 7
    %v3078 = vsub.s32 %v3075, %v3077
    %v3079 = vrot.slane %v3065, %v3078
    %v3080 = vlaneseq
    %v3081 = vshrl.u32 %v3080, 7
    %v3082 = vsub.s32 0, %v3081
    %v3083 = vrot.slane %v3072, %v3082
    %v3084 = vlaneseq
    %v3085 = vshrl.u32 %v3084, 7
    %v3086 = vsub.s32 0, %v3085
    %v3087 = vrot.slane %v3079, %v3086
    %v3090 = vadd.f32 %v169, %v3083
    %v3091 = vadd.f32 %v172, %v3087
    %3093 = vset.pattern.permute.xlu0 0
    %3094 = vperm.xlu0 %3093, %v2901
    %v3095 = vpop.permute.xlu0 %3094
    %3098 = vset.pattern.permute.xlu0 0
    %3099 = vperm.xlu0 %3098, %v2902
    %v3100 = vpop.permute.xlu0 %3099
    %v3102 = vmul.f32 %v3095, %v469
    %v3103 = vmul.f32 %v3100, %v469
    %v3104 = vadd.f32 %v3090, %v3102
    %v3105 = vadd.f32 %v3091, %v3103
    %v3106 = vtanh.pop %v3104
    %v3107 = vtanh.pop %v3105
    %v3108 = vmul.f32 %v3106, %v480
    %v3109 = vmul.f32 %v3107, %v480
    %v3110 = vsel %vm484, %v3108, 0.0
    %3111 = vadd.xlane.f32.xlu0 %v3110
    %v3112 = vpop.xlane.xlu0 %3111
    %v3113 = vsel %vm484, %v3109, 0.0
    %3114 = vadd.xlane.f32.xlu0 %v3113
    %v3115 = vpop.xlane.xlu0 %3114
    %v3116 = vadd.f32 %v3112, %v498
    %v3117 = vadd.f32 %v3115, %v505
    %v3119 = vlaneseq
    %v3120 = vshrl.u32 %v3119, 7
    %v3121 = vsub.s32 0, %v3120
    %v3122 = vrot.slane %v90, %v3121
    %3124 = vbcast.lane.b32.xlu0 %v3122, 256
    %v3125 = vpop.permute.xlu0 %3124
    %v3126 = vlaneseq
    %v3127 = vshrl.u32 %v3126, 7
    %v3128 = vsub.s32 1, %v3127
    %v3129 = vrot.slane %v90, %v3128
    %3131 = vbcast.lane.b32.xlu0 %v3129, 256
    %v3132 = vpop.permute.xlu0 %3131
    %v3135 = vadd.f32 %v3116, %v3125
    %v3136 = vadd.f32 %v3117, %v3132
    %3139 = vset.pattern.permute.xlu0 0
    %3140 = vperm.xlu0 %3139, %v3135
    %v3141 = vpop.permute.xlu0 %3140
    %3142 = vset.pattern.permute.xlu0 0
    %3143 = vperm.xlu0 %3142, %v3136
    %v3144 = vpop.permute.xlu0 %3143
    %v3145 = vlaneseq
    %v3146 = vshrl.u32 %v3145, 7
    %v3147 = vsub.s32 %v176, %v3146
    %v3148 = vrot.slane %v3141, %v3147
    %v3149 = vlaneseq
    %v3150 = vshrl.u32 %v3149, 7
    %v3151 = vsub.s32 %v176, %v3150
    %v3152 = vrot.slane %v3144, %v3151
    %v3153 = vsel %vm545, %v3152, %v3148
    %v3155 = vsel %vm548, %v3153, -inf
    %3156 = vmax.index.xlane.f32.xlu0 %v3155
    %v3157 = vpop.xlane.xlu0 %3156
    %3160 = vset.pattern.permute.xlu0 0
    %3161 = vperm.xlu0 %3160, %v3116
    %v3162 = vpop.permute.xlu0 %3161
    %3163 = vset.pattern.permute.xlu0 0
    %3164 = vperm.xlu0 %3163, %v3117
    %v3165 = vpop.permute.xlu0 %3164
    %v3166 = vlaneseq
    %v3167 = vshrl.u32 %v3166, 7
    %v3168 = vsub.s32 %v176, %v3167
    %v3169 = vrot.slane %v3162, %v3168
    %v3170 = vlaneseq
    %v3171 = vshrl.u32 %v3170, 7
    %v3172 = vsub.s32 %v176, %v3171
    %v3173 = vrot.slane %v3165, %v3172
    %v3174 = vsel %vm545, %v3173, %v3169
    %v3176 = vsel %vm548, %v3174, -inf
    %3177 = vmax.xlane.f32.xlu0 %v3176
    %v3178 = vpop.xlane.xlu0 %3177
    %v3180 = vlaneseq
    %v3181 = vshrl.u32 %v3180, 7
    %v3182 = vsub.s32 0, %v3181
    %v3183 = vrot.slane %v3178, %v3182
    %v3184 = vlaneseq
    %v3185 = vshrl.u32 %v3184, 7
    %v3186 = vsub.s32 1, %v3185
    %v3187 = vrot.slane %v3178, %v3186
    %v3190 = vsub.f32 %v3116, %v3183
    %v3191 = vsub.f32 %v3117, %v3187
    %v3192 = vmul.f32 %v3190, 1.442695
    %v3193 = vpow.pop %v3192
    %v3194 = vmul.f32 %v3191, 1.442695
    %v3195 = vpow.pop %v3194
    %3198 = vset.pattern.permute.xlu0 0
    %3199 = vperm.xlu0 %3198, %v3193
    %v3200 = vpop.permute.xlu0 %3199
    %3201 = vset.pattern.permute.xlu0 0
    %3202 = vperm.xlu0 %3201, %v3195
    %v3203 = vpop.permute.xlu0 %3202
    %v3204 = vlaneseq
    %v3205 = vshrl.u32 %v3204, 7
    %v3206 = vsub.s32 %v176, %v3205
    %v3207 = vrot.slane %v3200, %v3206
    %v3208 = vlaneseq
    %v3209 = vshrl.u32 %v3208, 7
    %v3210 = vsub.s32 %v176, %v3209
    %v3211 = vrot.slane %v3203, %v3210
    %v3212 = vsel %vm545, %v3211, %v3207
    %v3214 = vsel %vm548, %v3212, 0.0
    %3215 = vadd.xlane.f32.xlu0 %v3214
    %v3216 = vpop.xlane.xlu0 %3215
    %v3218 = vlaneseq
    %v3219 = vshrl.u32 %v3218, 7
    %v3220 = vsub.s32 0, %v3219
    %v3221 = vrot.slane %v3216, %v3220
    %v3222 = vlaneseq
    %v3223 = vshrl.u32 %v3222, 7
    %v3224 = vsub.s32 1, %v3223
    %v3225 = vrot.slane %v3216, %v3224
    %v3228 = vrcp.pop %v3221
    %v3229 = vmul.f32 %v3193, %v3228
    %v3230 = vrcp.pop %v3225
    %v3231 = vmul.f32 %v3195, %v3230
    %v3232 = vmin.f32 %v3229, %v2901
    %v3233 = vmin.f32 %v3231, %v2902
    %v3234 = vadd.f32 %v2899, %v3232
    %v3235 = vadd.f32 %v2900, %v3233
    %v3236 = vlaneseq
    %v3237 = vshrl.u32 %v3236, 7
    %v3238 = vsub.s32 %v176, %v3237
    %v3239 = vrot.slane %v551, %v3238
    %v3240 = vlaneseq
    %v3241 = vshrl.u32 %v3240, 7
    %v3242 = vsub.s32 %v176, %v3241
    %v3243 = vrot.slane %v929, %v3242
    %v3244 = vlaneseq
    %v3245 = vshrl.u32 %v3244, 7
    %v3246 = vsub.s32 %v176, %v3245
    %v3247 = vrot.slane %v1307, %v3246
    %v3248 = vlaneseq
    %v3249 = vshrl.u32 %v3248, 7
    %v3250 = vsub.s32 %v176, %v3249
    %v3251 = vrot.slane %v1685, %v3250
    %v3252 = vlaneseq
    %v3253 = vshrl.u32 %v3252, 7
    %v3254 = vsub.s32 %v176, %v3253
    %v3255 = vrot.slane %v2063, %v3254
    %v3256 = vlaneseq
    %v3257 = vshrl.u32 %v3256, 7
    %v3258 = vsub.s32 %v176, %v3257
    %v3259 = vrot.slane %v2441, %v3258
    %v3260 = vlaneseq
    %v3261 = vshrl.u32 %v3260, 7
    %v3262 = vsub.s32 %v176, %v3261
    %v3263 = vrot.slane %v2819, %v3262
    %v3264 = vlaneseq
    %v3265 = vshrl.u32 %v3264, 7
    %v3266 = vsub.s32 %v176, %v3265
    %v3267 = vrot.slane %v3157, %v3266
    %vm3268 = vcmask 1040384
    %v3269 = vsel %vm3268, %v3239, %v3243
    %vm3270 = vcmask 1041408
    %v3271 = vsel %vm3270, %v3269, %v3247
    %vm3272 = vcmask 1042432
    %v3273 = vsel %vm3272, %v3271, %v3251
    %vm3274 = vcmask 1043456
    %v3275 = vsel %vm3274, %v3273, %v3255
    %vm3276 = vcmask 1044480
    %v3277 = vsel %vm3276, %v3275, %v3259
    %vm3278 = vcmask 1045504
    %v3279 = vsel %vm3278, %v3277, %v3263
    %vm3280 = vcmask 1046528
    %v3281 = vsel %vm3280, %v3279, %v3267
    %vm3282 = vcmask 15360
    %3283 = vst.msk [vmem:[%s12] sm:$0xff] %vm3282, %v3281
    %3286 = vset.pattern.permute.xlu0 0
    %3287 = vperm.xlu0 %3286, %v3234
    %v3288 = vpop.permute.xlu0 %3287
    %3289 = vset.pattern.permute.xlu0 0
    %3290 = vperm.xlu0 %3289, %v3235
    %v3291 = vpop.permute.xlu0 %3290
    %v3292 = vlaneseq
    %v3293 = vshrl.u32 %v3292, 7
    %v3294 = vsub.s32 %v176, %v3293
    %v3295 = vrot.slane %v3288, %v3294
    %v3296 = vlaneseq
    %v3297 = vshrl.u32 %v3296, 7
    %v3298 = vsub.s32 %v176, %v3297
    %v3299 = vrot.slane %v3291, %v3298
    %v3300 = vsel %vm545, %v3299, %v3295
    %3302 = vst.msk [vmem:[#allocation8] sm:$0x3] %vm548, %v3300
    // Predicated region
    $region62: #{tpu_custom_call.1} parent=1 // pred_check
      _
    $region63: #{tpu_custom_call.1} parent=1 // pred_check_branch
      %3304 = sbr.rel (0) target = $region65
    $region64: #{tpu_custom_call.1} parent=1 // pred_region
      _
    $region65: #{tpu_custom_call.1} parent=1 // pred_fallthru
      _
    // Predicated region
    $region66: #{tpu_custom_call.1} parent=1 // pred_check
      _
    $region67: #{tpu_custom_call.1} parent=1 // pred_check_branch
      %3306 = sbr.rel (0) target = $region69
    $region68: #{tpu_custom_call.1} parent=1 // pred_region
      %s3308 = ssub.s32 32, 32
      %3309 = vsyncadd [#allocation4], %s3308
      %s3311 = sshll.u32 [#allocation8], 4
      %s3312 = int_to_ptr.vmem [resolvable:$true] %s3311
      %3314 = dma.vmem_to_hbm [thread:$0]  %s3312, 32, %s13, [#allocation4]
    $region69: #{tpu_custom_call.1} parent=1 // pred_fallthru
      _
    // Predicated region
    $region70: #{tpu_custom_call.1} parent=1 // pred_check
      _
    $region71: #{tpu_custom_call.1} parent=1 // pred_check_branch
      %3316 = sbr.rel (0) target = $region73
    $region72: #{tpu_custom_call.1} parent=1 // pred_region
      _
    $region73: #{tpu_custom_call.1} parent=1 // pred_fallthru
      _
    // Predicated region
    $region74: #{tpu_custom_call.1} parent=1 // pred_check
      _
    $region75: #{tpu_custom_call.1} parent=1 // pred_check_branch
      %3318 = sbr.rel (0) target = $region77
    $region76: #{tpu_custom_call.1} parent=1 // pred_region
      %3319 = dma.done [#allocation4], 32
    $region77: #{tpu_custom_call.1} parent=1 // pred_fallthru
      _
    %3320 = vsyncpa [#allocation3], 1
    %3321 = vsyncpa [#allocation6], 1
    %3322 = vsyncpa [#allocation4], 1

</llo_original>
